<compile_context>
chip_gen: v6e
topology: v6e:2x2x1
jax: 0.10.0
libtpu: 0.0.40
codegen_flags: <defaults>
</compile_context>

<pallas_src>
import jax
import jax.numpy as jnp
from jax import lax
from jax.experimental import pallas as pl
from jax.experimental.pallas import tpu as pltpu

_EPS = 1e-5
_LANE = 128
_VMEM_LIMIT = 32 * 1024 * 1024  # explicit scoped-VMEM budget (legal on v5e/v6e/v7x)


def _round_up(x, m):
    return (x + m - 1) // m * m


def _pad_last(a, target):
    if a.shape[-1] == target:
        return a
    cfg = [(0, 0)] * (a.ndim - 1) + [(0, target - a.shape[-1])]
    return jnp.pad(a, cfg)


def _pick_rows(m, row_bytes, target_bytes=4 * 1024 * 1024):
    """Largest power-of-two row tile dividing m whose block stays under target bytes."""
    for t in (8192, 4096, 2048, 1024, 512, 256, 128, 64, 32, 16, 8):
        if m % t == 0 and t * row_bytes <= target_bytes:
            return t
    return m  # full extent — always a legal block


# ---------------------------------------------------------------------------
# Kernel 1: direct 3x3 conv (padding=1, stride s) + per-channel batch stats
# ---------------------------------------------------------------------------
def conv3x3_stats(x, w, stride):
    """x: (N, H, W, Cin) f32 NHWC, w: (3, 3, Cin, Cout) f32 HWIO.
    Returns y (N*Ho*Wo, Cop) f32 (Cout zero-padded to Cop), col_sum/col_sq (1, Cop), (Ho, Wo)."""
    N, H, W, Cin = x.shape
    Cout = w.shape[-1]
    Cp = _round_up(Cin, _LANE)
    Cop = _round_up(Cout, _LANE)
    s = int(stride)
    Ho = (H - 1) // s + 1
    Wo = (W - 1) // s + 1
    M = Ho * Wo
    ext_h = Ho + 2 // s
    ext_w = Wo + 2 // s

    # Spatial zero pad (1 each side, extra bottom/right so every stride phase is
    # complete) + lane-dense channel pad, then split into s*s stride phases so the
    # kernel only needs contiguous (unit-stride) shifted slices per tap.
    ph_h = max(H + 2, s * ext_h)
    ph_w = max(W + 2, s * ext_w)
    xp = jnp.pad(x, ((0, 0), (1, ph_h - H - 1), (1, ph_w - W - 1), (0, Cp - Cin)))
    if s == 1:
        xph = xp  # single phase — skip the stack/reshape copy
    else:
        phases = []
        for ph in range(s):
            for pw in range(s):
                phases.append(xp[:, ph::s, pw::s, :][:, :ext_h, :ext_w, :])
        # (N, s*s*ext_h, ext_w, Cp): phase p occupies rows [p*ext_h, (p+1)*ext_h)
        xph = jnp.stack(phases, axis=1).reshape(N, s * s * ext_h, ext_w, Cp)

    wt = jnp.pad(w, ((0, 0), (0, 0), (0, Cp - Cin), (0, Cop - Cout)))
    wt = wt.reshape(9, Cp, Cop).astype(jnp.bfloat16)  # bf16 weights in HBM

    def kernel(xph_ref, w_ref, y_ref, sum_ref, sq_ref):
        first = True
        for dh in range(3):
            for dw in range(3):
                p = (dh % s) * s + (dw % s)
                oh, ow = dh // s, dw // s
                r0 = p * ext_h + oh
                xt = xph_ref[0, r0:r0 + Ho, ow:ow + Wo, :]          # (Ho, Wo, Cp) f32
                xt = xt.reshape(M, Cp).astype(jnp.bfloat16)         # bf16 MXU operand
                contrib = jnp.dot(xt, w_ref[dh * 3 + dw],
                                  preferred_element_type=jnp.float32)
                if first:
                    y_ref[0] = contrib                               # no zero-fill pass
                    first = False
                else:
                    y_ref[0] += contrib
        y = y_ref[0]
        sum_ref[0] = jnp.sum(y, axis=0, keepdims=True)
        sq_ref[0] = jnp.sum(y * y, axis=0, keepdims=True)

    flops = 2 * N * M * 9 * Cp * Cop
    bytes_acc = xph.size * 4 + wt.size * 2 + N * M * Cop * 4 + 2 * N * Cop * 4

    y, ps, pq = pl.pallas_call(
        kernel,
        out_shape=(jax.ShapeDtypeStruct((N, M, Cop), jnp.float32),
                   jax.ShapeDtypeStruct((N, 1, Cop), jnp.float32),
                   jax.ShapeDtypeStruct((N, 1, Cop), jnp.float32)),
        grid_spec=pltpu.PrefetchScalarGridSpec(
            num_scalar_prefetch=0,
            grid=(N,),
            in_specs=[pl.BlockSpec((1, s * s * ext_h, ext_w, Cp),
                                   lambda n: (n, 0, 0, 0)),
                      pl.BlockSpec((9, Cp, Cop), lambda n: (0, 0, 0))],
            out_specs=[pl.BlockSpec((1, M, Cop), lambda n: (n, 0, 0)),
                       pl.BlockSpec((1, 1, Cop), lambda n: (n, 0, 0)),
                       pl.BlockSpec((1, 1, Cop), lambda n: (n, 0, 0))]),
        compiler_params=pltpu.CompilerParams(
            dimension_semantics=("parallel",),
            vmem_limit_bytes=_VMEM_LIMIT),
        cost_estimate=pl.CostEstimate(flops=flops, transcendentals=0,
                                      bytes_accessed=bytes_acc),
    )(xph, wt)

    col_sum = jnp.sum(ps[:, 0, :], axis=0, keepdims=True)
    col_sq = jnp.sum(pq[:, 0, :], axis=0, keepdims=True)
    return y.reshape(N * M, Cop), col_sum, col_sq, (Ho, Wo)


# ---------------------------------------------------------------------------
# Kernel 2: 3x3 stride-1 conv with fused (bn-affine + ReLU) input, + batch stats
# ---------------------------------------------------------------------------
def conv3x3_fused_bn_relu_stats(y_in, scale, shift, w):
    """Input to the conv is relu(y_in * scale + shift) — the previous layer's BN
    affine + ReLU fused into this kernel.  Zero padding is done inside VMEM AFTER
    the activation, so padded positions stay exactly zero.

    y_in: (N, H, W, Cp) f32 raw previous-conv output (channels already lane-padded).
    scale/shift: (1, Cp) f32.  w: (3, 3, Cin, Cout) f32 with Cin <= Cp."""
    N, H, W, Cp = y_in.shape
    Cin, Cout = w.shape[2], w.shape[3]
    Cop = _round_up(Cout, _LANE)
    M = H * W

    wt = jnp.pad(w, ((0, 0), (0, 0), (0, Cp - Cin), (0, Cop - Cout)))
    wt = wt.reshape(9, Cp, Cop).astype(jnp.bfloat16)

    def kernel(x_ref, sc_ref, sh_ref, w_ref, y_ref, sum_ref, sq_ref, pad_ref):
        act = jnp.maximum(x_ref[0] * sc_ref[...] + sh_ref[...], 0.0)
        # Padded activation buffer: interior starts at sublane-aligned column 8 so
        # the store is fully aligned; the 9 tap reads use (cheap) offset reads.
        # Full zero-fill each step (cheap; keeps megacore-sharded grids correct
        # since each core owns its own scratch instance).
        pad_ref[...] = jnp.zeros_like(pad_ref)
        pad_ref[1:H + 1, 8:8 + W, :] = act
        first = True
        for dh in range(3):
            for dw in range(3):
                xt = pad_ref[dh:dh + H, 7 + dw:7 + dw + W, :]       # (H, W, Cp) f32
                xt = xt.reshape(M, Cp).astype(jnp.bfloat16)
                contrib = jnp.dot(xt, w_ref[dh * 3 + dw],
                                  preferred_element_type=jnp.float32)
                if first:
                    y_ref[0] = contrib
                    first = False
                else:
                    y_ref[0] += contrib
        y = y_ref[0]
        sum_ref[0] = jnp.sum(y, axis=0, keepdims=True)
        sq_ref[0] = jnp.sum(y * y, axis=0, keepdims=True)

    flops = 2 * N * M * 9 * Cp * Cop
    bytes_acc = y_in.size * 4 + wt.size * 2 + N * M * Cop * 4 + 2 * N * Cop * 4

    y, ps, pq = pl.pallas_call(
        kernel,
        out_shape=(jax.ShapeDtypeStruct((N, M, Cop), jnp.float32),
                   jax.ShapeDtypeStruct((N, 1, Cop), jnp.float32),
                   jax.ShapeDtypeStruct((N, 1, Cop), jnp.float32)),
        grid_spec=pltpu.PrefetchScalarGridSpec(
            num_scalar_prefetch=0,
            grid=(N,),
            in_specs=[pl.BlockSpec((1, H, W, Cp), lambda n: (n, 0, 0, 0)),
                      pl.BlockSpec((1, Cp), lambda n: (0, 0)),
                      pl.BlockSpec((1, Cp), lambda n: (0, 0)),
                      pl.BlockSpec((9, Cp, Cop), lambda n: (0, 0, 0))],
            out_specs=[pl.BlockSpec((1, M, Cop), lambda n: (n, 0, 0)),
                       pl.BlockSpec((1, 1, Cop), lambda n: (n, 0, 0)),
                       pl.BlockSpec((1, 1, Cop), lambda n: (n, 0, 0))],
            scratch_shapes=[pltpu.VMEM((H + 2, W + 16, Cp), jnp.float32)]),
        compiler_params=pltpu.CompilerParams(
            dimension_semantics=("parallel",),
            vmem_limit_bytes=_VMEM_LIMIT),
        cost_estimate=pl.CostEstimate(flops=flops, transcendentals=0,
                                      bytes_accessed=bytes_acc),
    )(y_in, scale, shift, wt)

    col_sum = jnp.sum(ps[:, 0, :], axis=0, keepdims=True)
    col_sq = jnp.sum(pq[:, 0, :], axis=0, keepdims=True)
    return y.reshape(N * M, Cop), col_sum, col_sq


# ---------------------------------------------------------------------------
# Kernel 3: 1x1 shortcut conv as an MXU matmul + batch stats (bf16 operands)
# ---------------------------------------------------------------------------
def matmul_stats(a, b):
    """a: (M, K) f32, b: (K, Cout) f32 -> y (M, Cop) f32, col_sum, col_sq (1, Cop)."""
    M, K = a.shape
    Cout = b.shape[1]
    Kp = _round_up(K, _LANE)
    Cop = _round_up(Cout, _LANE)
    ap = _pad_last(a, Kp).astype(jnp.bfloat16)
    bp = jnp.pad(b, ((0, Kp - K), (0, Cop - Cout))).astype(jnp.bfloat16)
    tm = _pick_rows(M, Kp * 2 + 2 * Cop * 4)
    grid = M // tm

    def kernel(a_ref, b_ref, y_ref, sum_ref, sq_ref):
        y = jnp.dot(a_ref[...], b_ref[...], preferred_element_type=jnp.float32)
        y_ref[...] = y
        sum_ref[0] = jnp.sum(y, axis=0, keepdims=True)
        sq_ref[0] = jnp.sum(y * y, axis=0, keepdims=True)

    y, ps, pq = pl.pallas_call(
        kernel,
        out_shape=(jax.ShapeDtypeStruct((M, Cop), jnp.float32),
                   jax.ShapeDtypeStruct((grid, 1, Cop), jnp.float32),
                   jax.ShapeDtypeStruct((grid, 1, Cop), jnp.float32)),
        grid_spec=pltpu.PrefetchScalarGridSpec(
            num_scalar_prefetch=0,
            grid=(grid,),
            in_specs=[pl.BlockSpec((tm, Kp), lambda i: (i, 0)),
                      pl.BlockSpec((Kp, Cop), lambda i: (0, 0))],
            out_specs=[pl.BlockSpec((tm, Cop), lambda i: (i, 0)),
                       pl.BlockSpec((1, 1, Cop), lambda i: (i, 0, 0)),
                       pl.BlockSpec((1, 1, Cop), lambda i: (i, 0, 0))]),
        compiler_params=pltpu.CompilerParams(
            dimension_semantics=("parallel",),
            vmem_limit_bytes=_VMEM_LIMIT),
        cost_estimate=pl.CostEstimate(flops=2 * M * Kp * Cop, transcendentals=0,
                                      bytes_accessed=ap.size * 2 + bp.size * 2 + M * Cop * 4),
    )(ap, bp)

    col_sum = jnp.sum(ps[:, 0, :], axis=0, keepdims=True)
    col_sq = jnp.sum(pq[:, 0, :], axis=0, keepdims=True)
    return y, col_sum, col_sq


# ---------------------------------------------------------------------------
# Kernel 4: fused bn2 + bn(shortcut) + residual add + final ReLU (elementwise)
# ---------------------------------------------------------------------------
def residual_bn_add_relu(y, short, sc_m, sh_m, sc_s, sh_s):
    Mtot, Cop = y.shape
    tm = _pick_rows(Mtot, 3 * Cop * 4)  # large lane-dense blocks (mem-bound pass)
    shift = sh_m + sh_s                 # fold the two BN shifts in the wrapper

    def kernel(y_ref, r_ref, a_ref, c_ref, s_ref, o_ref):
        o_ref[...] = jnp.maximum(
            y_ref[...] * a_ref[...] + r_ref[...] * c_ref[...] + s_ref[...], 0.0)

    return pl.pallas_call(
        kernel,
        out_shape=jax.ShapeDtypeStruct((Mtot, Cop), jnp.float32),
        grid_spec=pltpu.PrefetchScalarGridSpec(
            num_scalar_prefetch=0,
            grid=(Mtot // tm,),
            in_specs=[pl.BlockSpec((tm, Cop), lambda i: (i, 0)),
                      pl.BlockSpec((tm, Cop), lambda i: (i, 0)),
                      pl.BlockSpec((1, Cop), lambda i: (0, 0)),
                      pl.BlockSpec((1, Cop), lambda i: (0, 0)),
                      pl.BlockSpec((1, Cop), lambda i: (0, 0))],
            out_specs=pl.BlockSpec((tm, Cop), lambda i: (i, 0))),
        compiler_params=pltpu.CompilerParams(
            dimension_semantics=("parallel",),
            vmem_limit_bytes=_VMEM_LIMIT),
    )(y, short, sc_m, sc_s, shift)


# ---------------------------------------------------------------------------
# Plain-JAX glue
# ---------------------------------------------------------------------------
def bn_affine(col_sum, col_sq, count, gamma, beta, c_pad):
    """Training-mode BatchNorm folded into per-channel scale + shift.
    Variance via E[x^2] - mean^2 in f32, clamped at 0 to guard against cancellation."""
    mean = col_sum / count
    var = jnp.maximum(col_sq / count - mean * mean, 0.0)
    g = _pad_last(gamma.reshape(1, -1).astype(jnp.float32), c_pad)
    b = _pad_last(beta.reshape(1, -1).astype(jnp.float32), c_pad)
    inv = g * lax.rsqrt(var + _EPS)
    return inv, b - mean * inv


def basic_block_forward(x_nchw, params, stride):
    x = jnp.transpose(x_nchw, (0, 2, 3, 1)).astype(jnp.float32)  # NCHW -> NHWC
    N, H, W, Cin = x.shape
    planes = params["w1"].shape[-1]
    Cpp = _round_up(planes, _LANE)

    # conv1 (+ batch statistics from the same kernel)
    y1, s1, q1, (Ho, Wo) = conv3x3_stats(x, params["w1"], stride)
    M = N * Ho * Wo
    sc1, sh1 = bn_affine(s1, q1, M, params["g1"], params["b1"], Cpp)

    # conv2 with bn1 + ReLU fused into its input path (+ batch statistics)
    y1_img = y1.reshape(N, Ho, Wo, Cpp)
    y2, s2, q2 = conv3x3_fused_bn_relu_stats(y1_img, sc1, sh1, params["w2"])
    sc2, sh2 = bn_affine(s2, q2, M, params["g2"], params["b2"], Cpp)

    # shortcut
    if stride != 1 or Cin != planes:
        xs = x[:, ::stride, ::stride, :][:, :Ho, :Wo, :].reshape(M, Cin)
        ys, ss, qs = matmul_stats(xs, params["ws"])
        scs, shs = bn_affine(ss, qs, M, params["gs"], params["bs"], Cpp)
        short = ys
    else:
        short = _pad_last(x.reshape(M, Cin), Cpp)
        scs = jnp.ones((1, Cpp), jnp.float32)
        shs = jnp.zeros((1, Cpp), jnp.float32)

    # bn2 + bn(shortcut) + residual add + ReLU, fused
    out = residual_bn_add_relu(y2, short, sc2, sh2, scs, shs)
    out = out[:, :planes].reshape(N, Ho, Wo, planes)
    return jnp.transpose(out, (0, 3, 1, 2))  # back to NCHW


# ---------------------------------------------------------------------------
# Deterministic parameter init (shapes follow BasicBlock.__init__)
# ---------------------------------------------------------------------------
def init_params(key, in_planes, planes, stride):
    ks = jax.random.split(key, 8)
    p = {}
    w1 = 0.1 * jax.random.normal(ks[0], (planes, in_planes, 3, 3), jnp.float32)  # OIHW
    w2 = 0.1 * jax.random.normal(ks[1], (planes, planes, 3, 3), jnp.float32)
    p["w1"] = jnp.transpose(w1, (2, 3, 1, 0))  # -> HWIO
    p["w2"] = jnp.transpose(w2, (2, 3, 1, 0))
    p["g1"] = 1.0 + 0.1 * jax.random.normal(ks[2], (planes,), jnp.float32)
    p["b1"] = 0.1 * jax.random.normal(ks[3], (planes,), jnp.float32)
    p["g2"] = 1.0 + 0.1 * jax.random.normal(ks[4], (planes,), jnp.float32)
    p["b2"] = 0.1 * jax.random.normal(ks[5], (planes,), jnp.float32)
    if stride != 1 or in_planes != planes:
        ws = 0.1 * jax.random.normal(ks[6], (planes, in_planes, 1, 1), jnp.float32)
        p["ws"] = jnp.transpose(ws, (2, 3, 1, 0)).reshape(in_planes, planes)  # (Cin, Cout)
        p["gs"] = 1.0 + 0.1 * jax.random.normal(ks[7], (planes,), jnp.float32)
        p["bs"] = jnp.zeros((planes,), jnp.float32)
    return p


# ---------------------------------------------------------------------------
# Pure-JAX reference (f32 lax.conv) for verification
# ---------------------------------------------------------------------------
def reference_forward(x_nchw, params, stride):
    x = jnp.transpose(x_nchw, (0, 2, 3, 1)).astype(jnp.float32)

    def conv(h, w, s, pad):
        return lax.conv_general_dilated(h, w, (s, s), padding=pad,
                                        dimension_numbers=('NHWC', 'HWIO', 'NHWC'))

    def bn(h, g, b):
        mean = h.mean(axis=(0, 1, 2))
        var = h.var(axis=(0, 1, 2))  # biased, like torch training-mode BN
        return (h - mean) / jnp.sqrt(var + _EPS) * g + b

    h = jax.nn.relu(bn(conv(x, params["w1"], stride, [(1, 1), (1, 1)]),
                       params["g1"], params["b1"]))
    h = bn(conv(h, params["w2"], 1, [(1, 1), (1, 1)]), params["g2"], params["b2"])
    if "ws" in params:
        ws = params["ws"].reshape(1, 1, *params["ws"].shape)
        sc = bn(conv(x, ws, stride, [(0, 0), (0, 0)]), params["gs"], params["bs"])
    else:
        sc = x
    return jnp.transpose(jax.nn.relu(h + sc), (0, 3, 1, 2))


if __name__ == "__main__":
    key = jax.random.PRNGKey(0)
    k1, k2, k3, k4 = jax.random.split(key, 4)

    fwd = jax.jit(basic_block_forward, static_argnums=(2,))

    # Case 1: projection shortcut (stride 2, channels 4 -> 8).
    N, Cin, H, W, planes, stride = 2, 4, 16, 16, 8, 2
    x = jax.random.normal(k1, (N, Cin, H, W), jnp.float32)
    params = init_params(k2, Cin, planes, stride)
    out = jax.block_until_ready(fwd(x, params, stride))
    assert out.shape == (N, planes, H // stride, W // stride), out.shape
    ref = reference_forward(x, params, stride)
    err = float(jnp.max(jnp.abs(out - ref)))
    # bf16 MXU operands (f32 accumulation) vs an all-f32 reference.
    assert err < 8e-2, f"projection-shortcut max abs error {err}"

    # Case 2: identity shortcut (stride 1, channels 8 -> 8).
    x2 = jax.random.normal(k3, (N, planes, H, W), jnp.float32)
    params2 = init_params(k4, planes, planes, 1)
    out2 = jax.block_until_ready(fwd(x2, params2, 1))
    assert out2.shape == (N, planes, H, W), out2.shape
    ref2 = reference_forward(x2, params2, 1)
    err2 = float(jnp.max(jnp.abs(out2 - ref2)))
    assert err2 < 8e-2, f"identity-shortcut max abs error {err2}"

    print("KERNEL_OK")
</pallas_src>

<mosaic_0001>
module attributes {stable_mosaic.version = 11 : i64} {
  func.func @kernel(%arg0: i32, %arg1: memref<1x8x8x128xf32, #tpu.memory_space<vmem>>, %arg2: memref<1x128xf32, #tpu.memory_space<vmem>>, %arg3: memref<1x128xf32, #tpu.memory_space<vmem>>, %arg4: memref<9x128x128xbf16, #tpu.memory_space<vmem>>, %arg5: memref<1x64x128xf32, #tpu.memory_space<vmem>>, %arg6: memref<1x1x128xf32, #tpu.memory_space<vmem>>, %arg7: memref<1x1x128xf32, #tpu.memory_space<vmem>>, %arg8: memref<10x24x128xf32, #tpu.memory_space<vmem>>) attributes {dimension_semantics = [#tpu.dimension_semantics<parallel>], iteration_bounds = array<i64: 2>, scalar_prefetch = 0 : i64, scratch_operands = 1 : i64, tpu.core_type = #tpu.core_type<tc>, window_params = [{transform_indices = @transform_0, window_bounds = array<i64: 1, 8, 8, 128>}, {pipeline_mode = #tpu.pipeline_mode<synchronous>, transform_indices = @transform_1, window_bounds = array<i64: 1, 128>}, {pipeline_mode = #tpu.pipeline_mode<synchronous>, transform_indices = @transform_2, window_bounds = array<i64: 1, 128>}, {pipeline_mode = #tpu.pipeline_mode<synchronous>, transform_indices = @transform_3, window_bounds = array<i64: 9, 128, 128>}, {transform_indices = @transform_4, window_bounds = array<i64: 1, 64, 128>}, {transform_indices = @transform_5, window_bounds = array<i64: 1, 1, 128>}, {transform_indices = @transform_6, window_bounds = array<i64: 1, 1, 128>}]} {
    %c0 = arith.constant 0 : index
    %c0_0 = arith.constant 0 : index
    %c0_1 = arith.constant 0 : index
    %c0_2 = arith.constant 0 : index
    %0 = vector.load %arg1[%c0, %c0_0, %c0_1, %c0_2] : memref<1x8x8x128xf32, #tpu.memory_space<vmem>>, vector<1x8x8x128xf32>
    %1 = vector.shape_cast %0 : vector<1x8x8x128xf32> to vector<8x8x128xf32>
    %c0_3 = arith.constant 0 : index
    %c0_4 = arith.constant 0 : index
    %2 = vector.load %arg2[%c0_3, %c0_4] : memref<1x128xf32, #tpu.memory_space<vmem>>, vector<1x128xf32>
    %3 = vector.shape_cast %2 : vector<1x128xf32> to vector<1x1x128xf32>
    %4 = vector.broadcast %3 : vector<1x1x128xf32> to vector<8x8x128xf32>
    %5 = arith.mulf %1, %4 : vector<8x8x128xf32>
    %c0_5 = arith.constant 0 : index
    %c0_6 = arith.constant 0 : index
    %6 = vector.load %arg3[%c0_5, %c0_6] : memref<1x128xf32, #tpu.memory_space<vmem>>, vector<1x128xf32>
    %7 = vector.shape_cast %6 : vector<1x128xf32> to vector<1x1x128xf32>
    %8 = vector.broadcast %7 : vector<1x1x128xf32> to vector<8x8x128xf32>
    %9 = arith.addf %5, %8 : vector<8x8x128xf32>
    %cst = arith.constant 0.000000e+00 : f32
    %10 = vector.broadcast %cst : f32 to vector<8x8x128xf32>
    %11 = arith.maximumf %9, %10 : vector<8x8x128xf32>
    %cst_7 = arith.constant 0.000000e+00 : f32
    %12 = vector.broadcast %cst_7 : f32 to vector<10x24x128xf32>
    %c0_8 = arith.constant 0 : index
    %c0_9 = arith.constant 0 : index
    %c0_10 = arith.constant 0 : index
    %13 = vector.load %arg8[%c0_8, %c0_9, %c0_10] : memref<10x24x128xf32, #tpu.memory_space<vmem>>, vector<10x24x128xf32>
    tpu.vector_store %arg8[%c0_8, %c0_9, %c0_10], %12 {strides = array<i32>} : memref<10x24x128xf32, #tpu.memory_space<vmem>>, vector<10x24x128xf32>,
    %c1 = arith.constant 1 : index
    %c8 = arith.constant 8 : index
    %c0_11 = arith.constant 0 : index
    %14 = vector.load %arg8[%c1, %c8, %c0_11] : memref<10x24x128xf32, #tpu.memory_space<vmem>>, vector<8x8x128xf32>
    tpu.vector_store %arg8[%c1, %c8, %c0_11], %11 {strides = array<i32>} : memref<10x24x128xf32, #tpu.memory_space<vmem>>, vector<8x8x128xf32>,
    %c0_12 = arith.constant 0 : index
    %c7 = arith.constant 7 : index
    %c0_13 = arith.constant 0 : index
    %15 = vector.load %arg8[%c0_12, %c7, %c0_13] : memref<10x24x128xf32, #tpu.memory_space<vmem>>, vector<8x8x128xf32>
    %16 = vector.shape_cast %15 : vector<8x8x128xf32> to vector<64x128xf32>
    %17 = arith.truncf %16 : vector<64x128xf32> to vector<64x128xbf16>
    %c0_14 = arith.constant 0 : index
    %c0_15 = arith.constant 0 : index
    %c0_16 = arith.constant 0 : index
    %18 = vector.load %arg4[%c0_14, %c0_15, %c0_16] : memref<9x128x128xbf16, #tpu.memory_space<vmem>>, vector<1x128x128xbf16>
    %19 = vector.shape_cast %18 : vector<1x128x128xbf16> to vector<128x128xbf16>
    %cst_17 = arith.constant dense<0.000000e+00> : vector<64x128xf32>
    %20 = tpu.matmul %17, %19, %cst_17 {dimension_numbers = #tpu.dot_dimension_numbers<[1], [0], [0], [1], [0, 0, 1, 1], [], []>} : vector<64x128xbf16>, vector<128x128xbf16>, vector<64x128xf32> -> vector<64x128xf32>
    %c0_18 = arith.constant 0 : index
    %c0_19 = arith.constant 0 : index
    %c0_20 = arith.constant 0 : index
    %21 = vector.load %arg5[%c0_18, %c0_19, %c0_20] : memref<1x64x128xf32, #tpu.memory_space<vmem>>, vector<1x64x128xf32>
    %22 = vector.shape_cast %21 : vector<1x64x128xf32> to vector<64x128xf32>
    %23 = vector.shape_cast %20 : vector<64x128xf32> to vector<1x64x128xf32>
    tpu.vector_store %arg5[%c0_18, %c0_19, %c0_20], %23 {strides = array<i32>} : memref<1x64x128xf32, #tpu.memory_space<vmem>>, vector<1x64x128xf32>,
    %c0_21 = arith.constant 0 : index
    %c8_22 = arith.constant 8 : index
    %c0_23 = arith.constant 0 : index
    %24 = vector.load %arg8[%c0_21, %c8_22, %c0_23] : memref<10x24x128xf32, #tpu.memory_space<vmem>>, vector<8x8x128xf32>
    %25 = vector.shape_cast %24 : vector<8x8x128xf32> to vector<64x128xf32>
    %26 = arith.truncf %25 : vector<64x128xf32> to vector<64x128xbf16>
    %c1_24 = arith.constant 1 : index
    %c0_25 = arith.constant 0 : index
    %c0_26 = arith.constant 0 : index
    %27 = vector.load %arg4[%c1_24, %c0_25, %c0_26] : memref<9x128x128xbf16, #tpu.memory_space<vmem>>, vector<1x128x128xbf16>
    %28 = vector.shape_cast %27 : vector<1x128x128xbf16> to vector<128x128xbf16>
    %cst_27 = arith.constant dense<0.000000e+00> : vector<64x128xf32>
    %29 = tpu.matmul %26, %28, %cst_27 {dimension_numbers = #tpu.dot_dimension_numbers<[1], [0], [0], [1], [0, 0, 1, 1], [], []>} : vector<64x128xbf16>, vector<128x128xbf16>, vector<64x128xf32> -> vector<64x128xf32>
    %c0_28 = arith.constant 0 : index
    %c0_29 = arith.constant 0 : index
    %c0_30 = arith.constant 0 : index
    %30 = vector.load %arg5[%c0_28, %c0_29, %c0_30] : memref<1x64x128xf32, #tpu.memory_space<vmem>>, vector<1x64x128xf32>
    %31 = vector.shape_cast %30 : vector<1x64x128xf32> to vector<64x128xf32>
    %32 = arith.addf %31, %29 : vector<64x128xf32>
    %c0_31 = arith.constant 0 : index
    %c0_32 = arith.constant 0 : index
    %c0_33 = arith.constant 0 : index
    %33 = vector.load %arg5[%c0_31, %c0_32, %c0_33] : memref<1x64x128xf32, #tpu.memory_space<vmem>>, vector<1x64x128xf32>
    %34 = vector.shape_cast %33 : vector<1x64x128xf32> to vector<64x128xf32>
    %35 = vector.shape_cast %32 : vector<64x128xf32> to vector<1x64x128xf32>
    tpu.vector_store %arg5[%c0_31, %c0_32, %c0_33], %35 {strides = array<i32>} : memref<1x64x128xf32, #tpu.memory_space<vmem>>, vector<1x64x128xf32>,
    %c0_34 = arith.constant 0 : index
    %c9 = arith.constant 9 : index
    %c0_35 = arith.constant 0 : index
    %36 = vector.load %arg8[%c0_34, %c9, %c0_35] : memref<10x24x128xf32, #tpu.memory_space<vmem>>, vector<8x8x128xf32>
    %37 = vector.shape_cast %36 : vector<8x8x128xf32> to vector<64x128xf32>
    %38 = arith.truncf %37 : vector<64x128xf32> to vector<64x128xbf16>
    %c2 = arith.constant 2 : index
    %c0_36 = arith.constant 0 : index
    %c0_37 = arith.constant 0 : index
    %39 = vector.load %arg4[%c2, %c0_36, %c0_37] : memref<9x128x128xbf16, #tpu.memory_space<vmem>>, vector<1x128x128xbf16>
    %40 = vector.shape_cast %39 : vector<1x128x128xbf16> to vector<128x128xbf16>
    %cst_38 = arith.constant dense<0.000000e+00> : vector<64x128xf32>
    %41 = tpu.matmul %38, %40, %cst_38 {dimension_numbers = #tpu.dot_dimension_numbers<[1], [0], [0], [1], [0, 0, 1, 1], [], []>} : vector<64x128xbf16>, vector<128x128xbf16>, vector<64x128xf32> -> vector<64x128xf32>
    %c0_39 = arith.constant 0 : index
    %c0_40 = arith.constant 0 : index
    %c0_41 = arith.constant 0 : index
    %42 = vector.load %arg5[%c0_39, %c0_40, %c0_41] : memref<1x64x128xf32, #tpu.memory_space<vmem>>, vector<1x64x128xf32>
    %43 = vector.shape_cast %42 : vector<1x64x128xf32> to vector<64x128xf32>
    %44 = arith.addf %43, %41 : vector<64x128xf32>
    %c0_42 = arith.constant 0 : index
    %c0_43 = arith.constant 0 : index
    %c0_44 = arith.constant 0 : index
    %45 = vector.load %arg5[%c0_42, %c0_43, %c0_44] : memref<1x64x128xf32, #tpu.memory_space<vmem>>, vector<1x64x128xf32>
    %46 = vector.shape_cast %45 : vector<1x64x128xf32> to vector<64x128xf32>
    %47 = vector.shape_cast %44 : vector<64x128xf32> to vector<1x64x128xf32>
    tpu.vector_store %arg5[%c0_42, %c0_43, %c0_44], %47 {strides = array<i32>} : memref<1x64x128xf32, #tpu.memory_space<vmem>>, vector<1x64x128xf32>,
    %c1_45 = arith.constant 1 : index
    %c7_46 = arith.constant 7 : index
    %c0_47 = arith.constant 0 : index
    %48 = vector.load %arg8[%c1_45, %c7_46, %c0_47] : memref<10x24x128xf32, #tpu.memory_space<vmem>>, vector<8x8x128xf32>
    %49 = vector.shape_cast %48 : vector<8x8x128xf32> to vector<64x128xf32>
    %50 = arith.truncf %49 : vector<64x128xf32> to vector<64x128xbf16>
    %c3 = arith.constant 3 : index
    %c0_48 = arith.constant 0 : index
    %c0_49 = arith.constant 0 : index
    %51 = vector.load %arg4[%c3, %c0_48, %c0_49] : memref<9x128x128xbf16, #tpu.memory_space<vmem>>, vector<1x128x128xbf16>
    %52 = vector.shape_cast %51 : vector<1x128x128xbf16> to vector<128x128xbf16>
    %cst_50 = arith.constant dense<0.000000e+00> : vector<64x128xf32>
    %53 = tpu.matmul %50, %52, %cst_50 {dimension_numbers = #tpu.dot_dimension_numbers<[1], [0], [0], [1], [0, 0, 1, 1], [], []>} : vector<64x128xbf16>, vector<128x128xbf16>, vector<64x128xf32> -> vector<64x128xf32>
    %c0_51 = arith.constant 0 : index
    %c0_52 = arith.constant 0 : index
    %c0_53 = arith.constant 0 : index
    %54 = vector.load %arg5[%c0_51, %c0_52, %c0_53] : memref<1x64x128xf32, #tpu.memory_space<vmem>>, vector<1x64x128xf32>
    %55 = vector.shape_cast %54 : vector<1x64x128xf32> to vector<64x128xf32>
    %56 = arith.addf %55, %53 : vector<64x128xf32>
    %c0_54 = arith.constant 0 : index
    %c0_55 = arith.constant 0 : index
    %c0_56 = arith.constant 0 : index
    %57 = vector.load %arg5[%c0_54, %c0_55, %c0_56] : memref<1x64x128xf32, #tpu.memory_space<vmem>>, vector<1x64x128xf32>
    %58 = vector.shape_cast %57 : vector<1x64x128xf32> to vector<64x128xf32>
    %59 = vector.shape_cast %56 : vector<64x128xf32> to vector<1x64x128xf32>
    tpu.vector_store %arg5[%c0_54, %c0_55, %c0_56], %59 {strides = array<i32>} : memref<1x64x128xf32, #tpu.memory_space<vmem>>, vector<1x64x128xf32>,
    %c1_57 = arith.constant 1 : index
    %c8_58 = arith.constant 8 : index
    %c0_59 = arith.constant 0 : index
    %60 = vector.load %arg8[%c1_57, %c8_58, %c0_59] : memref<10x24x128xf32, #tpu.memory_space<vmem>>, vector<8x8x128xf32>
    %61 = vector.shape_cast %60 : vector<8x8x128xf32> to vector<64x128xf32>
    %62 = arith.truncf %61 : vector<64x128xf32> to vector<64x128xbf16>
    %c4 = arith.constant 4 : index
    %c0_60 = arith.constant 0 : index
    %c0_61 = arith.constant 0 : index
    %63 = vector.load %arg4[%c4, %c0_60, %c0_61] : memref<9x128x128xbf16, #tpu.memory_space<vmem>>, vector<1x128x128xbf16>
    %64 = vector.shape_cast %63 : vector<1x128x128xbf16> to vector<128x128xbf16>
    %cst_62 = arith.constant dense<0.000000e+00> : vector<64x128xf32>
    %65 = tpu.matmul %62, %64, %cst_62 {dimension_numbers = #tpu.dot_dimension_numbers<[1], [0], [0], [1], [0, 0, 1, 1], [], []>} : vector<64x128xbf16>, vector<128x128xbf16>, vector<64x128xf32> -> vector<64x128xf32>
    %c0_63 = arith.constant 0 : index
    %c0_64 = arith.constant 0 : index
    %c0_65 = arith.constant 0 : index
    %66 = vector.load %arg5[%c0_63, %c0_64, %c0_65] : memref<1x64x128xf32, #tpu.memory_space<vmem>>, vector<1x64x128xf32>
    %67 = vector.shape_cast %66 : vector<1x64x128xf32> to vector<64x128xf32>
    %68 = arith.addf %67, %65 : vector<64x128xf32>
    %c0_66 = arith.constant 0 : index
    %c0_67 = arith.constant 0 : index
    %c0_68 = arith.constant 0 : index
    %69 = vector.load %arg5[%c0_66, %c0_67, %c0_68] : memref<1x64x128xf32, #tpu.memory_space<vmem>>, vector<1x64x128xf32>
    %70 = vector.shape_cast %69 : vector<1x64x128xf32> to vector<64x128xf32>
    %71 = vector.shape_cast %68 : vector<64x128xf32> to vector<1x64x128xf32>
    tpu.vector_store %arg5[%c0_66, %c0_67, %c0_68], %71 {strides = array<i32>} : memref<1x64x128xf32, #tpu.memory_space<vmem>>, vector<1x64x128xf32>,
    %c1_69 = arith.constant 1 : index
    %c9_70 = arith.constant 9 : index
    %c0_71 = arith.constant 0 : index
    %72 = vector.load %arg8[%c1_69, %c9_70, %c0_71] : memref<10x24x128xf32, #tpu.memory_space<vmem>>, vector<8x8x128xf32>
    %73 = vector.shape_cast %72 : vector<8x8x128xf32> to vector<64x128xf32>
    %74 = arith.truncf %73 : vector<64x128xf32> to vector<64x128xbf16>
    %c5 = arith.constant 5 : index
    %c0_72 = arith.constant 0 : index
    %c0_73 = arith.constant 0 : index
    %75 = vector.load %arg4[%c5, %c0_72, %c0_73] : memref<9x128x128xbf16, #tpu.memory_space<vmem>>, vector<1x128x128xbf16>
    %76 = vector.shape_cast %75 : vector<1x128x128xbf16> to vector<128x128xbf16>
    %cst_74 = arith.constant dense<0.000000e+00> : vector<64x128xf32>
    %77 = tpu.matmul %74, %76, %cst_74 {dimension_numbers = #tpu.dot_dimension_numbers<[1], [0], [0], [1], [0, 0, 1, 1], [], []>} : vector<64x128xbf16>, vector<128x128xbf16>, vector<64x128xf32> -> vector<64x128xf32>
    %c0_75 = arith.constant 0 : index
    %c0_76 = arith.constant 0 : index
    %c0_77 = arith.constant 0 : index
    %78 = vector.load %arg5[%c0_75, %c0_76, %c0_77] : memref<1x64x128xf32, #tpu.memory_space<vmem>>, vector<1x64x128xf32>
    %79 = vector.shape_cast %78 : vector<1x64x128xf32> to vector<64x128xf32>
    %80 = arith.addf %79, %77 : vector<64x128xf32>
    %c0_78 = arith.constant 0 : index
    %c0_79 = arith.constant 0 : index
    %c0_80 = arith.constant 0 : index
    %81 = vector.load %arg5[%c0_78, %c0_79, %c0_80] : memref<1x64x128xf32, #tpu.memory_space<vmem>>, vector<1x64x128xf32>
    %82 = vector.shape_cast %81 : vector<1x64x128xf32> to vector<64x128xf32>
    %83 = vector.shape_cast %80 : vector<64x128xf32> to vector<1x64x128xf32>
    tpu.vector_store %arg5[%c0_78, %c0_79, %c0_80], %83 {strides = array<i32>} : memref<1x64x128xf32, #tpu.memory_space<vmem>>, vector<1x64x128xf32>,
    %c2_81 = arith.constant 2 : index
    %c7_82 = arith.constant 7 : index
    %c0_83 = arith.constant 0 : index
    %84 = vector.load %arg8[%c2_81, %c7_82, %c0_83] : memref<10x24x128xf32, #tpu.memory_space<vmem>>, vector<8x8x128xf32>
    %85 = vector.shape_cast %84 : vector<8x8x128xf32> to vector<64x128xf32>
    %86 = arith.truncf %85 : vector<64x128xf32> to vector<64x128xbf16>
    %c6 = arith.constant 6 : index
    %c0_84 = arith.constant 0 : index
    %c0_85 = arith.constant 0 : index
    %87 = vector.load %arg4[%c6, %c0_84, %c0_85] : memref<9x128x128xbf16, #tpu.memory_space<vmem>>, vector<1x128x128xbf16>
    %88 = vector.shape_cast %87 : vector<1x128x128xbf16> to vector<128x128xbf16>
    %cst_86 = arith.constant dense<0.000000e+00> : vector<64x128xf32>
    %89 = tpu.matmul %86, %88, %cst_86 {dimension_numbers = #tpu.dot_dimension_numbers<[1], [0], [0], [1], [0, 0, 1, 1], [], []>} : vector<64x128xbf16>, vector<128x128xbf16>, vector<64x128xf32> -> vector<64x128xf32>
    %c0_87 = arith.constant 0 : index
    %c0_88 = arith.constant 0 : index
    %c0_89 = arith.constant 0 : index
    %90 = vector.load %arg5[%c0_87, %c0_88, %c0_89] : memref<1x64x128xf32, #tpu.memory_space<vmem>>, vector<1x64x128xf32>
    %91 = vector.shape_cast %90 : vector<1x64x128xf32> to vector<64x128xf32>
    %92 = arith.addf %91, %89 : vector<64x128xf32>
    %c0_90 = arith.constant 0 : index
    %c0_91 = arith.constant 0 : index
    %c0_92 = arith.constant 0 : index
    %93 = vector.load %arg5[%c0_90, %c0_91, %c0_92] : memref<1x64x128xf32, #tpu.memory_space<vmem>>, vector<1x64x128xf32>
    %94 = vector.shape_cast %93 : vector<1x64x128xf32> to vector<64x128xf32>
    %95 = vector.shape_cast %92 : vector<64x128xf32> to vector<1x64x128xf32>
    tpu.vector_store %arg5[%c0_90, %c0_91, %c0_92], %95 {strides = array<i32>} : memref<1x64x128xf32, #tpu.memory_space<vmem>>, vector<1x64x128xf32>,
    %c2_93 = arith.constant 2 : index
    %c8_94 = arith.constant 8 : index
    %c0_95 = arith.constant 0 : index
    %96 = vector.load %arg8[%c2_93, %c8_94, %c0_95] : memref<10x24x128xf32, #tpu.memory_space<vmem>>, vector<8x8x128xf32>
    %97 = vector.shape_cast %96 : vector<8x8x128xf32> to vector<64x128xf32>
    %98 = arith.truncf %97 : vector<64x128xf32> to vector<64x128xbf16>
    %c7_96 = arith.constant 7 : index
    %c0_97 = arith.constant 0 : index
    %c0_98 = arith.constant 0 : index
    %99 = vector.load %arg4[%c7_96, %c0_97, %c0_98] : memref<9x128x128xbf16, #tpu.memory_space<vmem>>, vector<1x128x128xbf16>
    %100 = vector.shape_cast %99 : vector<1x128x128xbf16> to vector<128x128xbf16>
    %cst_99 = arith.constant dense<0.000000e+00> : vector<64x128xf32>
    %101 = tpu.matmul %98, %100, %cst_99 {dimension_numbers = #tpu.dot_dimension_numbers<[1], [0], [0], [1], [0, 0, 1, 1], [], []>} : vector<64x128xbf16>, vector<128x128xbf16>, vector<64x128xf32> -> vector<64x128xf32>
    %c0_100 = arith.constant 0 : index
    %c0_101 = arith.constant 0 : index
    %c0_102 = arith.constant 0 : index
    %102 = vector.load %arg5[%c0_100, %c0_101, %c0_102] : memref<1x64x128xf32, #tpu.memory_space<vmem>>, vector<1x64x128xf32>
    %103 = vector.shape_cast %102 : vector<1x64x128xf32> to vector<64x128xf32>
    %104 = arith.addf %103, %101 : vector<64x128xf32>
    %c0_103 = arith.constant 0 : index
    %c0_104 = arith.constant 0 : index
    %c0_105 = arith.constant 0 : index
    %105 = vector.load %arg5[%c0_103, %c0_104, %c0_105] : memref<1x64x128xf32, #tpu.memory_space<vmem>>, vector<1x64x128xf32>
    %106 = vector.shape_cast %105 : vector<1x64x128xf32> to vector<64x128xf32>
    %107 = vector.shape_cast %104 : vector<64x128xf32> to vector<1x64x128xf32>
    tpu.vector_store %arg5[%c0_103, %c0_104, %c0_105], %107 {strides = array<i32>} : memref<1x64x128xf32, #tpu.memory_space<vmem>>, vector<1x64x128xf32>,
    %c2_106 = arith.constant 2 : index
    %c9_107 = arith.constant 9 : index
    %c0_108 = arith.constant 0 : index
    %108 = vector.load %arg8[%c2_106, %c9_107, %c0_108] : memref<10x24x128xf32, #tpu.memory_space<vmem>>, vector<8x8x128xf32>
    %109 = vector.shape_cast %108 : vector<8x8x128xf32> to vector<64x128xf32>
    %110 = arith.truncf %109 : vector<64x128xf32> to vector<64x128xbf16>
    %c8_109 = arith.constant 8 : index
    %c0_110 = arith.constant 0 : index
    %c0_111 = arith.constant 0 : index
    %111 = vector.load %arg4[%c8_109, %c0_110, %c0_111] : memref<9x128x128xbf16, #tpu.memory_space<vmem>>, vector<1x128x128xbf16>
    %112 = vector.shape_cast %111 : vector<1x128x128xbf16> to vector<128x128xbf16>
    %cst_112 = arith.constant dense<0.000000e+00> : vector<64x128xf32>
    %113 = tpu.matmul %110, %112, %cst_112 {dimension_numbers = #tpu.dot_dimension_numbers<[1], [0], [0], [1], [0, 0, 1, 1], [], []>} : vector<64x128xbf16>, vector<128x128xbf16>, vector<64x128xf32> -> vector<64x128xf32>
    %c0_113 = arith.constant 0 : index
    %c0_114 = arith.constant 0 : index
    %c0_115 = arith.constant 0 : index
    %114 = vector.load %arg5[%c0_113, %c0_114, %c0_115] : memref<1x64x128xf32, #tpu.memory_space<vmem>>, vector<1x64x128xf32>
    %115 = vector.shape_cast %114 : vector<1x64x128xf32> to vector<64x128xf32>
    %116 = arith.addf %115, %113 : vector<64x128xf32>
    %c0_116 = arith.constant 0 : index
    %c0_117 = arith.constant 0 : index
    %c0_118 = arith.constant 0 : index
    %117 = vector.load %arg5[%c0_116, %c0_117, %c0_118] : memref<1x64x128xf32, #tpu.memory_space<vmem>>, vector<1x64x128xf32>
    %118 = vector.shape_cast %117 : vector<1x64x128xf32> to vector<64x128xf32>
    %119 = vector.shape_cast %116 : vector<64x128xf32> to vector<1x64x128xf32>
    tpu.vector_store %arg5[%c0_116, %c0_117, %c0_118], %119 {strides = array<i32>} : memref<1x64x128xf32, #tpu.memory_space<vmem>>, vector<1x64x128xf32>,
    %c0_119 = arith.constant 0 : index
    %c0_120 = arith.constant 0 : index
    %c0_121 = arith.constant 0 : index
    %120 = vector.load %arg5[%c0_119, %c0_120, %c0_121] : memref<1x64x128xf32, #tpu.memory_space<vmem>>, vector<1x64x128xf32>
    %121 = vector.shape_cast %120 : vector<1x64x128xf32> to vector<64x128xf32>
    %cst_122 = arith.constant dense<0.000000e+00> : vector<128xf32>
    %122 = vector.multi_reduction <add>, %121, %cst_122 [0] : vector<64x128xf32> to vector<128xf32>
    %123 = vector.shape_cast %122 : vector<128xf32> to vector<1x128xf32>
    %c0_123 = arith.constant 0 : index
    %c0_124 = arith.constant 0 : index
    %c0_125 = arith.constant 0 : index
    %124 = vector.load %arg6[%c0_123, %c0_124, %c0_125] : memref<1x1x128xf32, #tpu.memory_space<vmem>>, vector<1x1x128xf32>
    %125 = vector.shape_cast %124 : vector<1x1x128xf32> to vector<1x128xf32>
    %126 = vector.shape_cast %123 : vector<1x128xf32> to vector<1x1x128xf32>
    tpu.vector_store %arg6[%c0_123, %c0_124, %c0_125], %126 {strides = array<i32>} : memref<1x1x128xf32, #tpu.memory_space<vmem>>, vector<1x1x128xf32>,
    %127 = arith.mulf %121, %121 : vector<64x128xf32>
    %cst_126 = arith.constant dense<0.000000e+00> : vector<128xf32>
    %128 = vector.multi_reduction <add>, %127, %cst_126 [0] : vector<64x128xf32> to vector<128xf32>
    %129 = vector.shape_cast %128 : vector<128xf32> to vector<1x128xf32>
    %c0_127 = arith.constant 0 : index
    %c0_128 = arith.constant 0 : index
    %c0_129 = arith.constant 0 : index
    %130 = vector.load %arg7[%c0_127, %c0_128, %c0_129] : memref<1x1x128xf32, #tpu.memory_space<vmem>>, vector<1x1x128xf32>
    %131 = vector.shape_cast %130 : vector<1x1x128xf32> to vector<1x128xf32>
    %132 = vector.shape_cast %129 : vector<1x128xf32> to vector<1x1x128xf32>
    tpu.vector_store %arg7[%c0_127, %c0_128, %c0_129], %132 {strides = array<i32>} : memref<1x1x128xf32, #tpu.memory_space<vmem>>, vector<1x1x128xf32>,
    return
  }
  func.func @transform_0(%arg0: i32) -> (i32, i32, i32, i32) {
    %c0_i32 = arith.constant 0 : i32
    %c0_i32_0 = arith.constant 0 : i32
    %c0_i32_1 = arith.constant 0 : i32
    %c0_i32_2 = arith.constant 0 : i32
    return %arg0, %c0_i32, %c0_i32_0, %c0_i32_1 : i32, i32, i32, i32
  }
  func.func @transform_1(%arg0: i32) -> (i32, i32) {
    %c0_i32 = arith.constant 0 : i32
    %c0_i32_0 = arith.constant 0 : i32
    %c0_i32_1 = arith.constant 0 : i32
    return %c0_i32, %c0_i32_0 : i32, i32
  }
  func.func @transform_2(%arg0: i32) -> (i32, i32) {
    %c0_i32 = arith.constant 0 : i32
    %c0_i32_0 = arith.constant 0 : i32
    %c0_i32_1 = arith.constant 0 : i32
    return %c0_i32, %c0_i32_0 : i32, i32
  }
  func.func @transform_3(%arg0: i32) -> (i32, i32, i32) {
    %c0_i32 = arith.constant 0 : i32
    %c0_i32_0 = arith.constant 0 : i32
    %c0_i32_1 = arith.constant 0 : i32
    %c0_i32_2 = arith.constant 0 : i32
    return %c0_i32, %c0_i32_0, %c0_i32_1 : i32, i32, i32
  }
  func.func @transform_4(%arg0: i32) -> (i32, i32, i32) {
    %c0_i32 = arith.constant 0 : i32
    %c0_i32_0 = arith.constant 0 : i32
    %c0_i32_1 = arith.constant 0 : i32
    return %arg0, %c0_i32, %c0_i32_0 : i32, i32, i32
  }
  func.func @transform_5(%arg0: i32) -> (i32, i32, i32) {
    %c0_i32 = arith.constant 0 : i32
    %c0_i32_0 = arith.constant 0 : i32
    %c0_i32_1 = arith.constant 0 : i32
    return %arg0, %c0_i32, %c0_i32_0 : i32, i32, i32
  }
  func.func @transform_6(%arg0: i32) -> (i32, i32, i32) {
    %c0_i32 = arith.constant 0 : i32
    %c0_i32_0 = arith.constant 0 : i32
    %c0_i32_1 = arith.constant 0 : i32
    return %arg0, %c0_i32, %c0_i32_0 : i32, i32, i32
  }
}

module attributes {stable_mosaic.version = 11 : i64} {
  func.func @kernel(%arg0: i32, %arg1: memref<1x36x9x128xf32, #tpu.memory_space<vmem>>, %arg2: memref<9x128x128xbf16, #tpu.memory_space<vmem>>, %arg3: memref<1x64x128xf32, #tpu.memory_space<vmem>>, %arg4: memref<1x1x128xf32, #tpu.memory_space<vmem>>, %arg5: memref<1x1x128xf32, #tpu.memory_space<vmem>>) attributes {dimension_semantics = [#tpu.dimension_semantics<parallel>], iteration_bounds = array<i64: 2>, scalar_prefetch = 0 : i64, scratch_operands = 0 : i64, tpu.core_type = #tpu.core_type<tc>, window_params = [{transform_indices = @transform_0, window_bounds = array<i64: 1, 36, 9, 128>}, {pipeline_mode = #tpu.pipeline_mode<synchronous>, transform_indices = @transform_1, window_bounds = array<i64: 9, 128, 128>}, {transform_indices = @transform_2, window_bounds = array<i64: 1, 64, 128>}, {transform_indices = @transform_3, window_bounds = array<i64: 1, 1, 128>}, {transform_indices = @transform_4, window_bounds = array<i64: 1, 1, 128>}]} {
    %c0 = arith.constant 0 : index
    %c0_0 = arith.constant 0 : index
    %c0_1 = arith.constant 0 : index
    %c0_2 = arith.constant 0 : index
    %0 = vector.load %arg1[%c0, %c0_0, %c0_1, %c0_2] : memref<1x36x9x128xf32, #tpu.memory_space<vmem>>, vector<1x8x8x128xf32>
    %1 = vector.shape_cast %0 : vector<1x8x8x128xf32> to vector<8x8x128xf32>
    %2 = vector.shape_cast %1 : vector<8x8x128xf32> to vector<64x128xf32>
    %3 = arith.truncf %2 : vector<64x128xf32> to vector<64x128xbf16>
    %c0_3 = arith.constant 0 : index
    %c0_4 = arith.constant 0 : index
    %c0_5 = arith.constant 0 : index
    %4 = vector.load %arg2[%c0_3, %c0_4, %c0_5] : memref<9x128x128xbf16, #tpu.memory_space<vmem>>, vector<1x128x128xbf16>
    %5 = vector.shape_cast %4 : vector<1x128x128xbf16> to vector<128x128xbf16>
    %cst = arith.constant dense<0.000000e+00> : vector<64x128xf32>
    %6 = tpu.matmul %3, %5, %cst {dimension_numbers = #tpu.dot_dimension_numbers<[1], [0], [0], [1], [0, 0, 1, 1], [], []>} : vector<64x128xbf16>, vector<128x128xbf16>, vector<64x128xf32> -> vector<64x128xf32>
    %c0_6 = arith.constant 0 : index
    %c0_7 = arith.constant 0 : index
    %c0_8 = arith.constant 0 : index
    %7 = vector.load %arg3[%c0_6, %c0_7, %c0_8] : memref<1x64x128xf32, #tpu.memory_space<vmem>>, vector<1x64x128xf32>
    %8 = vector.shape_cast %7 : vector<1x64x128xf32> to vector<64x128xf32>
    %9 = vector.shape_cast %6 : vector<64x128xf32> to vector<1x64x128xf32>
    tpu.vector_store %arg3[%c0_6, %c0_7, %c0_8], %9 {strides = array<i32>} : memref<1x64x128xf32, #tpu.memory_space<vmem>>, vector<1x64x128xf32>,
    %c0_9 = arith.constant 0 : index
    %c9 = arith.constant 9 : index
    %c0_10 = arith.constant 0 : index
    %c0_11 = arith.constant 0 : index
    %10 = vector.load %arg1[%c0_9, %c9, %c0_10, %c0_11] : memref<1x36x9x128xf32, #tpu.memory_space<vmem>>, vector<1x8x8x128xf32>
    %11 = vector.shape_cast %10 : vector<1x8x8x128xf32> to vector<8x8x128xf32>
    %12 = vector.shape_cast %11 : vector<8x8x128xf32> to vector<64x128xf32>
    %13 = arith.truncf %12 : vector<64x128xf32> to vector<64x128xbf16>
    %c1 = arith.constant 1 : index
    %c0_12 = arith.constant 0 : index
    %c0_13 = arith.constant 0 : index
    %14 = vector.load %arg2[%c1, %c0_12, %c0_13] : memref<9x128x128xbf16, #tpu.memory_space<vmem>>, vector<1x128x128xbf16>
    %15 = vector.shape_cast %14 : vector<1x128x128xbf16> to vector<128x128xbf16>
    %cst_14 = arith.constant dense<0.000000e+00> : vector<64x128xf32>
    %16 = tpu.matmul %13, %15, %cst_14 {dimension_numbers = #tpu.dot_dimension_numbers<[1], [0], [0], [1], [0, 0, 1, 1], [], []>} : vector<64x128xbf16>, vector<128x128xbf16>, vector<64x128xf32> -> vector<64x128xf32>
    %c0_15 = arith.constant 0 : index
    %c0_16 = arith.constant 0 : index
    %c0_17 = arith.constant 0 : index
    %17 = vector.load %arg3[%c0_15, %c0_16, %c0_17] : memref<1x64x128xf32, #tpu.memory_space<vmem>>, vector<1x64x128xf32>
    %18 = vector.shape_cast %17 : vector<1x64x128xf32> to vector<64x128xf32>
    %19 = arith.addf %18, %16 : vector<64x128xf32>
    %c0_18 = arith.constant 0 : index
    %c0_19 = arith.constant 0 : index
    %c0_20 = arith.constant 0 : index
    %20 = vector.load %arg3[%c0_18, %c0_19, %c0_20] : memref<1x64x128xf32, #tpu.memory_space<vmem>>, vector<1x64x128xf32>
    %21 = vector.shape_cast %20 : vector<1x64x128xf32> to vector<64x128xf32>
    %22 = vector.shape_cast %19 : vector<64x128xf32> to vector<1x64x128xf32>
    tpu.vector_store %arg3[%c0_18, %c0_19, %c0_20], %22 {strides = array<i32>} : memref<1x64x128xf32, #tpu.memory_space<vmem>>, vector<1x64x128xf32>,
    %c0_21 = arith.constant 0 : index
    %c0_22 = arith.constant 0 : index
    %c1_23 = arith.constant 1 : index
    %c0_24 = arith.constant 0 : index
    %23 = vector.load %arg1[%c0_21, %c0_22, %c1_23, %c0_24] : memref<1x36x9x128xf32, #tpu.memory_space<vmem>>, vector<1x8x8x128xf32>
    %24 = vector.shape_cast %23 : vector<1x8x8x128xf32> to vector<8x8x128xf32>
    %25 = vector.shape_cast %24 : vector<8x8x128xf32> to vector<64x128xf32>
    %26 = arith.truncf %25 : vector<64x128xf32> to vector<64x128xbf16>
    %c2 = arith.constant 2 : index
    %c0_25 = arith.constant 0 : index
    %c0_26 = arith.constant 0 : index
    %27 = vector.load %arg2[%c2, %c0_25, %c0_26] : memref<9x128x128xbf16, #tpu.memory_space<vmem>>, vector<1x128x128xbf16>
    %28 = vector.shape_cast %27 : vector<1x128x128xbf16> to vector<128x128xbf16>
    %cst_27 = arith.constant dense<0.000000e+00> : vector<64x128xf32>
    %29 = tpu.matmul %26, %28, %cst_27 {dimension_numbers = #tpu.dot_dimension_numbers<[1], [0], [0], [1], [0, 0, 1, 1], [], []>} : vector<64x128xbf16>, vector<128x128xbf16>, vector<64x128xf32> -> vector<64x128xf32>
    %c0_28 = arith.constant 0 : index
    %c0_29 = arith.constant 0 : index
    %c0_30 = arith.constant 0 : index
    %30 = vector.load %arg3[%c0_28, %c0_29, %c0_30] : memref<1x64x128xf32, #tpu.memory_space<vmem>>, vector<1x64x128xf32>
    %31 = vector.shape_cast %30 : vector<1x64x128xf32> to vector<64x128xf32>
    %32 = arith.addf %31, %29 : vector<64x128xf32>
    %c0_31 = arith.constant 0 : index
    %c0_32 = arith.constant 0 : index
    %c0_33 = arith.constant 0 : index
    %33 = vector.load %arg3[%c0_31, %c0_32, %c0_33] : memref<1x64x128xf32, #tpu.memory_space<vmem>>, vector<1x64x128xf32>
    %34 = vector.shape_cast %33 : vector<1x64x128xf32> to vector<64x128xf32>
    %35 = vector.shape_cast %32 : vector<64x128xf32> to vector<1x64x128xf32>
    tpu.vector_store %arg3[%c0_31, %c0_32, %c0_33], %35 {strides = array<i32>} : memref<1x64x128xf32, #tpu.memory_space<vmem>>, vector<1x64x128xf32>,
    %c0_34 = arith.constant 0 : index
    %c18 = arith.constant 18 : index
    %c0_35 = arith.constant 0 : index
    %c0_36 = arith.constant 0 : index
    %36 = vector.load %arg1[%c0_34, %c18, %c0_35, %c0_36] : memref<1x36x9x128xf32, #tpu.memory_space<vmem>>, vector<1x8x8x128xf32>
    %37 = vector.shape_cast %36 : vector<1x8x8x128xf32> to vector<8x8x128xf32>
    %38 = vector.shape_cast %37 : vector<8x8x128xf32> to vector<64x128xf32>
    %39 = arith.truncf %38 : vector<64x128xf32> to vector<64x128xbf16>
    %c3 = arith.constant 3 : index
    %c0_37 = arith.constant 0 : index
    %c0_38 = arith.constant 0 : index
    %40 = vector.load %arg2[%c3, %c0_37, %c0_38] : memref<9x128x128xbf16, #tpu.memory_space<vmem>>, vector<1x128x128xbf16>
    %41 = vector.shape_cast %40 : vector<1x128x128xbf16> to vector<128x128xbf16>
    %cst_39 = arith.constant dense<0.000000e+00> : vector<64x128xf32>
    %42 = tpu.matmul %39, %41, %cst_39 {dimension_numbers = #tpu.dot_dimension_numbers<[1], [0], [0], [1], [0, 0, 1, 1], [], []>} : vector<64x128xbf16>, vector<128x128xbf16>, vector<64x128xf32> -> vector<64x128xf32>
    %c0_40 = arith.constant 0 : index
    %c0_41 = arith.constant 0 : index
    %c0_42 = arith.constant 0 : index
    %43 = vector.load %arg3[%c0_40, %c0_41, %c0_42] : memref<1x64x128xf32, #tpu.memory_space<vmem>>, vector<1x64x128xf32>
    %44 = vector.shape_cast %43 : vector<1x64x128xf32> to vector<64x128xf32>
    %45 = arith.addf %44, %42 : vector<64x128xf32>
    %c0_43 = arith.constant 0 : index
    %c0_44 = arith.constant 0 : index
    %c0_45 = arith.constant 0 : index
    %46 = vector.load %arg3[%c0_43, %c0_44, %c0_45] : memref<1x64x128xf32, #tpu.memory_space<vmem>>, vector<1x64x128xf32>
    %47 = vector.shape_cast %46 : vector<1x64x128xf32> to vector<64x128xf32>
    %48 = vector.shape_cast %45 : vector<64x128xf32> to vector<1x64x128xf32>
    tpu.vector_store %arg3[%c0_43, %c0_44, %c0_45], %48 {strides = array<i32>} : memref<1x64x128xf32, #tpu.memory_space<vmem>>, vector<1x64x128xf32>,
    %c0_46 = arith.constant 0 : index
    %c27 = arith.constant 27 : index
    %c0_47 = arith.constant 0 : index
    %c0_48 = arith.constant 0 : index
    %49 = vector.load %arg1[%c0_46, %c27, %c0_47, %c0_48] : memref<1x36x9x128xf32, #tpu.memory_space<vmem>>, vector<1x8x8x128xf32>
    %50 = vector.shape_cast %49 : vector<1x8x8x128xf32> to vector<8x8x128xf32>
    %51 = vector.shape_cast %50 : vector<8x8x128xf32> to vector<64x128xf32>
    %52 = arith.truncf %51 : vector<64x128xf32> to vector<64x128xbf16>
    %c4 = arith.constant 4 : index
    %c0_49 = arith.constant 0 : index
    %c0_50 = arith.constant 0 : index
    %53 = vector.load %arg2[%c4, %c0_49, %c0_50] : memref<9x128x128xbf16, #tpu.memory_space<vmem>>, vector<1x128x128xbf16>
    %54 = vector.shape_cast %53 : vector<1x128x128xbf16> to vector<128x128xbf16>
    %cst_51 = arith.constant dense<0.000000e+00> : vector<64x128xf32>
    %55 = tpu.matmul %52, %54, %cst_51 {dimension_numbers = #tpu.dot_dimension_numbers<[1], [0], [0], [1], [0, 0, 1, 1], [], []>} : vector<64x128xbf16>, vector<128x128xbf16>, vector<64x128xf32> -> vector<64x128xf32>
    %c0_52 = arith.constant 0 : index
    %c0_53 = arith.constant 0 : index
    %c0_54 = arith.constant 0 : index
    %56 = vector.load %arg3[%c0_52, %c0_53, %c0_54] : memref<1x64x128xf32, #tpu.memory_space<vmem>>, vector<1x64x128xf32>
    %57 = vector.shape_cast %56 : vector<1x64x128xf32> to vector<64x128xf32>
    %58 = arith.addf %57, %55 : vector<64x128xf32>
    %c0_55 = arith.constant 0 : index
    %c0_56 = arith.constant 0 : index
    %c0_57 = arith.constant 0 : index
    %59 = vector.load %arg3[%c0_55, %c0_56, %c0_57] : memref<1x64x128xf32, #tpu.memory_space<vmem>>, vector<1x64x128xf32>
    %60 = vector.shape_cast %59 : vector<1x64x128xf32> to vector<64x128xf32>
    %61 = vector.shape_cast %58 : vector<64x128xf32> to vector<1x64x128xf32>
    tpu.vector_store %arg3[%c0_55, %c0_56, %c0_57], %61 {strides = array<i32>} : memref<1x64x128xf32, #tpu.memory_space<vmem>>, vector<1x64x128xf32>,
    %c0_58 = arith.constant 0 : index
    %c18_59 = arith.constant 18 : index
    %c1_60 = arith.constant 1 : index
    %c0_61 = arith.constant 0 : index
    %62 = vector.load %arg1[%c0_58, %c18_59, %c1_60, %c0_61] : memref<1x36x9x128xf32, #tpu.memory_space<vmem>>, vector<1x8x8x128xf32>
    %63 = vector.shape_cast %62 : vector<1x8x8x128xf32> to vector<8x8x128xf32>
    %64 = vector.shape_cast %63 : vector<8x8x128xf32> to vector<64x128xf32>
    %65 = arith.truncf %64 : vector<64x128xf32> to vector<64x128xbf16>
    %c5 = arith.constant 5 : index
    %c0_62 = arith.constant 0 : index
    %c0_63 = arith.constant 0 : index
    %66 = vector.load %arg2[%c5, %c0_62, %c0_63] : memref<9x128x128xbf16, #tpu.memory_space<vmem>>, vector<1x128x128xbf16>
    %67 = vector.shape_cast %66 : vector<1x128x128xbf16> to vector<128x128xbf16>
    %cst_64 = arith.constant dense<0.000000e+00> : vector<64x128xf32>
    %68 = tpu.matmul %65, %67, %cst_64 {dimension_numbers = #tpu.dot_dimension_numbers<[1], [0], [0], [1], [0, 0, 1, 1], [], []>} : vector<64x128xbf16>, vector<128x128xbf16>, vector<64x128xf32> -> vector<64x128xf32>
    %c0_65 = arith.constant 0 : index
    %c0_66 = arith.constant 0 : index
    %c0_67 = arith.constant 0 : index
    %69 = vector.load %arg3[%c0_65, %c0_66, %c0_67] : memref<1x64x128xf32, #tpu.memory_space<vmem>>, vector<1x64x128xf32>
    %70 = vector.shape_cast %69 : vector<1x64x128xf32> to vector<64x128xf32>
    %71 = arith.addf %70, %68 : vector<64x128xf32>
    %c0_68 = arith.constant 0 : index
    %c0_69 = arith.constant 0 : index
    %c0_70 = arith.constant 0 : index
    %72 = vector.load %arg3[%c0_68, %c0_69, %c0_70] : memref<1x64x128xf32, #tpu.memory_space<vmem>>, vector<1x64x128xf32>
    %73 = vector.shape_cast %72 : vector<1x64x128xf32> to vector<64x128xf32>
    %74 = vector.shape_cast %71 : vector<64x128xf32> to vector<1x64x128xf32>
    tpu.vector_store %arg3[%c0_68, %c0_69, %c0_70], %74 {strides = array<i32>} : memref<1x64x128xf32, #tpu.memory_space<vmem>>, vector<1x64x128xf32>,
    %c0_71 = arith.constant 0 : index
    %c1_72 = arith.constant 1 : index
    %c0_73 = arith.constant 0 : index
    %c0_74 = arith.constant 0 : index
    %75 = vector.load %arg1[%c0_71, %c1_72, %c0_73, %c0_74] : memref<1x36x9x128xf32, #tpu.memory_space<vmem>>, vector<1x8x8x128xf32>
    %76 = vector.shape_cast %75 : vector<1x8x8x128xf32> to vector<8x8x128xf32>
    %77 = vector.shape_cast %76 : vector<8x8x128xf32> to vector<64x128xf32>
    %78 = arith.truncf %77 : vector<64x128xf32> to vector<64x128xbf16>
    %c6 = arith.constant 6 : index
    %c0_75 = arith.constant 0 : index
    %c0_76 = arith.constant 0 : index
    %79 = vector.load %arg2[%c6, %c0_75, %c0_76] : memref<9x128x128xbf16, #tpu.memory_space<vmem>>, vector<1x128x128xbf16>
    %80 = vector.shape_cast %79 : vector<1x128x128xbf16> to vector<128x128xbf16>
    %cst_77 = arith.constant dense<0.000000e+00> : vector<64x128xf32>
    %81 = tpu.matmul %78, %80, %cst_77 {dimension_numbers = #tpu.dot_dimension_numbers<[1], [0], [0], [1], [0, 0, 1, 1], [], []>} : vector<64x128xbf16>, vector<128x128xbf16>, vector<64x128xf32> -> vector<64x128xf32>
    %c0_78 = arith.constant 0 : index
    %c0_79 = arith.constant 0 : index
    %c0_80 = arith.constant 0 : index
    %82 = vector.load %arg3[%c0_78, %c0_79, %c0_80] : memref<1x64x128xf32, #tpu.memory_space<vmem>>, vector<1x64x128xf32>
    %83 = vector.shape_cast %82 : vector<1x64x128xf32> to vector<64x128xf32>
    %84 = arith.addf %83, %81 : vector<64x128xf32>
    %c0_81 = arith.constant 0 : index
    %c0_82 = arith.constant 0 : index
    %c0_83 = arith.constant 0 : index
    %85 = vector.load %arg3[%c0_81, %c0_82, %c0_83] : memref<1x64x128xf32, #tpu.memory_space<vmem>>, vector<1x64x128xf32>
    %86 = vector.shape_cast %85 : vector<1x64x128xf32> to vector<64x128xf32>
    %87 = vector.shape_cast %84 : vector<64x128xf32> to vector<1x64x128xf32>
    tpu.vector_store %arg3[%c0_81, %c0_82, %c0_83], %87 {strides = array<i32>} : memref<1x64x128xf32, #tpu.memory_space<vmem>>, vector<1x64x128xf32>,
    %c0_84 = arith.constant 0 : index
    %c10 = arith.constant 10 : index
    %c0_85 = arith.constant 0 : index
    %c0_86 = arith.constant 0 : index
    %88 = vector.load %arg1[%c0_84, %c10, %c0_85, %c0_86] : memref<1x36x9x128xf32, #tpu.memory_space<vmem>>, vector<1x8x8x128xf32>
    %89 = vector.shape_cast %88 : vector<1x8x8x128xf32> to vector<8x8x128xf32>
    %90 = vector.shape_cast %89 : vector<8x8x128xf32> to vector<64x128xf32>
    %91 = arith.truncf %90 : vector<64x128xf32> to vector<64x128xbf16>
    %c7 = arith.constant 7 : index
    %c0_87 = arith.constant 0 : index
    %c0_88 = arith.constant 0 : index
    %92 = vector.load %arg2[%c7, %c0_87, %c0_88] : memref<9x128x128xbf16, #tpu.memory_space<vmem>>, vector<1x128x128xbf16>
    %93 = vector.shape_cast %92 : vector<1x128x128xbf16> to vector<128x128xbf16>
    %cst_89 = arith.constant dense<0.000000e+00> : vector<64x128xf32>
    %94 = tpu.matmul %91, %93, %cst_89 {dimension_numbers = #tpu.dot_dimension_numbers<[1], [0], [0], [1], [0, 0, 1, 1], [], []>} : vector<64x128xbf16>, vector<128x128xbf16>, vector<64x128xf32> -> vector<64x128xf32>
    %c0_90 = arith.constant 0 : index
    %c0_91 = arith.constant 0 : index
    %c0_92 = arith.constant 0 : index
    %95 = vector.load %arg3[%c0_90, %c0_91, %c0_92] : memref<1x64x128xf32, #tpu.memory_space<vmem>>, vector<1x64x128xf32>
    %96 = vector.shape_cast %95 : vector<1x64x128xf32> to vector<64x128xf32>
    %97 = arith.addf %96, %94 : vector<64x128xf32>
    %c0_93 = arith.constant 0 : index
    %c0_94 = arith.constant 0 : index
    %c0_95 = arith.constant 0 : index
    %98 = vector.load %arg3[%c0_93, %c0_94, %c0_95] : memref<1x64x128xf32, #tpu.memory_space<vmem>>, vector<1x64x128xf32>
    %99 = vector.shape_cast %98 : vector<1x64x128xf32> to vector<64x128xf32>
    %100 = vector.shape_cast %97 : vector<64x128xf32> to vector<1x64x128xf32>
    tpu.vector_store %arg3[%c0_93, %c0_94, %c0_95], %100 {strides = array<i32>} : memref<1x64x128xf32, #tpu.memory_space<vmem>>, vector<1x64x128xf32>,
    %c0_96 = arith.constant 0 : index
    %c1_97 = arith.constant 1 : index
    %c1_98 = arith.constant 1 : index
    %c0_99 = arith.constant 0 : index
    %101 = vector.load %arg1[%c0_96, %c1_97, %c1_98, %c0_99] : memref<1x36x9x128xf32, #tpu.memory_space<vmem>>, vector<1x8x8x128xf32>
    %102 = vector.shape_cast %101 : vector<1x8x8x128xf32> to vector<8x8x128xf32>
    %103 = vector.shape_cast %102 : vector<8x8x128xf32> to vector<64x128xf32>
    %104 = arith.truncf %103 : vector<64x128xf32> to vector<64x128xbf16>
    %c8 = arith.constant 8 : index
    %c0_100 = arith.constant 0 : index
    %c0_101 = arith.constant 0 : index
    %105 = vector.load %arg2[%c8, %c0_100, %c0_101] : memref<9x128x128xbf16, #tpu.memory_space<vmem>>, vector<1x128x128xbf16>
    %106 = vector.shape_cast %105 : vector<1x128x128xbf16> to vector<128x128xbf16>
    %cst_102 = arith.constant dense<0.000000e+00> : vector<64x128xf32>
    %107 = tpu.matmul %104, %106, %cst_102 {dimension_numbers = #tpu.dot_dimension_numbers<[1], [0], [0], [1], [0, 0, 1, 1], [], []>} : vector<64x128xbf16>, vector<128x128xbf16>, vector<64x128xf32> -> vector<64x128xf32>
    %c0_103 = arith.constant 0 : index
    %c0_104 = arith.constant 0 : index
    %c0_105 = arith.constant 0 : index
    %108 = vector.load %arg3[%c0_103, %c0_104, %c0_105] : memref<1x64x128xf32, #tpu.memory_space<vmem>>, vector<1x64x128xf32>
    %109 = vector.shape_cast %108 : vector<1x64x128xf32> to vector<64x128xf32>
    %110 = arith.addf %109, %107 : vector<64x128xf32>
    %c0_106 = arith.constant 0 : index
    %c0_107 = arith.constant 0 : index
    %c0_108 = arith.constant 0 : index
    %111 = vector.load %arg3[%c0_106, %c0_107, %c0_108] : memref<1x64x128xf32, #tpu.memory_space<vmem>>, vector<1x64x128xf32>
    %112 = vector.shape_cast %111 : vector<1x64x128xf32> to vector<64x128xf32>
    %113 = vector.shape_cast %110 : vector<64x128xf32> to vector<1x64x128xf32>
    tpu.vector_store %arg3[%c0_106, %c0_107, %c0_108], %113 {strides = array<i32>} : memref<1x64x128xf32, #tpu.memory_space<vmem>>, vector<1x64x128xf32>,
    %c0_109 = arith.constant 0 : index
    %c0_110 = arith.constant 0 : index
    %c0_111 = arith.constant 0 : index
    %114 = vector.load %arg3[%c0_109, %c0_110, %c0_111] : memref<1x64x128xf32, #tpu.memory_space<vmem>>, vector<1x64x128xf32>
    %115 = vector.shape_cast %114 : vector<1x64x128xf32> to vector<64x128xf32>
    %cst_112 = arith.constant dense<0.000000e+00> : vector<128xf32>
    %116 = vector.multi_reduction <add>, %115, %cst_112 [0] : vector<64x128xf32> to vector<128xf32>
    %117 = vector.shape_cast %116 : vector<128xf32> to vector<1x128xf32>
    %c0_113 = arith.constant 0 : index
    %c0_114 = arith.constant 0 : index
    %c0_115 = arith.constant 0 : index
    %118 = vector.load %arg4[%c0_113, %c0_114, %c0_115] : memref<1x1x128xf32, #tpu.memory_space<vmem>>, vector<1x1x128xf32>
    %119 = vector.shape_cast %118 : vector<1x1x128xf32> to vector<1x128xf32>
    %120 = vector.shape_cast %117 : vector<1x128xf32> to vector<1x1x128xf32>
    tpu.vector_store %arg4[%c0_113, %c0_114, %c0_115], %120 {strides = array<i32>} : memref<1x1x128xf32, #tpu.memory_space<vmem>>, vector<1x1x128xf32>,
    %121 = arith.mulf %115, %115 : vector<64x128xf32>
    %cst_116 = arith.constant dense<0.000000e+00> : vector<128xf32>
    %122 = vector.multi_reduction <add>, %121, %cst_116 [0] : vector<64x128xf32> to vector<128xf32>
    %123 = vector.shape_cast %122 : vector<128xf32> to vector<1x128xf32>
    %c0_117 = arith.constant 0 : index
    %c0_118 = arith.constant 0 : index
    %c0_119 = arith.constant 0 : index
    %124 = vector.load %arg5[%c0_117, %c0_118, %c0_119] : memref<1x1x128xf32, #tpu.memory_space<vmem>>, vector<1x1x128xf32>
    %125 = vector.shape_cast %124 : vector<1x1x128xf32> to vector<1x128xf32>
    %126 = vector.shape_cast %123 : vector<1x128xf32> to vector<1x1x128xf32>
    tpu.vector_store %arg5[%c0_117, %c0_118, %c0_119], %126 {strides = array<i32>} : memref<1x1x128xf32, #tpu.memory_space<vmem>>, vector<1x1x128xf32>,
    return
  }
  func.func @transform_0(%arg0: i32) -> (i32, i32, i32, i32) {
    %c0_i32 = arith.constant 0 : i32
    %c0_i32_0 = arith.constant 0 : i32
    %c0_i32_1 = arith.constant 0 : i32
    %c0_i32_2 = arith.constant 0 : i32
    return %arg0, %c0_i32, %c0_i32_0, %c0_i32_1 : i32, i32, i32, i32
  }
  func.func @transform_1(%arg0: i32) -> (i32, i32, i32) {
    %c0_i32 = arith.constant 0 : i32
    %c0_i32_0 = arith.constant 0 : i32
    %c0_i32_1 = arith.constant 0 : i32
    %c0_i32_2 = arith.constant 0 : i32
    return %c0_i32, %c0_i32_0, %c0_i32_1 : i32, i32, i32
  }
  func.func @transform_2(%arg0: i32) -> (i32, i32, i32) {
    %c0_i32 = arith.constant 0 : i32
    %c0_i32_0 = arith.constant 0 : i32
    %c0_i32_1 = arith.constant 0 : i32
    return %arg0, %c0_i32, %c0_i32_0 : i32, i32, i32
  }
  func.func @transform_3(%arg0: i32) -> (i32, i32, i32) {
    %c0_i32 = arith.constant 0 : i32
    %c0_i32_0 = arith.constant 0 : i32
    %c0_i32_1 = arith.constant 0 : i32
    return %arg0, %c0_i32, %c0_i32_0 : i32, i32, i32
  }
  func.func @transform_4(%arg0: i32) -> (i32, i32, i32) {
    %c0_i32 = arith.constant 0 : i32
    %c0_i32_0 = arith.constant 0 : i32
    %c0_i32_1 = arith.constant 0 : i32
    return %arg0, %c0_i32, %c0_i32_0 : i32, i32, i32
  }
}

module attributes {stable_mosaic.version = 11 : i64} {
  func.func @kernel(%arg0: i32, %arg1: memref<128x128xbf16, #tpu.memory_space<vmem>>, %arg2: memref<128x128xbf16, #tpu.memory_space<vmem>>, %arg3: memref<128x128xf32, #tpu.memory_space<vmem>>, %arg4: memref<1x1x128xf32, #tpu.memory_space<vmem>>, %arg5: memref<1x1x128xf32, #tpu.memory_space<vmem>>) attributes {dimension_semantics = [#tpu.dimension_semantics<parallel>], iteration_bounds = array<i64: 1>, scalar_prefetch = 0 : i64, scratch_operands = 0 : i64, tpu.core_type = #tpu.core_type<tc>, window_params = [{transform_indices = @transform_0, window_bounds = array<i64: 128, 128>}, {pipeline_mode = #tpu.pipeline_mode<synchronous>, transform_indices = @transform_1, window_bounds = array<i64: 128, 128>}, {transform_indices = @transform_2, window_bounds = array<i64: 128, 128>}, {transform_indices = @transform_3, window_bounds = array<i64: 1, 1, 128>}, {transform_indices = @transform_4, window_bounds = array<i64: 1, 1, 128>}]} {
    %c0 = arith.constant 0 : index
    %c0_0 = arith.constant 0 : index
    %0 = vector.load %arg1[%c0, %c0_0] : memref<128x128xbf16, #tpu.memory_space<vmem>>, vector<128x128xbf16>
    %c0_1 = arith.constant 0 : index
    %c0_2 = arith.constant 0 : index
    %1 = vector.load %arg2[%c0_1, %c0_2] : memref<128x128xbf16, #tpu.memory_space<vmem>>, vector<128x128xbf16>
    %cst = arith.constant dense<0.000000e+00> : vector<128x128xf32>
    %2 = tpu.matmul %0, %1, %cst {dimension_numbers = #tpu.dot_dimension_numbers<[1], [0], [0], [1], [0, 0, 1, 1], [], []>} : vector<128x128xbf16>, vector<128x128xbf16>, vector<128x128xf32> -> vector<128x128xf32>
    %c0_3 = arith.constant 0 : index
    %c0_4 = arith.constant 0 : index
    %3 = vector.load %arg3[%c0_3, %c0_4] : memref<128x128xf32, #tpu.memory_space<vmem>>, vector<128x128xf32>
    tpu.vector_store %arg3[%c0_3, %c0_4], %2 {strides = array<i32>} : memref<128x128xf32, #tpu.memory_space<vmem>>, vector<128x128xf32>,
    %cst_5 = arith.constant dense<0.000000e+00> : vector<128xf32>
    %4 = vector.multi_reduction <add>, %2, %cst_5 [0] : vector<128x128xf32> to vector<128xf32>
    %5 = vector.shape_cast %4 : vector<128xf32> to vector<1x128xf32>
    %c0_6 = arith.constant 0 : index
    %c0_7 = arith.constant 0 : index
    %c0_8 = arith.constant 0 : index
    %6 = vector.load %arg4[%c0_6, %c0_7, %c0_8] : memref<1x1x128xf32, #tpu.memory_space<vmem>>, vector<1x1x128xf32>
    %7 = vector.shape_cast %6 : vector<1x1x128xf32> to vector<1x128xf32>
    %8 = vector.shape_cast %5 : vector<1x128xf32> to vector<1x1x128xf32>
    tpu.vector_store %arg4[%c0_6, %c0_7, %c0_8], %8 {strides = array<i32>} : memref<1x1x128xf32, #tpu.memory_space<vmem>>, vector<1x1x128xf32>,
    %9 = arith.mulf %2, %2 : vector<128x128xf32>
    %cst_9 = arith.constant dense<0.000000e+00> : vector<128xf32>
    %10 = vector.multi_reduction <add>, %9, %cst_9 [0] : vector<128x128xf32> to vector<128xf32>
    %11 = vector.shape_cast %10 : vector<128xf32> to vector<1x128xf32>
    %c0_10 = arith.constant 0 : index
    %c0_11 = arith.constant 0 : index
    %c0_12 = arith.constant 0 : index
    %12 = vector.load %arg5[%c0_10, %c0_11, %c0_12] : memref<1x1x128xf32, #tpu.memory_space<vmem>>, vector<1x1x128xf32>
    %13 = vector.shape_cast %12 : vector<1x1x128xf32> to vector<1x128xf32>
    %14 = vector.shape_cast %11 : vector<1x128xf32> to vector<1x1x128xf32>
    tpu.vector_store %arg5[%c0_10, %c0_11, %c0_12], %14 {strides = array<i32>} : memref<1x1x128xf32, #tpu.memory_space<vmem>>, vector<1x1x128xf32>,
    return
  }
  func.func @transform_0(%arg0: i32) -> (i32, i32) {
    %c0_i32 = arith.constant 0 : i32
    %c0_i32_0 = arith.constant 0 : i32
    return %arg0, %c0_i32 : i32, i32
  }
  func.func @transform_1(%arg0: i32) -> (i32, i32) {
    %c0_i32 = arith.constant 0 : i32
    %c0_i32_0 = arith.constant 0 : i32
    %c0_i32_1 = arith.constant 0 : i32
    return %c0_i32, %c0_i32_0 : i32, i32
  }
  func.func @transform_2(%arg0: i32) -> (i32, i32) {
    %c0_i32 = arith.constant 0 : i32
    %c0_i32_0 = arith.constant 0 : i32
    return %arg0, %c0_i32 : i32, i32
  }
  func.func @transform_3(%arg0: i32) -> (i32, i32, i32) {
    %c0_i32 = arith.constant 0 : i32
    %c0_i32_0 = arith.constant 0 : i32
    %c0_i32_1 = arith.constant 0 : i32
    return %arg0, %c0_i32, %c0_i32_0 : i32, i32, i32
  }
  func.func @transform_4(%arg0: i32) -> (i32, i32, i32) {
    %c0_i32 = arith.constant 0 : i32
    %c0_i32_0 = arith.constant 0 : i32
    %c0_i32_1 = arith.constant 0 : i32
    return %arg0, %c0_i32, %c0_i32_0 : i32, i32, i32
  }
}

module attributes {stable_mosaic.version = 11 : i64} {
  func.func @kernel(%arg0: i32, %arg1: memref<128x128xf32, #tpu.memory_space<vmem>>, %arg2: memref<128x128xf32, #tpu.memory_space<vmem>>, %arg3: memref<1x128xf32, #tpu.memory_space<vmem>>, %arg4: memref<1x128xf32, #tpu.memory_space<vmem>>, %arg5: memref<1x128xf32, #tpu.memory_space<vmem>>, %arg6: memref<128x128xf32, #tpu.memory_space<vmem>>) attributes {dimension_semantics = [#tpu.dimension_semantics<parallel>], iteration_bounds = array<i64: 1>, scalar_prefetch = 0 : i64, scratch_operands = 0 : i64, tpu.core_type = #tpu.core_type<tc>, window_params = [{transform_indices = @transform_0, window_bounds = array<i64: 128, 128>}, {transform_indices = @transform_1, window_bounds = array<i64: 128, 128>}, {pipeline_mode = #tpu.pipeline_mode<synchronous>, transform_indices = @transform_2, window_bounds = array<i64: 1, 128>}, {pipeline_mode = #tpu.pipeline_mode<synchronous>, transform_indices = @transform_3, window_bounds = array<i64: 1, 128>}, {pipeline_mode = #tpu.pipeline_mode<synchronous>, transform_indices = @transform_4, window_bounds = array<i64: 1, 128>}, {transform_indices = @transform_5, window_bounds = array<i64: 128, 128>}]} {
    %c0 = arith.constant 0 : index
    %c0_0 = arith.constant 0 : index
    %0 = vector.load %arg1[%c0, %c0_0] : memref<128x128xf32, #tpu.memory_space<vmem>>, vector<128x128xf32>
    %c0_1 = arith.constant 0 : index
    %c0_2 = arith.constant 0 : index
    %1 = vector.load %arg3[%c0_1, %c0_2] : memref<1x128xf32, #tpu.memory_space<vmem>>, vector<1x128xf32>
    %2 = vector.broadcast %1 : vector<1x128xf32> to vector<128x128xf32>
    %3 = arith.mulf %0, %2 : vector<128x128xf32>
    %c0_3 = arith.constant 0 : index
    %c0_4 = arith.constant 0 : index
    %4 = vector.load %arg2[%c0_3, %c0_4] : memref<128x128xf32, #tpu.memory_space<vmem>>, vector<128x128xf32>
    %c0_5 = arith.constant 0 : index
    %c0_6 = arith.constant 0 : index
    %5 = vector.load %arg4[%c0_5, %c0_6] : memref<1x128xf32, #tpu.memory_space<vmem>>, vector<1x128xf32>
    %6 = vector.broadcast %5 : vector<1x128xf32> to vector<128x128xf32>
    %7 = arith.mulf %4, %6 : vector<128x128xf32>
    %8 = arith.addf %3, %7 : vector<128x128xf32>
    %c0_7 = arith.constant 0 : index
    %c0_8 = arith.constant 0 : index
    %9 = vector.load %arg5[%c0_7, %c0_8] : memref<1x128xf32, #tpu.memory_space<vmem>>, vector<1x128xf32>
    %10 = vector.broadcast %9 : vector<1x128xf32> to vector<128x128xf32>
    %11 = arith.addf %8, %10 : vector<128x128xf32>
    %cst = arith.constant 0.000000e+00 : f32
    %12 = vector.broadcast %cst : f32 to vector<128x128xf32>
    %13 = arith.maximumf %11, %12 : vector<128x128xf32>
    %c0_9 = arith.constant 0 : index
    %c0_10 = arith.constant 0 : index
    %14 = vector.load %arg6[%c0_9, %c0_10] : memref<128x128xf32, #tpu.memory_space<vmem>>, vector<128x128xf32>
    tpu.vector_store %arg6[%c0_9, %c0_10], %13 {strides = array<i32>} : memref<128x128xf32, #tpu.memory_space<vmem>>, vector<128x128xf32>,
    return
  }
  func.func @transform_0(%arg0: i32) -> (i32, i32) {
    %c0_i32 = arith.constant 0 : i32
    %c0_i32_0 = arith.constant 0 : i32
    return %arg0, %c0_i32 : i32, i32
  }
  func.func @transform_1(%arg0: i32) -> (i32, i32) {
    %c0_i32 = arith.constant 0 : i32
    %c0_i32_0 = arith.constant 0 : i32
    return %arg0, %c0_i32 : i32, i32
  }
  func.func @transform_2(%arg0: i32) -> (i32, i32) {
    %c0_i32 = arith.constant 0 : i32
    %c0_i32_0 = arith.constant 0 : i32
    %c0_i32_1 = arith.constant 0 : i32
    return %c0_i32, %c0_i32_0 : i32, i32
  }
  func.func @transform_3(%arg0: i32) -> (i32, i32) {
    %c0_i32 = arith.constant 0 : i32
    %c0_i32_0 = arith.constant 0 : i32
    %c0_i32_1 = arith.constant 0 : i32
    return %c0_i32, %c0_i32_0 : i32, i32
  }
  func.func @transform_4(%arg0: i32) -> (i32, i32) {
    %c0_i32 = arith.constant 0 : i32
    %c0_i32_0 = arith.constant 0 : i32
    %c0_i32_1 = arith.constant 0 : i32
    return %c0_i32, %c0_i32_0 : i32, i32
  }
  func.func @transform_5(%arg0: i32) -> (i32, i32) {
    %c0_i32 = arith.constant 0 : i32
    %c0_i32_0 = arith.constant 0 : i32
    return %arg0, %c0_i32 : i32, i32
  }
}

</mosaic_0001>

<llo_original>
// kernel: basic_block_forward.6
$region0: #{basic_block_forward.6}
  #allocation0 [shape = 'u32[]', space=smem, size = 0x4, offset = 0x4, fixed_abs, tag = 'smem constant byte address 0x4 - core index']
  #allocation1 [shape = 'u32[144,128]{1,0:T(1,128)}', space=vmem, size = 0x12000, scoped, tag = 'internal scratch']
  %s0 = inlined_call_operand.vmem [shape: bf16[128,128], index: 0, kind: input, shape index: {}]
  %s1 = inlined_call_operand.vmem [shape: bf16[128,128], index: 1, kind: input, shape index: {}]
  %s2 = inlined_call_operand.vmem [shape: f32[128,128], index: 2, kind: output, shape index: {0}]
  %s3 = inlined_call_operand.vmem [shape: f32[1,1,128], index: 3, kind: output, shape index: {1}]
  %s4 = inlined_call_operand.vmem [shape: f32[1,1,128], index: 4, kind: output, shape index: {2}]
  %5 = xla_tuple %s2, %s3, %s4
  %s6 = sld [smem:[#allocation0]]
  $region34: #{basic_block_forward.6} parent=0
    _
  %s8 = ssub.s32 1, %s6
  %s9 = scalar_select 0, %s8, %s6
  // Predicated region
  $region2: #{basic_block_forward.6} parent=0 // pred_check
    _
  $region3: #{basic_block_forward.6} parent=0 // pred_check_branch
    %11 = sbr.rel (0) target = $region5
  $region4: #{basic_block_forward.6} parent=0 // pred_region
    _
  $region5: #{basic_block_forward.6} parent=0 // pred_fallthru
    _
  // Predicated region
  $region6: #{basic_block_forward.6} parent=0 // pred_check
    _
  $region7: #{basic_block_forward.6} parent=0 // pred_check_branch
    %13 = sbr.rel (0) target = $region9
  $region8: #{basic_block_forward.6} parent=0 // pred_region
    _
  $region9: #{basic_block_forward.6} parent=0 // pred_fallthru
    _
  %v15 = vld [vmem:[%s0] sm:$0xf]
  %v16 = vld [vmem:[%s0 + $0x4] sm:$0xf]
  %v17 = vld [vmem:[%s0 + $0x8] sm:$0xf]
  %v18 = vld [vmem:[%s0 + $0xc] sm:$0xf]
  %v19 = vld [vmem:[%s0 + $0x10] sm:$0xf]
  %v20 = vld [vmem:[%s0 + $0x14] sm:$0xf]
  %v21 = vld [vmem:[%s0 + $0x18] sm:$0xf]
  %v22 = vld [vmem:[%s0 + $0x1c] sm:$0xf]
  %v23 = vld [vmem:[%s0 + $0x20] sm:$0xf]
  %v24 = vld [vmem:[%s0 + $0x24] sm:$0xf]
  %v25 = vld [vmem:[%s0 + $0x28] sm:$0xf]
  %v26 = vld [vmem:[%s0 + $0x2c] sm:$0xf]
  %v27 = vld [vmem:[%s0 + $0x30] sm:$0xf]
  %v28 = vld [vmem:[%s0 + $0x34] sm:$0xf]
  %v29 = vld [vmem:[%s0 + $0x38] sm:$0xf]
  %v30 = vld [vmem:[%s0 + $0x3c] sm:$0xf]
  %v31 = vld [vmem:[%s1] sm:$0xf]
  %v32 = vld [vmem:[%s1 + $0x4] sm:$0xf]
  %v33 = vld [vmem:[%s1 + $0x8] sm:$0xf]
  %v34 = vld [vmem:[%s1 + $0xc] sm:$0xf]
  %v35 = vld [vmem:[%s1 + $0x10] sm:$0xf]
  %v36 = vld [vmem:[%s1 + $0x14] sm:$0xf]
  %v37 = vld [vmem:[%s1 + $0x18] sm:$0xf]
  %v38 = vld [vmem:[%s1 + $0x1c] sm:$0xf]
  %v39 = vld [vmem:[%s1 + $0x20] sm:$0xf]
  %v40 = vld [vmem:[%s1 + $0x24] sm:$0xf]
  %v41 = vld [vmem:[%s1 + $0x28] sm:$0xf]
  %v42 = vld [vmem:[%s1 + $0x2c] sm:$0xf]
  %v43 = vld [vmem:[%s1 + $0x30] sm:$0xf]
  %v44 = vld [vmem:[%s1 + $0x34] sm:$0xf]
  %v45 = vld [vmem:[%s1 + $0x38] sm:$0xf]
  %v46 = vld [vmem:[%s1 + $0x3c] sm:$0xf]
  %v63 = vunpack.c.l.b16 %v15
  %v64 = vunpack.c.l.b16 %v16
  %v65 = vunpack.c.l.b16 %v17
  %v66 = vunpack.c.l.b16 %v18
  %v67 = vunpack.c.l.b16 %v19
  %v68 = vunpack.c.l.b16 %v20
  %v69 = vunpack.c.l.b16 %v21
  %v70 = vunpack.c.l.b16 %v22
  %v71 = vunpack.c.l.b16 %v23
  %v72 = vunpack.c.l.b16 %v24
  %v73 = vunpack.c.l.b16 %v25
  %v74 = vunpack.c.l.b16 %v26
  %v75 = vunpack.c.l.b16 %v27
  %v76 = vunpack.c.l.b16 %v28
  %v77 = vunpack.c.l.b16 %v29
  %v78 = vunpack.c.l.b16 %v30
  %v79 = vpack.c.b16 %v64, %v63
  %v80 = vpack.c.b16 %v66, %v65
  %v81 = vpack.c.b16 %v68, %v67
  %v82 = vpack.c.b16 %v70, %v69
  %v83 = vpack.c.b16 %v72, %v71
  %v84 = vpack.c.b16 %v74, %v73
  %v85 = vpack.c.b16 %v76, %v75
  %v86 = vpack.c.b16 %v78, %v77
  %v111 = vunpack.c.l.b16 %v31
  %v112 = vunpack.c.l.b16 %v32
  %v113 = vunpack.c.l.b16 %v33
  %v114 = vunpack.c.l.b16 %v34
  %v115 = vunpack.c.l.b16 %v35
  %v116 = vunpack.c.l.b16 %v36
  %v117 = vunpack.c.l.b16 %v37
  %v118 = vunpack.c.l.b16 %v38
  %v119 = vunpack.c.l.b16 %v39
  %v120 = vunpack.c.l.b16 %v40
  %v121 = vunpack.c.l.b16 %v41
  %v122 = vunpack.c.l.b16 %v42
  %v123 = vunpack.c.l.b16 %v43
  %v124 = vunpack.c.l.b16 %v44
  %v125 = vunpack.c.l.b16 %v45
  %v126 = vunpack.c.l.b16 %v46
  %v127 = vpack.c.b16 %v112, %v111
  %v128 = vpack.c.b16 %v114, %v113
  %v129 = vpack.c.b16 %v116, %v115
  %v130 = vpack.c.b16 %v118, %v117
  %v131 = vpack.c.b16 %v120, %v119
  %v132 = vpack.c.b16 %v122, %v121
  %v133 = vpack.c.b16 %v124, %v123
  %v134 = vpack.c.b16 %v126, %v125
  %143 = vmatprep.subr.bf16.mxu0 0
  %144 = vmatpush1.bf16.msra.mxu0 %v134
  %145 = vmatprep.subr.bf16.mxu0 0
  %146 = vmatpush1.bf16.msra.mxu0 %v133
  %147 = vmatprep.subr.bf16.mxu0 0
  %148 = vmatpush1.bf16.msra.mxu0 %v132
  %149 = vmatprep.subr.bf16.mxu0 0
  %150 = vmatpush1.bf16.msra.mxu0 %v131
  %151 = vmatprep.subr.bf16.mxu0 0
  %152 = vmatpush1.bf16.msra.mxu0 %v130
  %153 = vmatprep.subr.bf16.mxu0 0
  %154 = vmatpush1.bf16.msra.mxu0 %v129
  %155 = vmatprep.subr.bf16.mxu0 0
  %156 = vmatpush1.bf16.msra.mxu0 %v128
  %157 = vmatprep.subr.bf16.mxu0 0
  %158 = vmatpush1.bf16.msra.mxu0 %v127
  %159 = vmatprep.subr.bf16.mxu0 0
  %160 = vmatpush2.bf16.msra.mxu0 0
  %161 = vmatprep.subr.bf16.mxu0 0
  %162 = vmatpush2.bf16.msra.mxu0 0
  %163 = vmatprep.subr.bf16.mxu0 0
  %164 = vmatpush2.bf16.msra.mxu0 0
  %165 = vmatprep.subr.bf16.mxu0 0
  %166 = vmatpush2.bf16.msra.mxu0 0
  %167 = vmatprep.subr.bf16.mxu0 0
  %168 = vmatpush2.bf16.msra.mxu0 0
  %169 = vmatprep.subr.bf16.mxu0 0
  %170 = vmatpush2.bf16.msra.mxu0 0
  %171 = vmatprep.subr.bf16.mxu0 0
  %172 = vmatpush2.bf16.msra.mxu0 0
  %173 = vmatprep.subr.bf16.mxu0 0
  %174 = vmatpush2.bf16.msra.mxu0 0
  %175 = vmatprep.mubr.bf16.mxu0 0
  %176 = vmatmul.mubr.bf16.gmra.mxu0 %v79
  %v177 = vpop.f32.mrf.mxu0
  %v178 = vadd.f32 0.0, %v177
  %v179 = vpop.f32.mrf.mxu0
  %v180 = vpop.f32.mrf.mxu0
  %v181 = vadd.f32 0.0, %v180
  %v182 = vpop.f32.mrf.mxu0
  %183 = vmatprep.mubr.bf16.mxu0 0
  %184 = vmatmul.mubr.bf16.gmra.mxu0 %v80
  %v185 = vpop.f32.mrf.mxu0
  %v186 = vadd.f32 0.0, %v185
  %v187 = vpop.f32.mrf.mxu0
  %v188 = vpop.f32.mrf.mxu0
  %v189 = vadd.f32 0.0, %v188
  %v190 = vpop.f32.mrf.mxu0
  %191 = vmatprep.mubr.bf16.mxu0 0
  %192 = vmatmul.mubr.bf16.gmra.mxu0 %v81
  %v193 = vpop.f32.mrf.mxu0
  %v194 = vadd.f32 0.0, %v193
  %v195 = vpop.f32.mrf.mxu0
  %v196 = vpop.f32.mrf.mxu0
  %v197 = vadd.f32 0.0, %v196
  %v198 = vpop.f32.mrf.mxu0
  %199 = vmatprep.mubr.bf16.mxu0 0
  %200 = vmatmul.mubr.bf16.gmra.mxu0 %v82
  %v201 = vpop.f32.mrf.mxu0
  %v202 = vadd.f32 0.0, %v201
  %v203 = vpop.f32.mrf.mxu0
  %v204 = vpop.f32.mrf.mxu0
  %v205 = vadd.f32 0.0, %v204
  %v206 = vpop.f32.mrf.mxu0
  %207 = vmatprep.mubr.bf16.mxu0 0
  %208 = vmatmul.mubr.bf16.gmra.mxu0 %v83
  %v209 = vpop.f32.mrf.mxu0
  %v210 = vadd.f32 0.0, %v209
  %v211 = vpop.f32.mrf.mxu0
  %v212 = vpop.f32.mrf.mxu0
  %v213 = vadd.f32 0.0, %v212
  %v214 = vpop.f32.mrf.mxu0
  %215 = vmatprep.mubr.bf16.mxu0 0
  %216 = vmatmul.mubr.bf16.gmra.mxu0 %v84
  %v217 = vpop.f32.mrf.mxu0
  %v218 = vadd.f32 0.0, %v217
  %v219 = vpop.f32.mrf.mxu0
  %v220 = vpop.f32.mrf.mxu0
  %v221 = vadd.f32 0.0, %v220
  %v222 = vpop.f32.mrf.mxu0
  %223 = vmatprep.mubr.bf16.mxu0 0
  %224 = vmatmul.mubr.bf16.gmra.mxu0 %v85
  %v225 = vpop.f32.mrf.mxu0
  %v226 = vadd.f32 0.0, %v225
  %v227 = vpop.f32.mrf.mxu0
  %v228 = vpop.f32.mrf.mxu0
  %v229 = vadd.f32 0.0, %v228
  %v230 = vpop.f32.mrf.mxu0
  %231 = vmatprep.mubr.bf16.mxu0 0
  %232 = vmatmul.mubr.bf16.gmra.mxu0 %v86
  %v233 = vpop.f32.mrf.mxu0
  %v234 = vadd.f32 0.0, %v233
  %v235 = vpop.f32.mrf.mxu0
  %v236 = vpop.f32.mrf.mxu0
  %v237 = vadd.f32 0.0, %v236
  %v238 = vpop.f32.mrf.mxu0
  %239 = vdwg.mxu0
  %240 = vst [vmem:[%s2] sm:$0xff] %v178
  %241 = vst [vmem:[%s2 + $0x8] sm:$0xff] %v181
  %242 = vst [vmem:[%s2 + $0x10] sm:$0xff] %v186
  %243 = vst [vmem:[%s2 + $0x18] sm:$0xff] %v189
  %244 = vst [vmem:[%s2 + $0x20] sm:$0xff] %v194
  %245 = vst [vmem:[%s2 + $0x28] sm:$0xff] %v197
  %246 = vst [vmem:[%s2 + $0x30] sm:$0xff] %v202
  %247 = vst [vmem:[%s2 + $0x38] sm:$0xff] %v205
  %248 = vst [vmem:[%s2 + $0x40] sm:$0xff] %v210
  %249 = vst [vmem:[%s2 + $0x48] sm:$0xff] %v213
  %250 = vst [vmem:[%s2 + $0x50] sm:$0xff] %v218
  %251 = vst [vmem:[%s2 + $0x58] sm:$0xff] %v221
  %252 = vst [vmem:[%s2 + $0x60] sm:$0xff] %v226
  %253 = vst [vmem:[%s2 + $0x68] sm:$0xff] %v229
  %254 = vst [vmem:[%s2 + $0x70] sm:$0xff] %v234
  %255 = vst [vmem:[%s2 + $0x78] sm:$0xff] %v237
  %v256 = vadd.f32 %v178, %v181
  %v257 = vadd.f32 %v256, %v186
  %v258 = vadd.f32 %v257, %v189
  %v259 = vadd.f32 %v258, %v194
  %v260 = vadd.f32 %v259, %v197
  %v261 = vadd.f32 %v260, %v202
  %v262 = vadd.f32 %v261, %v205
  %v263 = vadd.f32 %v262, %v210
  %v264 = vadd.f32 %v263, %v213
  %v265 = vadd.f32 %v264, %v218
  %v266 = vadd.f32 %v265, %v221
  %v267 = vadd.f32 %v266, %v226
  %v268 = vadd.f32 %v267, %v229
  %v269 = vadd.f32 %v268, %v234
  %v270 = vadd.f32 %v269, %v237
  %v271 = vrot.slane %v270, 4
  %v272 = vadd.f32 %v270, %v271
  %v273 = vrot.slane %v272, 2
  %v274 = vadd.f32 %v272, %v273
  %v275 = vrot.slane %v274, 1
  %v276 = vadd.f32 %v274, %v275
  %277 = vst [vmem:[%s3] sm:$0x1] %v276
  %v278 = vmul.f32 %v178, %v178
  %v279 = vmul.f32 %v181, %v181
  %v280 = vmul.f32 %v186, %v186
  %v281 = vmul.f32 %v189, %v189
  %v282 = vmul.f32 %v194, %v194
  %v283 = vmul.f32 %v197, %v197
  %v284 = vmul.f32 %v202, %v202
  %v285 = vmul.f32 %v205, %v205
  %v286 = vmul.f32 %v210, %v210
  %v287 = vmul.f32 %v213, %v213
  %v288 = vmul.f32 %v218, %v218
  %v289 = vmul.f32 %v221, %v221
  %v290 = vmul.f32 %v226, %v226
  %v291 = vmul.f32 %v229, %v229
  %v292 = vmul.f32 %v234, %v234
  %v293 = vmul.f32 %v237, %v237
  %v294 = vadd.f32 %v278, %v279
  %v295 = vadd.f32 %v294, %v280
  %v296 = vadd.f32 %v295, %v281
  %v297 = vadd.f32 %v296, %v282
  %v298 = vadd.f32 %v297, %v283
  %v299 = vadd.f32 %v298, %v284
  %v300 = vadd.f32 %v299, %v285
  %v301 = vadd.f32 %v300, %v286
  %v302 = vadd.f32 %v301, %v287
  %v303 = vadd.f32 %v302, %v288
  %v304 = vadd.f32 %v303, %v289
  %v305 = vadd.f32 %v304, %v290
  %v306 = vadd.f32 %v305, %v291
  %v307 = vadd.f32 %v306, %v292
  %v308 = vadd.f32 %v307, %v293
  %v309 = vrot.slane %v308, 4
  %v310 = vadd.f32 %v308, %v309
  %v311 = vrot.slane %v310, 2
  %v312 = vadd.f32 %v310, %v311
  %v313 = vrot.slane %v312, 1
  %v314 = vadd.f32 %v312, %v313
  %315 = vst [vmem:[%s4] sm:$0x1] %v314
  // Predicated region
  $region10: #{basic_block_forward.6} parent=0 // pred_check
    _
  $region11: #{basic_block_forward.6} parent=0 // pred_check_branch
    %317 = sbr.rel (0) target = $region13
  $region12: #{basic_block_forward.6} parent=0 // pred_region
    _
  $region13: #{basic_block_forward.6} parent=0 // pred_fallthru
    _
  // Predicated region
  $region14: #{basic_block_forward.6} parent=0 // pred_check
    _
  $region15: #{basic_block_forward.6} parent=0 // pred_check_branch
    %319 = sbr.rel (0) target = $region17
  $region16: #{basic_block_forward.6} parent=0 // pred_region
    _
  $region17: #{basic_block_forward.6} parent=0 // pred_fallthru
    _
  // Predicated region
  $region18: #{basic_block_forward.6} parent=0 // pred_check
    _
  $region19: #{basic_block_forward.6} parent=0 // pred_check_branch
    %321 = sbr.rel (0) target = $region21
  $region20: #{basic_block_forward.6} parent=0 // pred_region
    _
  $region21: #{basic_block_forward.6} parent=0 // pred_fallthru
    _
  // Predicated region
  $region22: #{basic_block_forward.6} parent=0 // pred_check
    _
  $region23: #{basic_block_forward.6} parent=0 // pred_check_branch
    %323 = sbr.rel (0) target = $region25
  $region24: #{basic_block_forward.6} parent=0 // pred_region
    _
  $region25: #{basic_block_forward.6} parent=0 // pred_fallthru
    _
  // Predicated region
  $region26: #{basic_block_forward.6} parent=0 // pred_check
    _
  $region27: #{basic_block_forward.6} parent=0 // pred_check_branch
    %325 = sbr.rel (0) target = $region29
  $region28: #{basic_block_forward.6} parent=0 // pred_region
    _
  $region29: #{basic_block_forward.6} parent=0 // pred_fallthru
    _
  // Predicated region
  $region30: #{basic_block_forward.6} parent=0 // pred_check
    _
  $region31: #{basic_block_forward.6} parent=0 // pred_check_branch
    %327 = sbr.rel (0) target = $region33
  $region32: #{basic_block_forward.6} parent=0 // pred_region
    _
  $region33: #{basic_block_forward.6} parent=0 // pred_fallthru
    _

// kernel: basic_block_forward.4
$region0: #{basic_block_forward.4}
  #allocation0 [shape = 'u32[]', space=smem, size = 0x4, offset = 0x4, fixed_abs, tag = 'smem constant byte address 0x4 - core index']
  #allocation1 [shape = 'u32[144,128]{1,0:T(1,128)}', space=vmem, size = 0x12000, scoped, tag = 'internal scratch']
  %s0 = inlined_call_operand.vmem [shape: f32[2,36,9,128], index: 0, kind: input, shape index: {}]
  %s1 = inlined_call_operand.vmem [shape: bf16[9,128,128], index: 1, kind: input, shape index: {}]
  %s2 = inlined_call_operand.vmem [shape: f32[2,64,128], index: 2, kind: output, shape index: {0}]
  %s3 = inlined_call_operand.vmem [shape: f32[2,1,128], index: 3, kind: output, shape index: {1}]
  %s4 = inlined_call_operand.vmem [shape: f32[2,1,128], index: 4, kind: output, shape index: {2}]
  %5 = xla_tuple %s2, %s3, %s4
  %s6 = sld [smem:[#allocation0]]
  $region57: #{basic_block_forward.4} parent=0
    _
  %s8 = ssub.s32 1, %s6
  %s9 = scalar_select 0, %s8, %s6
  loop: start=0, step=1, limit=4
  $region2: #{basic_block_forward.4} parent=0 // loop_pre_header
    _
  $region3: #{basic_block_forward.4} parent=0 // loop_header
    %s11 = sphi 0, %s15
    %p12 = scmp.ge.s32.totalorder %s11, 4
    %s21 = sphi 0, %s23
    %s24 = sphi 0, %s21
    %s25 = sphi 0, %s24
    %s41 = sphi 0, %s25
    %s45 = sphi 0, %s45
    %s47 = sphi 0, %s45
    %s48 = sphi 0, %s47
    %s62 = sphi 0, %s48
    %s68 = sphi 0, %s70
    %s71 = sphi 0, %s68
    %s72 = sphi 0, %s71
    %s88 = sphi 0, %s72
    %s94 = sphi 0, %s96
    %s97 = sphi 0, %s94
    %s98 = sphi 0, %s97
    %s114 = sphi 0, %s98
    %s120 = sphi 0, %s122
    %s123 = sphi 0, %s120
    %s124 = sphi 0, %s123
    %s140 = sphi 0, %s124
  $region4: #{basic_block_forward.4} parent=0 // loop_header_branch
    %14 = sbr.rel (%p12) target = $region8
  $region5: #{basic_block_forward.4} parent=0 // loop_body
    %s16 = ssub.s32 %s11, 1
    %s17 = ssub.s32 %s11, 2
    %s18 = sadd.s32 %s11, 1
    %s19 = ssub.s32 %s11, %s18
    %p20 = scmp.eq.s32.totalorder %s19, 0
    %s22 = sadd.s32 %s21, 1
    %s23 = scalar_select %p20, %s21, %s22
    %p26 = pneg %p20
    %p27 = scmp.eq.s32.totalorder %s11, 1
    %p28 = por %p26, %p27
    %p29 = scmp.ne.s32.totalorder %s21, %s24
    %p30 = scmp.eq.s32.totalorder %s11, 0
    %p31 = por %p29, %p30
    %p32 = scmp.ne.s32.totalorder %s21, %s24
    %p33 = scmp.eq.s32.totalorder %s16, 1
    %p34 = por %p32, %p33
    %p35 = scmp.ne.s32.totalorder %s24, %s25
    %p36 = scmp.eq.s32.totalorder %s16, 0
    %p37 = por %p35, %p36
    %p38 = scmp.ne.s32.totalorder %s24, %s25
    %p39 = scmp.eq.s32.totalorder %s17, 1
    %p40 = por %p38, %p39
    %p42 = scmp.ne.s32.totalorder %s25, %s41
    %p43 = scmp.eq.s32.totalorder %s17, 0
    %p44 = por %p42, %p43
    %s46 = sadd.s32 %s45, 1
    %p49 = scmp.eq.s32.totalorder %s11, 1
    %p50 = scmp.ne.s32.totalorder %s45, %s47
    %p51 = scmp.eq.s32.totalorder %s11, 0
    %p52 = por %p50, %p51
    %p53 = scmp.ne.s32.totalorder %s45, %s47
    %p54 = scmp.eq.s32.totalorder %s16, 1
    %p55 = por %p53, %p54
    %p56 = scmp.ne.s32.totalorder %s47, %s48
    %p57 = scmp.eq.s32.totalorder %s16, 0
    %p58 = por %p56, %p57
    %p59 = scmp.ne.s32.totalorder %s47, %s48
    %p60 = scmp.eq.s32.totalorder %s17, 1
    %p61 = por %p59, %p60
    %p63 = scmp.ne.s32.totalorder %s48, %s62
    %p64 = scmp.eq.s32.totalorder %s17, 0
    %p65 = por %p63, %p64
    %s66 = ssub.s32 %s11, %s18
    %p67 = scmp.eq.s32.totalorder %s66, 0
    %s69 = sadd.s32 %s68, 1
    %s70 = scalar_select %p67, %s68, %s69
    %p73 = pneg %p67
    %p74 = scmp.eq.s32.totalorder %s11, 1
    %p75 = por %p73, %p74
    %p76 = scmp.ne.s32.totalorder %s68, %s71
    %p77 = scmp.eq.s32.totalorder %s11, 0
    %p78 = por %p76, %p77
    %p79 = scmp.ne.s32.totalorder %s68, %s71
    %p80 = scmp.eq.s32.totalorder %s16, 1
    %p81 = por %p79, %p80
    %p82 = scmp.ne.s32.totalorder %s71, %s72
    %p83 = scmp.eq.s32.totalorder %s16, 0
    %p84 = por %p82, %p83
    %p85 = scmp.ne.s32.totalorder %s71, %s72
    %p86 = scmp.eq.s32.totalorder %s17, 1
    %p87 = por %p85, %p86
    %p89 = scmp.ne.s32.totalorder %s72, %s88
    %p90 = scmp.eq.s32.totalorder %s17, 0
    %p91 = por %p89, %p90
    %s92 = ssub.s32 %s11, %s18
    %p93 = scmp.eq.s32.totalorder %s92, 0
    %s95 = sadd.s32 %s94, 1
    %s96 = scalar_select %p93, %s94, %s95
    %p99 = pneg %p93
    %p100 = scmp.eq.s32.totalorder %s11, 1
    %p101 = por %p99, %p100
    %p102 = scmp.ne.s32.totalorder %s94, %s97
    %p103 = scmp.eq.s32.totalorder %s11, 0
    %p104 = por %p102, %p103
    %p105 = scmp.ne.s32.totalorder %s94, %s97
    %p106 = scmp.eq.s32.totalorder %s16, 1
    %p107 = por %p105, %p106
    %p108 = scmp.ne.s32.totalorder %s97, %s98
    %p109 = scmp.eq.s32.totalorder %s16, 0
    %p110 = por %p108, %p109
    %p111 = scmp.ne.s32.totalorder %s97, %s98
    %p112 = scmp.eq.s32.totalorder %s17, 1
    %p113 = por %p111, %p112
    %p115 = scmp.ne.s32.totalorder %s98, %s114
    %p116 = scmp.eq.s32.totalorder %s17, 0
    %p117 = por %p115, %p116
    %s118 = ssub.s32 %s11, %s18
    %p119 = scmp.eq.s32.totalorder %s118, 0
    %s121 = sadd.s32 %s120, 1
    %s122 = scalar_select %p119, %s120, %s121
    %p125 = pneg %p119
    %p126 = scmp.eq.s32.totalorder %s11, 1
    %p127 = por %p125, %p126
    %p128 = scmp.ne.s32.totalorder %s120, %s123
    %p129 = scmp.eq.s32.totalorder %s11, 0
    %p130 = por %p128, %p129
    %p131 = scmp.ne.s32.totalorder %s120, %s123
    %p132 = scmp.eq.s32.totalorder %s16, 1
    %p133 = por %p131, %p132
    %p134 = scmp.ne.s32.totalorder %s123, %s124
    %p135 = scmp.eq.s32.totalorder %s16, 0
    %p136 = por %p134, %p135
    %p137 = scmp.ne.s32.totalorder %s123, %s124
    %p138 = scmp.eq.s32.totalorder %s17, 1
    %p139 = por %p137, %p138
    %p141 = scmp.ne.s32.totalorder %s124, %s140
    %p142 = scmp.eq.s32.totalorder %s17, 0
    %p143 = por %p141, %p142
    %p144 = scmp.le.s32.totalorder 1, %s11
    %p145 = scmp.lt.s32.totalorder %s11, 3
    %p146 = pnand %p144, %p145
    %p147 = pneg %p146
    // Predicated region
    $region9: #{basic_block_forward.4} parent=5 // pred_check
      _
    $region10: #{basic_block_forward.4} parent=5 // pred_check_branch
      %149 = sbr.rel (%p146) target = $region12
    $region11: #{basic_block_forward.4} parent=5 // pred_region
      %s150 = ssub.s32 %s11, 1
      // Predicated region
      $region13: #{basic_block_forward.4} parent=11 // pred_check
        %p151 = pneg %p58
      $region14: #{basic_block_forward.4} parent=11 // pred_check_branch
        %153 = sbr.rel (%p151) target = $region16
      $region15: #{basic_block_forward.4} parent=11 // pred_region
        _
      $region16: #{basic_block_forward.4} parent=11 // pred_fallthru
        _
    $region12: #{basic_block_forward.4} parent=5 // pred_fallthru
      _
    %p154 = scmp.lt.s32.totalorder %s11, 2
    // Predicated region
    $region17: #{basic_block_forward.4} parent=5 // pred_check
      %p155 = pneg %p154
    $region18: #{basic_block_forward.4} parent=5 // pred_check_branch
      %157 = sbr.rel (%p155) target = $region20
    $region19: #{basic_block_forward.4} parent=5 // pred_region
      // Predicated region
      $region21: #{basic_block_forward.4} parent=19 // pred_check
        %p158 = pneg %p31
      $region22: #{basic_block_forward.4} parent=19 // pred_check_branch
        %160 = sbr.rel (%p158) target = $region24
      $region23: #{basic_block_forward.4} parent=19 // pred_region
        %p161 = scmp.lt.s32.totalorder %s11, 1
        %s162 = scalar_select %p161, %s11, 1
        %s163 = smul.addr %s162, 72
        %s164 = smul.addr %s163, 8
        %s165 = scalar_lea.vmem %s0, %s164
      $region24: #{basic_block_forward.4} parent=19 // pred_fallthru
        _
    $region20: #{basic_block_forward.4} parent=5 // pred_fallthru
      _
    %p166 = scmp.le.s32.totalorder 1, %s11
    %p167 = scmp.lt.s32.totalorder %s11, 3
    %p168 = pnand %p166, %p167
    %p169 = pneg %p168
    // Predicated region
    $region25: #{basic_block_forward.4} parent=5 // pred_check
      _
    $region26: #{basic_block_forward.4} parent=5 // pred_check_branch
      %171 = sbr.rel (%p168) target = $region28
    $region27: #{basic_block_forward.4} parent=5 // pred_region
      %s172 = ssub.s32 %s11, 1
      %p173 = scmp.lt.s32.totalorder %s16, 1
      %s174 = scalar_select %p173, %s16, 1
      %s175 = smul.addr %s174, 72
      %s176 = smul.addr %s175, 8
      %s177 = scalar_lea.vmem %s0, %s176
      %p178 = pneg %p37
      %p179 = pneg %p34
      %p180 = pneg %p58
      %p181 = pneg %p55
      %p182 = pneg %p84
      %p183 = pneg %p81
      %p184 = scmp.lt.s32.totalorder %s16, 1
      %s185 = scalar_select %p184, %s16, 1
      %s186 = smul.addr %s185, 8
      %s187 = smul.addr %s186, 8
      %s188 = scalar_lea.vmem %s2, %s187
      %p189 = pneg %p110
      %p190 = pneg %p107
      %p191 = scmp.lt.s32.totalorder %s16, 1
      %s192 = scalar_select %p191, %s16, 1
      %s193 = scalar_lea.vmem %s3, %s192
      %p194 = pneg %p136
      %p195 = pneg %p133
      %p196 = scmp.lt.s32.totalorder %s16, 1
      %s197 = scalar_select %p196, %s16, 1
      %s198 = scalar_lea.vmem %s4, %s197
      %p199 = scmp.lt.s32.totalorder %s16, 1
      %s200 = scalar_select %p199, %s16, 1
      %s201 = smul.addr %s200, 72
      %s202 = smul.addr %s201, 8
      %s203 = scalar_lea.vmem %s0, %s202
      %p204 = scmp.lt.s32.totalorder %s16, 1
      %s205 = scalar_select %p204, %s16, 1
      %s206 = smul.addr %s205, 8
      %s207 = smul.addr %s206, 8
      %s208 = scalar_lea.vmem %s2, %s207
      %p209 = scmp.lt.s32.totalorder %s16, 1
      %s210 = scalar_select %p209, %s16, 1
      %s211 = scalar_lea.vmem %s3, %s210
      %p212 = scmp.lt.s32.totalorder %s16, 1
      %s213 = scalar_select %p212, %s16, 1
      %s214 = scalar_lea.vmem %s4, %s213
      %v216 = vld [vmem:[%s203] sm:$0xff]
      %v217 = vld [vmem:[%s203 + $0x10] sm:$0xff]
      %v218 = vld [vmem:[%s203 + $0x20] sm:$0xff]
      %v219 = vld [vmem:[%s203 + $0x30] sm:$0xff]
      %v220 = vld [vmem:[%s203 + $0x40] sm:$0xff]
      %v221 = vld [vmem:[%s203 + $0x50] sm:$0xff]
      %v222 = vld [vmem:[%s203 + $0x60] sm:$0xff]
      %v223 = vld [vmem:[%s203 + $0x70] sm:$0xff]
      %v224 = vpack.c.bf16 %v217, %v216
      %v225 = vpack.c.bf16 %v219, %v218
      %v226 = vpack.c.bf16 %v221, %v220
      %v227 = vpack.c.bf16 %v223, %v222
      %v228 = vld [vmem:[%s1] sm:$0xf]
      %v229 = vld [vmem:[%s1 + $0x4] sm:$0xf]
      %v230 = vld [vmem:[%s1 + $0x8] sm:$0xf]
      %v231 = vld [vmem:[%s1 + $0xc] sm:$0xf]
      %v232 = vld [vmem:[%s1 + $0x10] sm:$0xf]
      %v233 = vld [vmem:[%s1 + $0x14] sm:$0xf]
      %v234 = vld [vmem:[%s1 + $0x18] sm:$0xf]
      %v235 = vld [vmem:[%s1 + $0x1c] sm:$0xf]
      %v236 = vld [vmem:[%s1 + $0x20] sm:$0xf]
      %v237 = vld [vmem:[%s1 + $0x24] sm:$0xf]
      %v238 = vld [vmem:[%s1 + $0x28] sm:$0xf]
      %v239 = vld [vmem:[%s1 + $0x2c] sm:$0xf]
      %v240 = vld [vmem:[%s1 + $0x30] sm:$0xf]
      %v241 = vld [vmem:[%s1 + $0x34] sm:$0xf]
      %v242 = vld [vmem:[%s1 + $0x38] sm:$0xf]
      %v243 = vld [vmem:[%s1 + $0x3c] sm:$0xf]
      %v260 = vunpack.c.l.b16 %v228
      %v261 = vunpack.c.l.b16 %v229
      %v262 = vunpack.c.l.b16 %v230
      %v263 = vunpack.c.l.b16 %v231
      %v264 = vunpack.c.l.b16 %v232
      %v265 = vunpack.c.l.b16 %v233
      %v266 = vunpack.c.l.b16 %v234
      %v267 = vunpack.c.l.b16 %v235
      %v268 = vunpack.c.l.b16 %v236
      %v269 = vunpack.c.l.b16 %v237
      %v270 = vunpack.c.l.b16 %v238
      %v271 = vunpack.c.l.b16 %v239
      %v272 = vunpack.c.l.b16 %v240
      %v273 = vunpack.c.l.b16 %v241
      %v274 = vunpack.c.l.b16 %v242
      %v275 = vunpack.c.l.b16 %v243
      %v276 = vpack.c.b16 %v261, %v260
      %v277 = vpack.c.b16 %v263, %v262
      %v278 = vpack.c.b16 %v265, %v264
      %v279 = vpack.c.b16 %v267, %v266
      %v280 = vpack.c.b16 %v269, %v268
      %v281 = vpack.c.b16 %v271, %v270
      %v282 = vpack.c.b16 %v273, %v272
      %v283 = vpack.c.b16 %v275, %v274
      %292 = vmatprep.subr.bf16.mxu0 0
      %293 = vmatpush1.bf16.msra.mxu0 %v283
      %294 = vmatprep.subr.bf16.mxu0 0
      %295 = vmatpush1.bf16.msra.mxu0 %v282
      %296 = vmatprep.subr.bf16.mxu0 0
      %297 = vmatpush1.bf16.msra.mxu0 %v281
      %298 = vmatprep.subr.bf16.mxu0 0
      %299 = vmatpush1.bf16.msra.mxu0 %v280
      %300 = vmatprep.subr.bf16.mxu0 0
      %301 = vmatpush1.bf16.msra.mxu0 %v279
      %302 = vmatprep.subr.bf16.mxu0 0
      %303 = vmatpush1.bf16.msra.mxu0 %v278
      %304 = vmatprep.subr.bf16.mxu0 0
      %305 = vmatpush1.bf16.msra.mxu0 %v277
      %306 = vmatprep.subr.bf16.mxu0 0
      %307 = vmatpush1.bf16.msra.mxu0 %v276
      %308 = vmatprep.subr.bf16.mxu0 0
      %309 = vmatpush2.bf16.msra.mxu0 0
      %310 = vmatprep.subr.bf16.mxu0 0
      %311 = vmatpush2.bf16.msra.mxu0 0
      %312 = vmatprep.subr.bf16.mxu0 0
      %313 = vmatpush2.bf16.msra.mxu0 0
      %314 = vmatprep.subr.bf16.mxu0 0
      %315 = vmatpush2.bf16.msra.mxu0 0
      %316 = vmatprep.subr.bf16.mxu0 0
      %317 = vmatpush2.bf16.msra.mxu0 0
      %318 = vmatprep.subr.bf16.mxu0 0
      %319 = vmatpush2.bf16.msra.mxu0 0
      %320 = vmatprep.subr.bf16.mxu0 0
      %321 = vmatpush2.bf16.msra.mxu0 0
      %322 = vmatprep.subr.bf16.mxu0 0
      %323 = vmatpush2.bf16.msra.mxu0 0
      %324 = vmatprep.mubr.bf16.mxu0 0
      %325 = vmatmul.mubr.bf16.gmra.mxu0 %v224
      %v326 = vpop.f32.mrf.mxu0
      %v327 = vadd.f32 0.0, %v326
      %v328 = vpop.f32.mrf.mxu0
      %v329 = vpop.f32.mrf.mxu0
      %v330 = vadd.f32 0.0, %v329
      %v331 = vpop.f32.mrf.mxu0
      %332 = vmatprep.mubr.bf16.mxu0 0
      %333 = vmatmul.mubr.bf16.gmra.mxu0 %v225
      %v334 = vpop.f32.mrf.mxu0
      %v335 = vadd.f32 0.0, %v334
      %v336 = vpop.f32.mrf.mxu0
      %v337 = vpop.f32.mrf.mxu0
      %v338 = vadd.f32 0.0, %v337
      %v339 = vpop.f32.mrf.mxu0
      %340 = vmatprep.mubr.bf16.mxu0 0
      %341 = vmatmul.mubr.bf16.gmra.mxu0 %v226
      %v342 = vpop.f32.mrf.mxu0
      %v343 = vadd.f32 0.0, %v342
      %v344 = vpop.f32.mrf.mxu0
      %v345 = vpop.f32.mrf.mxu0
      %v346 = vadd.f32 0.0, %v345
      %v347 = vpop.f32.mrf.mxu0
      %348 = vmatprep.mubr.bf16.mxu0 0
      %349 = vmatmul.mubr.bf16.gmra.mxu0 %v227
      %v350 = vpop.f32.mrf.mxu0
      %v351 = vadd.f32 0.0, %v350
      %v352 = vpop.f32.mrf.mxu0
      %v353 = vpop.f32.mrf.mxu0
      %v354 = vadd.f32 0.0, %v353
      %v355 = vpop.f32.mrf.mxu0
      %356 = vdwg.mxu0
      %357 = vst [vmem:[%s208] sm:$0xff] %v327
      %358 = vst [vmem:[%s208 + $0x8] sm:$0xff] %v330
      %359 = vst [vmem:[%s208 + $0x10] sm:$0xff] %v335
      %360 = vst [vmem:[%s208 + $0x18] sm:$0xff] %v338
      %361 = vst [vmem:[%s208 + $0x20] sm:$0xff] %v343
      %362 = vst [vmem:[%s208 + $0x28] sm:$0xff] %v346
      %363 = vst [vmem:[%s208 + $0x30] sm:$0xff] %v351
      %364 = vst [vmem:[%s208 + $0x38] sm:$0xff] %v354
      %s365 = scalar_lea.vmem %s203, 144
      %v366 = vld [vmem:[%s365] sm:$0xff]
      %v367 = vld [vmem:[%s365 + $0x10] sm:$0xff]
      %v368 = vld [vmem:[%s365 + $0x20] sm:$0xff]
      %v369 = vld [vmem:[%s365 + $0x30] sm:$0xff]
      %v370 = vld [vmem:[%s365 + $0x40] sm:$0xff]
      %v371 = vld [vmem:[%s365 + $0x50] sm:$0xff]
      %v372 = vld [vmem:[%s365 + $0x60] sm:$0xff]
      %v373 = vld [vmem:[%s365 + $0x70] sm:$0xff]
      %v374 = vpack.c.bf16 %v367, %v366
      %v375 = vpack.c.bf16 %v369, %v368
      %v376 = vpack.c.bf16 %v371, %v370
      %v377 = vpack.c.bf16 %v373, %v372
      %s378 = scalar_lea.vmem %s1, 64
      %v379 = vld [vmem:[%s378] sm:$0xf]
      %v380 = vld [vmem:[%s378 + $0x4] sm:$0xf]
      %v381 = vld [vmem:[%s378 + $0x8] sm:$0xf]
      %v382 = vld [vmem:[%s378 + $0xc] sm:$0xf]
      %v383 = vld [vmem:[%s378 + $0x10] sm:$0xf]
      %v384 = vld [vmem:[%s378 + $0x14] sm:$0xf]
      %v385 = vld [vmem:[%s378 + $0x18] sm:$0xf]
      %v386 = vld [vmem:[%s378 + $0x1c] sm:$0xf]
      %v387 = vld [vmem:[%s378 + $0x20] sm:$0xf]
      %v388 = vld [vmem:[%s378 + $0x24] sm:$0xf]
      %v389 = vld [vmem:[%s378 + $0x28] sm:$0xf]
      %v390 = vld [vmem:[%s378 + $0x2c] sm:$0xf]
      %v391 = vld [vmem:[%s378 + $0x30] sm:$0xf]
      %v392 = vld [vmem:[%s378 + $0x34] sm:$0xf]
      %v393 = vld [vmem:[%s378 + $0x38] sm:$0xf]
      %v394 = vld [vmem:[%s378 + $0x3c] sm:$0xf]
      %v411 = vunpack.c.l.b16 %v379
      %v412 = vunpack.c.l.b16 %v380
      %v413 = vunpack.c.l.b16 %v381
      %v414 = vunpack.c.l.b16 %v382
      %v415 = vunpack.c.l.b16 %v383
      %v416 = vunpack.c.l.b16 %v384
      %v417 = vunpack.c.l.b16 %v385
      %v418 = vunpack.c.l.b16 %v386
      %v419 = vunpack.c.l.b16 %v387
      %v420 = vunpack.c.l.b16 %v388
      %v421 = vunpack.c.l.b16 %v389
      %v422 = vunpack.c.l.b16 %v390
      %v423 = vunpack.c.l.b16 %v391
      %v424 = vunpack.c.l.b16 %v392
      %v425 = vunpack.c.l.b16 %v393
      %v426 = vunpack.c.l.b16 %v394
      %v427 = vpack.c.b16 %v412, %v411
      %v428 = vpack.c.b16 %v414, %v413
      %v429 = vpack.c.b16 %v416, %v415
      %v430 = vpack.c.b16 %v418, %v417
      %v431 = vpack.c.b16 %v420, %v419
      %v432 = vpack.c.b16 %v422, %v421
      %v433 = vpack.c.b16 %v424, %v423
      %v434 = vpack.c.b16 %v426, %v425
      %443 = vmatprep.subr.bf16.mxu0 0
      %444 = vmatpush1.bf16.msra.mxu0 %v434
      %445 = vmatprep.subr.bf16.mxu0 0
      %446 = vmatpush1.bf16.msra.mxu0 %v433
      %447 = vmatprep.subr.bf16.mxu0 0
      %448 = vmatpush1.bf16.msra.mxu0 %v432
      %449 = vmatprep.subr.bf16.mxu0 0
      %450 = vmatpush1.bf16.msra.mxu0 %v431
      %451 = vmatprep.subr.bf16.mxu0 0
      %452 = vmatpush1.bf16.msra.mxu0 %v430
      %453 = vmatprep.subr.bf16.mxu0 0
      %454 = vmatpush1.bf16.msra.mxu0 %v429
      %455 = vmatprep.subr.bf16.mxu0 0
      %456 = vmatpush1.bf16.msra.mxu0 %v428
      %457 = vmatprep.subr.bf16.mxu0 0
      %458 = vmatpush1.bf16.msra.mxu0 %v427
      %459 = vmatprep.subr.bf16.mxu0 0
      %460 = vmatpush2.bf16.msra.mxu0 0
      %461 = vmatprep.subr.bf16.mxu0 0
      %462 = vmatpush2.bf16.msra.mxu0 0
      %463 = vmatprep.subr.bf16.mxu0 0
      %464 = vmatpush2.bf16.msra.mxu0 0
      %465 = vmatprep.subr.bf16.mxu0 0
      %466 = vmatpush2.bf16.msra.mxu0 0
      %467 = vmatprep.subr.bf16.mxu0 0
      %468 = vmatpush2.bf16.msra.mxu0 0
      %469 = vmatprep.subr.bf16.mxu0 0
      %470 = vmatpush2.bf16.msra.mxu0 0
      %471 = vmatprep.subr.bf16.mxu0 0
      %472 = vmatpush2.bf16.msra.mxu0 0
      %473 = vmatprep.subr.bf16.mxu0 0
      %474 = vmatpush2.bf16.msra.mxu0 0
      %475 = vmatprep.mubr.bf16.mxu0 0
      %476 = vmatmul.mubr.bf16.gmra.mxu0 %v374
      %v477 = vpop.f32.mrf.mxu0
      %v478 = vadd.f32 0.0, %v477
      %v479 = vpop.f32.mrf.mxu0
      %v480 = vpop.f32.mrf.mxu0
      %v481 = vadd.f32 0.0, %v480
      %v482 = vpop.f32.mrf.mxu0
      %483 = vmatprep.mubr.bf16.mxu0 0
      %484 = vmatmul.mubr.bf16.gmra.mxu0 %v375
      %v485 = vpop.f32.mrf.mxu0
      %v486 = vadd.f32 0.0, %v485
      %v487 = vpop.f32.mrf.mxu0
      %v488 = vpop.f32.mrf.mxu0
      %v489 = vadd.f32 0.0, %v488
      %v490 = vpop.f32.mrf.mxu0
      %491 = vmatprep.mubr.bf16.mxu0 0
      %492 = vmatmul.mubr.bf16.gmra.mxu0 %v376
      %v493 = vpop.f32.mrf.mxu0
      %v494 = vadd.f32 0.0, %v493
      %v495 = vpop.f32.mrf.mxu0
      %v496 = vpop.f32.mrf.mxu0
      %v497 = vadd.f32 0.0, %v496
      %v498 = vpop.f32.mrf.mxu0
      %499 = vmatprep.mubr.bf16.mxu0 0
      %500 = vmatmul.mubr.bf16.gmra.mxu0 %v377
      %v501 = vpop.f32.mrf.mxu0
      %v502 = vadd.f32 0.0, %v501
      %v503 = vpop.f32.mrf.mxu0
      %v504 = vpop.f32.mrf.mxu0
      %v505 = vadd.f32 0.0, %v504
      %v506 = vpop.f32.mrf.mxu0
      %507 = vdwg.mxu0
      %v508 = vld [vmem:[%s208] sm:$0xff]
      %v509 = vld [vmem:[%s208 + $0x8] sm:$0xff]
      %v510 = vld [vmem:[%s208 + $0x10] sm:$0xff]
      %v511 = vld [vmem:[%s208 + $0x18] sm:$0xff]
      %v512 = vld [vmem:[%s208 + $0x20] sm:$0xff]
      %v513 = vld [vmem:[%s208 + $0x28] sm:$0xff]
      %v514 = vld [vmem:[%s208 + $0x30] sm:$0xff]
      %v515 = vld [vmem:[%s208 + $0x38] sm:$0xff]
      %v516 = vadd.f32 %v508, %v478
      %v517 = vadd.f32 %v509, %v481
      %v518 = vadd.f32 %v510, %v486
      %v519 = vadd.f32 %v511, %v489
      %v520 = vadd.f32 %v512, %v494
      %v521 = vadd.f32 %v513, %v497
      %v522 = vadd.f32 %v514, %v502
      %v523 = vadd.f32 %v515, %v505
      %524 = vst [vmem:[%s208] sm:$0xff] %v516
      %525 = vst [vmem:[%s208 + $0x8] sm:$0xff] %v517
      %526 = vst [vmem:[%s208 + $0x10] sm:$0xff] %v518
      %527 = vst [vmem:[%s208 + $0x18] sm:$0xff] %v519
      %528 = vst [vmem:[%s208 + $0x20] sm:$0xff] %v520
      %529 = vst [vmem:[%s208 + $0x28] sm:$0xff] %v521
      %530 = vst [vmem:[%s208 + $0x30] sm:$0xff] %v522
      %531 = vst [vmem:[%s208 + $0x38] sm:$0xff] %v523
      %v532 = vld [vmem:[%s203 + $0x1] sm:$0xff]
      %v533 = vld [vmem:[%s203 + $0x11] sm:$0xff]
      %v534 = vld [vmem:[%s203 + $0x21] sm:$0xff]
      %v535 = vld [vmem:[%s203 + $0x31] sm:$0xff]
      %v536 = vld [vmem:[%s203 + $0x41] sm:$0xff]
      %v537 = vld [vmem:[%s203 + $0x51] sm:$0xff]
      %v538 = vld [vmem:[%s203 + $0x61] sm:$0xff]
      %v539 = vld [vmem:[%s203 + $0x71] sm:$0xff]
      %v540 = vpack.c.bf16 %v533, %v532
      %v541 = vpack.c.bf16 %v535, %v534
      %v542 = vpack.c.bf16 %v537, %v536
      %v543 = vpack.c.bf16 %v539, %v538
      %s544 = scalar_lea.vmem %s1, 128
      %v545 = vld [vmem:[%s544] sm:$0xf]
      %v546 = vld [vmem:[%s544 + $0x4] sm:$0xf]
      %v547 = vld [vmem:[%s544 + $0x8] sm:$0xf]
      %v548 = vld [vmem:[%s544 + $0xc] sm:$0xf]
      %v549 = vld [vmem:[%s544 + $0x10] sm:$0xf]
      %v550 = vld [vmem:[%s544 + $0x14] sm:$0xf]
      %v551 = vld [vmem:[%s544 + $0x18] sm:$0xf]
      %v552 = vld [vmem:[%s544 + $0x1c] sm:$0xf]
      %v553 = vld [vmem:[%s544 + $0x20] sm:$0xf]
      %v554 = vld [vmem:[%s544 + $0x24] sm:$0xf]
      %v555 = vld [vmem:[%s544 + $0x28] sm:$0xf]
      %v556 = vld [vmem:[%s544 + $0x2c] sm:$0xf]
      %v557 = vld [vmem:[%s544 + $0x30] sm:$0xf]
      %v558 = vld [vmem:[%s544 + $0x34] sm:$0xf]
      %v559 = vld [vmem:[%s544 + $0x38] sm:$0xf]
      %v560 = vld [vmem:[%s544 + $0x3c] sm:$0xf]
      %v577 = vunpack.c.l.b16 %v545
      %v578 = vunpack.c.l.b16 %v546
      %v579 = vunpack.c.l.b16 %v547
      %v580 = vunpack.c.l.b16 %v548
      %v581 = vunpack.c.l.b16 %v549
      %v582 = vunpack.c.l.b16 %v550
      %v583 = vunpack.c.l.b16 %v551
      %v584 = vunpack.c.l.b16 %v552
      %v585 = vunpack.c.l.b16 %v553
      %v586 = vunpack.c.l.b16 %v554
      %v587 = vunpack.c.l.b16 %v555
      %v588 = vunpack.c.l.b16 %v556
      %v589 = vunpack.c.l.b16 %v557
      %v590 = vunpack.c.l.b16 %v558
      %v591 = vunpack.c.l.b16 %v559
      %v592 = vunpack.c.l.b16 %v560
      %v593 = vpack.c.b16 %v578, %v577
      %v594 = vpack.c.b16 %v580, %v579
      %v595 = vpack.c.b16 %v582, %v581
      %v596 = vpack.c.b16 %v584, %v583
      %v597 = vpack.c.b16 %v586, %v585
      %v598 = vpack.c.b16 %v588, %v587
      %v599 = vpack.c.b16 %v590, %v589
      %v600 = vpack.c.b16 %v592, %v591
      %609 = vmatprep.subr.bf16.mxu0 0
      %610 = vmatpush1.bf16.msra.mxu0 %v600
      %611 = vmatprep.subr.bf16.mxu0 0
      %612 = vmatpush1.bf16.msra.mxu0 %v599
      %613 = vmatprep.subr.bf16.mxu0 0
      %614 = vmatpush1.bf16.msra.mxu0 %v598
      %615 = vmatprep.subr.bf16.mxu0 0
      %616 = vmatpush1.bf16.msra.mxu0 %v597
      %617 = vmatprep.subr.bf16.mxu0 0
      %618 = vmatpush1.bf16.msra.mxu0 %v596
      %619 = vmatprep.subr.bf16.mxu0 0
      %620 = vmatpush1.bf16.msra.mxu0 %v595
      %621 = vmatprep.subr.bf16.mxu0 0
      %622 = vmatpush1.bf16.msra.mxu0 %v594
      %623 = vmatprep.subr.bf16.mxu0 0
      %624 = vmatpush1.bf16.msra.mxu0 %v593
      %625 = vmatprep.subr.bf16.mxu0 0
      %626 = vmatpush2.bf16.msra.mxu0 0
      %627 = vmatprep.subr.bf16.mxu0 0
      %628 = vmatpush2.bf16.msra.mxu0 0
      %629 = vmatprep.subr.bf16.mxu0 0
      %630 = vmatpush2.bf16.msra.mxu0 0
      %631 = vmatprep.subr.bf16.mxu0 0
      %632 = vmatpush2.bf16.msra.mxu0 0
      %633 = vmatprep.subr.bf16.mxu0 0
      %634 = vmatpush2.bf16.msra.mxu0 0
      %635 = vmatprep.subr.bf16.mxu0 0
      %636 = vmatpush2.bf16.msra.mxu0 0
      %637 = vmatprep.subr.bf16.mxu0 0
      %638 = vmatpush2.bf16.msra.mxu0 0
      %639 = vmatprep.subr.bf16.mxu0 0
      %640 = vmatpush2.bf16.msra.mxu0 0
      %641 = vmatprep.mubr.bf16.mxu0 0
      %642 = vmatmul.mubr.bf16.gmra.mxu0 %v540
      %v643 = vpop.f32.mrf.mxu0
      %v644 = vadd.f32 0.0, %v643
      %v645 = vpop.f32.mrf.mxu0
      %v646 = vpop.f32.mrf.mxu0
      %v647 = vadd.f32 0.0, %v646
      %v648 = vpop.f32.mrf.mxu0
      %649 = vmatprep.mubr.bf16.mxu0 0
      %650 = vmatmul.mubr.bf16.gmra.mxu0 %v541
      %v651 = vpop.f32.mrf.mxu0
      %v652 = vadd.f32 0.0, %v651
      %v653 = vpop.f32.mrf.mxu0
      %v654 = vpop.f32.mrf.mxu0
      %v655 = vadd.f32 0.0, %v654
      %v656 = vpop.f32.mrf.mxu0
      %657 = vmatprep.mubr.bf16.mxu0 0
      %658 = vmatmul.mubr.bf16.gmra.mxu0 %v542
      %v659 = vpop.f32.mrf.mxu0
      %v660 = vadd.f32 0.0, %v659
      %v661 = vpop.f32.mrf.mxu0
      %v662 = vpop.f32.mrf.mxu0
      %v663 = vadd.f32 0.0, %v662
      %v664 = vpop.f32.mrf.mxu0
      %665 = vmatprep.mubr.bf16.mxu0 0
      %666 = vmatmul.mubr.bf16.gmra.mxu0 %v543
      %v667 = vpop.f32.mrf.mxu0
      %v668 = vadd.f32 0.0, %v667
      %v669 = vpop.f32.mrf.mxu0
      %v670 = vpop.f32.mrf.mxu0
      %v671 = vadd.f32 0.0, %v670
      %v672 = vpop.f32.mrf.mxu0
      %673 = vdwg.mxu0
      %v674 = vld [vmem:[%s208] sm:$0xff]
      %v675 = vld [vmem:[%s208 + $0x8] sm:$0xff]
      %v676 = vld [vmem:[%s208 + $0x10] sm:$0xff]
      %v677 = vld [vmem:[%s208 + $0x18] sm:$0xff]
      %v678 = vld [vmem:[%s208 + $0x20] sm:$0xff]
      %v679 = vld [vmem:[%s208 + $0x28] sm:$0xff]
      %v680 = vld [vmem:[%s208 + $0x30] sm:$0xff]
      %v681 = vld [vmem:[%s208 + $0x38] sm:$0xff]
      %v682 = vadd.f32 %v674, %v644
      %v683 = vadd.f32 %v675, %v647
      %v684 = vadd.f32 %v676, %v652
      %v685 = vadd.f32 %v677, %v655
      %v686 = vadd.f32 %v678, %v660
      %v687 = vadd.f32 %v679, %v663
      %v688 = vadd.f32 %v680, %v668
      %v689 = vadd.f32 %v681, %v671
      %690 = vst [vmem:[%s208] sm:$0xff] %v682
      %691 = vst [vmem:[%s208 + $0x8] sm:$0xff] %v683
      %692 = vst [vmem:[%s208 + $0x10] sm:$0xff] %v684
      %693 = vst [vmem:[%s208 + $0x18] sm:$0xff] %v685
      %694 = vst [vmem:[%s208 + $0x20] sm:$0xff] %v686
      %695 = vst [vmem:[%s208 + $0x28] sm:$0xff] %v687
      %696 = vst [vmem:[%s208 + $0x30] sm:$0xff] %v688
      %697 = vst [vmem:[%s208 + $0x38] sm:$0xff] %v689
      %s698 = scalar_lea.vmem %s203, 288
      %v699 = vld [vmem:[%s698] sm:$0xff]
      %v700 = vld [vmem:[%s698 + $0x10] sm:$0xff]
      %v701 = vld [vmem:[%s698 + $0x20] sm:$0xff]
      %v702 = vld [vmem:[%s698 + $0x30] sm:$0xff]
      %v703 = vld [vmem:[%s698 + $0x40] sm:$0xff]
      %v704 = vld [vmem:[%s698 + $0x50] sm:$0xff]
      %v705 = vld [vmem:[%s698 + $0x60] sm:$0xff]
      %v706 = vld [vmem:[%s698 + $0x70] sm:$0xff]
      %v707 = vpack.c.bf16 %v700, %v699
      %v708 = vpack.c.bf16 %v702, %v701
      %v709 = vpack.c.bf16 %v704, %v703
      %v710 = vpack.c.bf16 %v706, %v705
      %s711 = scalar_lea.vmem %s1, 192
      %v712 = vld [vmem:[%s711] sm:$0xf]
      %v713 = vld [vmem:[%s711 + $0x4] sm:$0xf]
      %v714 = vld [vmem:[%s711 + $0x8] sm:$0xf]
      %v715 = vld [vmem:[%s711 + $0xc] sm:$0xf]
      %v716 = vld [vmem:[%s711 + $0x10] sm:$0xf]
      %v717 = vld [vmem:[%s711 + $0x14] sm:$0xf]
      %v718 = vld [vmem:[%s711 + $0x18] sm:$0xf]
      %v719 = vld [vmem:[%s711 + $0x1c] sm:$0xf]
      %v720 = vld [vmem:[%s711 + $0x20] sm:$0xf]
      %v721 = vld [vmem:[%s711 + $0x24] sm:$0xf]
      %v722 = vld [vmem:[%s711 + $0x28] sm:$0xf]
      %v723 = vld [vmem:[%s711 + $0x2c] sm:$0xf]
      %v724 = vld [vmem:[%s711 + $0x30] sm:$0xf]
      %v725 = vld [vmem:[%s711 + $0x34] sm:$0xf]
      %v726 = vld [vmem:[%s711 + $0x38] sm:$0xf]
      %v727 = vld [vmem:[%s711 + $0x3c] sm:$0xf]
      %v744 = vunpack.c.l.b16 %v712
      %v745 = vunpack.c.l.b16 %v713
      %v746 = vunpack.c.l.b16 %v714
      %v747 = vunpack.c.l.b16 %v715
      %v748 = vunpack.c.l.b16 %v716
      %v749 = vunpack.c.l.b16 %v717
      %v750 = vunpack.c.l.b16 %v718
      %v751 = vunpack.c.l.b16 %v719
      %v752 = vunpack.c.l.b16 %v720
      %v753 = vunpack.c.l.b16 %v721
      %v754 = vunpack.c.l.b16 %v722
      %v755 = vunpack.c.l.b16 %v723
      %v756 = vunpack.c.l.b16 %v724
      %v757 = vunpack.c.l.b16 %v725
      %v758 = vunpack.c.l.b16 %v726
      %v759 = vunpack.c.l.b16 %v727
      %v760 = vpack.c.b16 %v745, %v744
      %v761 = vpack.c.b16 %v747, %v746
      %v762 = vpack.c.b16 %v749, %v748
      %v763 = vpack.c.b16 %v751, %v750
      %v764 = vpack.c.b16 %v753, %v752
      %v765 = vpack.c.b16 %v755, %v754
      %v766 = vpack.c.b16 %v757, %v756
      %v767 = vpack.c.b16 %v759, %v758
      %776 = vmatprep.subr.bf16.mxu0 0
      %777 = vmatpush1.bf16.msra.mxu0 %v767
      %778 = vmatprep.subr.bf16.mxu0 0
      %779 = vmatpush1.bf16.msra.mxu0 %v766
      %780 = vmatprep.subr.bf16.mxu0 0
      %781 = vmatpush1.bf16.msra.mxu0 %v765
      %782 = vmatprep.subr.bf16.mxu0 0
      %783 = vmatpush1.bf16.msra.mxu0 %v764
      %784 = vmatprep.subr.bf16.mxu0 0
      %785 = vmatpush1.bf16.msra.mxu0 %v763
      %786 = vmatprep.subr.bf16.mxu0 0
      %787 = vmatpush1.bf16.msra.mxu0 %v762
      %788 = vmatprep.subr.bf16.mxu0 0
      %789 = vmatpush1.bf16.msra.mxu0 %v761
      %790 = vmatprep.subr.bf16.mxu0 0
      %791 = vmatpush1.bf16.msra.mxu0 %v760
      %792 = vmatprep.subr.bf16.mxu0 0
      %793 = vmatpush2.bf16.msra.mxu0 0
      %794 = vmatprep.subr.bf16.mxu0 0
      %795 = vmatpush2.bf16.msra.mxu0 0
      %796 = vmatprep.subr.bf16.mxu0 0
      %797 = vmatpush2.bf16.msra.mxu0 0
      %798 = vmatprep.subr.bf16.mxu0 0
      %799 = vmatpush2.bf16.msra.mxu0 0
      %800 = vmatprep.subr.bf16.mxu0 0
      %801 = vmatpush2.bf16.msra.mxu0 0
      %802 = vmatprep.subr.bf16.mxu0 0
      %803 = vmatpush2.bf16.msra.mxu0 0
      %804 = vmatprep.subr.bf16.mxu0 0
      %805 = vmatpush2.bf16.msra.mxu0 0
      %806 = vmatprep.subr.bf16.mxu0 0
      %807 = vmatpush2.bf16.msra.mxu0 0
      %808 = vmatprep.mubr.bf16.mxu0 0
      %809 = vmatmul.mubr.bf16.gmra.mxu0 %v707
      %v810 = vpop.f32.mrf.mxu0
      %v811 = vadd.f32 0.0, %v810
      %v812 = vpop.f32.mrf.mxu0
      %v813 = vpop.f32.mrf.mxu0
      %v814 = vadd.f32 0.0, %v813
      %v815 = vpop.f32.mrf.mxu0
      %816 = vmatprep.mubr.bf16.mxu0 0
      %817 = vmatmul.mubr.bf16.gmra.mxu0 %v708
      %v818 = vpop.f32.mrf.mxu0
      %v819 = vadd.f32 0.0, %v818
      %v820 = vpop.f32.mrf.mxu0
      %v821 = vpop.f32.mrf.mxu0
      %v822 = vadd.f32 0.0, %v821
      %v823 = vpop.f32.mrf.mxu0
      %824 = vmatprep.mubr.bf16.mxu0 0
      %825 = vmatmul.mubr.bf16.gmra.mxu0 %v709
      %v826 = vpop.f32.mrf.mxu0
      %v827 = vadd.f32 0.0, %v826
      %v828 = vpop.f32.mrf.mxu0
      %v829 = vpop.f32.mrf.mxu0
      %v830 = vadd.f32 0.0, %v829
      %v831 = vpop.f32.mrf.mxu0
      %832 = vmatprep.mubr.bf16.mxu0 0
      %833 = vmatmul.mubr.bf16.gmra.mxu0 %v710
      %v834 = vpop.f32.mrf.mxu0
      %v835 = vadd.f32 0.0, %v834
      %v836 = vpop.f32.mrf.mxu0
      %v837 = vpop.f32.mrf.mxu0
      %v838 = vadd.f32 0.0, %v837
      %v839 = vpop.f32.mrf.mxu0
      %840 = vdwg.mxu0
      %v841 = vld [vmem:[%s208] sm:$0xff]
      %v842 = vld [vmem:[%s208 + $0x8] sm:$0xff]
      %v843 = vld [vmem:[%s208 + $0x10] sm:$0xff]
      %v844 = vld [vmem:[%s208 + $0x18] sm:$0xff]
      %v845 = vld [vmem:[%s208 + $0x20] sm:$0xff]
      %v846 = vld [vmem:[%s208 + $0x28] sm:$0xff]
      %v847 = vld [vmem:[%s208 + $0x30] sm:$0xff]
      %v848 = vld [vmem:[%s208 + $0x38] sm:$0xff]
      %v849 = vadd.f32 %v841, %v811
      %v850 = vadd.f32 %v842, %v814
      %v851 = vadd.f32 %v843, %v819
      %v852 = vadd.f32 %v844, %v822
      %v853 = vadd.f32 %v845, %v827
      %v854 = vadd.f32 %v846, %v830
      %v855 = vadd.f32 %v847, %v835
      %v856 = vadd.f32 %v848, %v838
      %857 = vst [vmem:[%s208] sm:$0xff] %v849
      %858 = vst [vmem:[%s208 + $0x8] sm:$0xff] %v850
      %859 = vst [vmem:[%s208 + $0x10] sm:$0xff] %v851
      %860 = vst [vmem:[%s208 + $0x18] sm:$0xff] %v852
      %861 = vst [vmem:[%s208 + $0x20] sm:$0xff] %v853
      %862 = vst [vmem:[%s208 + $0x28] sm:$0xff] %v854
      %863 = vst [vmem:[%s208 + $0x30] sm:$0xff] %v855
      %864 = vst [vmem:[%s208 + $0x38] sm:$0xff] %v856
      %s865 = scalar_lea.vmem %s203, 432
      %v866 = vld [vmem:[%s865] sm:$0xff]
      %v867 = vld [vmem:[%s865 + $0x10] sm:$0xff]
      %v868 = vld [vmem:[%s865 + $0x20] sm:$0xff]
      %v869 = vld [vmem:[%s865 + $0x30] sm:$0xff]
      %v870 = vld [vmem:[%s865 + $0x40] sm:$0xff]
      %v871 = vld [vmem:[%s865 + $0x50] sm:$0xff]
      %v872 = vld [vmem:[%s865 + $0x60] sm:$0xff]
      %v873 = vld [vmem:[%s865 + $0x70] sm:$0xff]
      %v874 = vpack.c.bf16 %v867, %v866
      %v875 = vpack.c.bf16 %v869, %v868
      %v876 = vpack.c.bf16 %v871, %v870
      %v877 = vpack.c.bf16 %v873, %v872
      %s878 = scalar_lea.vmem %s1, 256
      %v879 = vld [vmem:[%s878] sm:$0xf]
      %v880 = vld [vmem:[%s878 + $0x4] sm:$0xf]
      %v881 = vld [vmem:[%s878 + $0x8] sm:$0xf]
      %v882 = vld [vmem:[%s878 + $0xc] sm:$0xf]
      %v883 = vld [vmem:[%s878 + $0x10] sm:$0xf]
      %v884 = vld [vmem:[%s878 + $0x14] sm:$0xf]
      %v885 = vld [vmem:[%s878 + $0x18] sm:$0xf]
      %v886 = vld [vmem:[%s878 + $0x1c] sm:$0xf]
      %v887 = vld [vmem:[%s878 + $0x20] sm:$0xf]
      %v888 = vld [vmem:[%s878 + $0x24] sm:$0xf]
      %v889 = vld [vmem:[%s878 + $0x28] sm:$0xf]
      %v890 = vld [vmem:[%s878 + $0x2c] sm:$0xf]
      %v891 = vld [vmem:[%s878 + $0x30] sm:$0xf]
      %v892 = vld [vmem:[%s878 + $0x34] sm:$0xf]
      %v893 = vld [vmem:[%s878 + $0x38] sm:$0xf]
      %v894 = vld [vmem:[%s878 + $0x3c] sm:$0xf]
      %v911 = vunpack.c.l.b16 %v879
      %v912 = vunpack.c.l.b16 %v880
      %v913 = vunpack.c.l.b16 %v881
      %v914 = vunpack.c.l.b16 %v882
      %v915 = vunpack.c.l.b16 %v883
      %v916 = vunpack.c.l.b16 %v884
      %v917 = vunpack.c.l.b16 %v885
      %v918 = vunpack.c.l.b16 %v886
      %v919 = vunpack.c.l.b16 %v887
      %v920 = vunpack.c.l.b16 %v888
      %v921 = vunpack.c.l.b16 %v889
      %v922 = vunpack.c.l.b16 %v890
      %v923 = vunpack.c.l.b16 %v891
      %v924 = vunpack.c.l.b16 %v892
      %v925 = vunpack.c.l.b16 %v893
      %v926 = vunpack.c.l.b16 %v894
      %v927 = vpack.c.b16 %v912, %v911
      %v928 = vpack.c.b16 %v914, %v913
      %v929 = vpack.c.b16 %v916, %v915
      %v930 = vpack.c.b16 %v918, %v917
      %v931 = vpack.c.b16 %v920, %v919
      %v932 = vpack.c.b16 %v922, %v921
      %v933 = vpack.c.b16 %v924, %v923
      %v934 = vpack.c.b16 %v926, %v925
      %943 = vmatprep.subr.bf16.mxu0 0
      %944 = vmatpush1.bf16.msra.mxu0 %v934
      %945 = vmatprep.subr.bf16.mxu0 0
      %946 = vmatpush1.bf16.msra.mxu0 %v933
      %947 = vmatprep.subr.bf16.mxu0 0
      %948 = vmatpush1.bf16.msra.mxu0 %v932
      %949 = vmatprep.subr.bf16.mxu0 0
      %950 = vmatpush1.bf16.msra.mxu0 %v931
      %951 = vmatprep.subr.bf16.mxu0 0
      %952 = vmatpush1.bf16.msra.mxu0 %v930
      %953 = vmatprep.subr.bf16.mxu0 0
      %954 = vmatpush1.bf16.msra.mxu0 %v929
      %955 = vmatprep.subr.bf16.mxu0 0
      %956 = vmatpush1.bf16.msra.mxu0 %v928
      %957 = vmatprep.subr.bf16.mxu0 0
      %958 = vmatpush1.bf16.msra.mxu0 %v927
      %959 = vmatprep.subr.bf16.mxu0 0
      %960 = vmatpush2.bf16.msra.mxu0 0
      %961 = vmatprep.subr.bf16.mxu0 0
      %962 = vmatpush2.bf16.msra.mxu0 0
      %963 = vmatprep.subr.bf16.mxu0 0
      %964 = vmatpush2.bf16.msra.mxu0 0
      %965 = vmatprep.subr.bf16.mxu0 0
      %966 = vmatpush2.bf16.msra.mxu0 0
      %967 = vmatprep.subr.bf16.mxu0 0
      %968 = vmatpush2.bf16.msra.mxu0 0
      %969 = vmatprep.subr.bf16.mxu0 0
      %970 = vmatpush2.bf16.msra.mxu0 0
      %971 = vmatprep.subr.bf16.mxu0 0
      %972 = vmatpush2.bf16.msra.mxu0 0
      %973 = vmatprep.subr.bf16.mxu0 0
      %974 = vmatpush2.bf16.msra.mxu0 0
      %975 = vmatprep.mubr.bf16.mxu0 0
      %976 = vmatmul.mubr.bf16.gmra.mxu0 %v874
      %v977 = vpop.f32.mrf.mxu0
      %v978 = vadd.f32 0.0, %v977
      %v979 = vpop.f32.mrf.mxu0
      %v980 = vpop.f32.mrf.mxu0
      %v981 = vadd.f32 0.0, %v980
      %v982 = vpop.f32.mrf.mxu0
      %983 = vmatprep.mubr.bf16.mxu0 0
      %984 = vmatmul.mubr.bf16.gmra.mxu0 %v875
      %v985 = vpop.f32.mrf.mxu0
      %v986 = vadd.f32 0.0, %v985
      %v987 = vpop.f32.mrf.mxu0
      %v988 = vpop.f32.mrf.mxu0
      %v989 = vadd.f32 0.0, %v988
      %v990 = vpop.f32.mrf.mxu0
      %991 = vmatprep.mubr.bf16.mxu0 0
      %992 = vmatmul.mubr.bf16.gmra.mxu0 %v876
      %v993 = vpop.f32.mrf.mxu0
      %v994 = vadd.f32 0.0, %v993
      %v995 = vpop.f32.mrf.mxu0
      %v996 = vpop.f32.mrf.mxu0
      %v997 = vadd.f32 0.0, %v996
      %v998 = vpop.f32.mrf.mxu0
      %999 = vmatprep.mubr.bf16.mxu0 0
      %1000 = vmatmul.mubr.bf16.gmra.mxu0 %v877
      %v1001 = vpop.f32.mrf.mxu0
      %v1002 = vadd.f32 0.0, %v1001
      %v1003 = vpop.f32.mrf.mxu0
      %v1004 = vpop.f32.mrf.mxu0
      %v1005 = vadd.f32 0.0, %v1004
      %v1006 = vpop.f32.mrf.mxu0
      %1007 = vdwg.mxu0
      %v1008 = vld [vmem:[%s208] sm:$0xff]
      %v1009 = vld [vmem:[%s208 + $0x8] sm:$0xff]
      %v1010 = vld [vmem:[%s208 + $0x10] sm:$0xff]
      %v1011 = vld [vmem:[%s208 + $0x18] sm:$0xff]
      %v1012 = vld [vmem:[%s208 + $0x20] sm:$0xff]
      %v1013 = vld [vmem:[%s208 + $0x28] sm:$0xff]
      %v1014 = vld [vmem:[%s208 + $0x30] sm:$0xff]
      %v1015 = vld [vmem:[%s208 + $0x38] sm:$0xff]
      %v1016 = vadd.f32 %v1008, %v978
      %v1017 = vadd.f32 %v1009, %v981
      %v1018 = vadd.f32 %v1010, %v986
      %v1019 = vadd.f32 %v1011, %v989
      %v1020 = vadd.f32 %v1012, %v994
      %v1021 = vadd.f32 %v1013, %v997
      %v1022 = vadd.f32 %v1014, %v1002
      %v1023 = vadd.f32 %v1015, %v1005
      %1024 = vst [vmem:[%s208] sm:$0xff] %v1016
      %1025 = vst [vmem:[%s208 + $0x8] sm:$0xff] %v1017
      %1026 = vst [vmem:[%s208 + $0x10] sm:$0xff] %v1018
      %1027 = vst [vmem:[%s208 + $0x18] sm:$0xff] %v1019
      %1028 = vst [vmem:[%s208 + $0x20] sm:$0xff] %v1020
      %1029 = vst [vmem:[%s208 + $0x28] sm:$0xff] %v1021
      %1030 = vst [vmem:[%s208 + $0x30] sm:$0xff] %v1022
      %1031 = vst [vmem:[%s208 + $0x38] sm:$0xff] %v1023
      %v1032 = vld [vmem:[%s698 + $0x1] sm:$0xff]
      %v1033 = vld [vmem:[%s698 + $0x11] sm:$0xff]
      %v1034 = vld [vmem:[%s698 + $0x21] sm:$0xff]
      %v1035 = vld [vmem:[%s698 + $0x31] sm:$0xff]
      %v1036 = vld [vmem:[%s698 + $0x41] sm:$0xff]
      %v1037 = vld [vmem:[%s698 + $0x51] sm:$0xff]
      %v1038 = vld [vmem:[%s698 + $0x61] sm:$0xff]
      %v1039 = vld [vmem:[%s698 + $0x71] sm:$0xff]
      %v1040 = vpack.c.bf16 %v1033, %v1032
      %v1041 = vpack.c.bf16 %v1035, %v1034
      %v1042 = vpack.c.bf16 %v1037, %v1036
      %v1043 = vpack.c.bf16 %v1039, %v1038
      %s1044 = scalar_lea.vmem %s1, 320
      %v1045 = vld [vmem:[%s1044] sm:$0xf]
      %v1046 = vld [vmem:[%s1044 + $0x4] sm:$0xf]
      %v1047 = vld [vmem:[%s1044 + $0x8] sm:$0xf]
      %v1048 = vld [vmem:[%s1044 + $0xc] sm:$0xf]
      %v1049 = vld [vmem:[%s1044 + $0x10] sm:$0xf]
      %v1050 = vld [vmem:[%s1044 + $0x14] sm:$0xf]
      %v1051 = vld [vmem:[%s1044 + $0x18] sm:$0xf]
      %v1052 = vld [vmem:[%s1044 + $0x1c] sm:$0xf]
      %v1053 = vld [vmem:[%s1044 + $0x20] sm:$0xf]
      %v1054 = vld [vmem:[%s1044 + $0x24] sm:$0xf]
      %v1055 = vld [vmem:[%s1044 + $0x28] sm:$0xf]
      %v1056 = vld [vmem:[%s1044 + $0x2c] sm:$0xf]
      %v1057 = vld [vmem:[%s1044 + $0x30] sm:$0xf]
      %v1058 = vld [vmem:[%s1044 + $0x34] sm:$0xf]
      %v1059 = vld [vmem:[%s1044 + $0x38] sm:$0xf]
      %v1060 = vld [vmem:[%s1044 + $0x3c] sm:$0xf]
      %v1077 = vunpack.c.l.b16 %v1045
      %v1078 = vunpack.c.l.b16 %v1046
      %v1079 = vunpack.c.l.b16 %v1047
      %v1080 = vunpack.c.l.b16 %v1048
      %v1081 = vunpack.c.l.b16 %v1049
      %v1082 = vunpack.c.l.b16 %v1050
      %v1083 = vunpack.c.l.b16 %v1051
      %v1084 = vunpack.c.l.b16 %v1052
      %v1085 = vunpack.c.l.b16 %v1053
      %v1086 = vunpack.c.l.b16 %v1054
      %v1087 = vunpack.c.l.b16 %v1055
      %v1088 = vunpack.c.l.b16 %v1056
      %v1089 = vunpack.c.l.b16 %v1057
      %v1090 = vunpack.c.l.b16 %v1058
      %v1091 = vunpack.c.l.b16 %v1059
      %v1092 = vunpack.c.l.b16 %v1060
      %v1093 = vpack.c.b16 %v1078, %v1077
      %v1094 = vpack.c.b16 %v1080, %v1079
      %v1095 = vpack.c.b16 %v1082, %v1081
      %v1096 = vpack.c.b16 %v1084, %v1083
      %v1097 = vpack.c.b16 %v1086, %v1085
      %v1098 = vpack.c.b16 %v1088, %v1087
      %v1099 = vpack.c.b16 %v1090, %v1089
      %v1100 = vpack.c.b16 %v1092, %v1091
      %1109 = vmatprep.subr.bf16.mxu0 0
      %1110 = vmatpush1.bf16.msra.mxu0 %v1100
      %1111 = vmatprep.subr.bf16.mxu0 0
      %1112 = vmatpush1.bf16.msra.mxu0 %v1099
      %1113 = vmatprep.subr.bf16.mxu0 0
      %1114 = vmatpush1.bf16.msra.mxu0 %v1098
      %1115 = vmatprep.subr.bf16.mxu0 0
      %1116 = vmatpush1.bf16.msra.mxu0 %v1097
      %1117 = vmatprep.subr.bf16.mxu0 0
      %1118 = vmatpush1.bf16.msra.mxu0 %v1096
      %1119 = vmatprep.subr.bf16.mxu0 0
      %1120 = vmatpush1.bf16.msra.mxu0 %v1095
      %1121 = vmatprep.subr.bf16.mxu0 0
      %1122 = vmatpush1.bf16.msra.mxu0 %v1094
      %1123 = vmatprep.subr.bf16.mxu0 0
      %1124 = vmatpush1.bf16.msra.mxu0 %v1093
      %1125 = vmatprep.subr.bf16.mxu0 0
      %1126 = vmatpush2.bf16.msra.mxu0 0
      %1127 = vmatprep.subr.bf16.mxu0 0
      %1128 = vmatpush2.bf16.msra.mxu0 0
      %1129 = vmatprep.subr.bf16.mxu0 0
      %1130 = vmatpush2.bf16.msra.mxu0 0
      %1131 = vmatprep.subr.bf16.mxu0 0
      %1132 = vmatpush2.bf16.msra.mxu0 0
      %1133 = vmatprep.subr.bf16.mxu0 0
      %1134 = vmatpush2.bf16.msra.mxu0 0
      %1135 = vmatprep.subr.bf16.mxu0 0
      %1136 = vmatpush2.bf16.msra.mxu0 0
      %1137 = vmatprep.subr.bf16.mxu0 0
      %1138 = vmatpush2.bf16.msra.mxu0 0
      %1139 = vmatprep.subr.bf16.mxu0 0
      %1140 = vmatpush2.bf16.msra.mxu0 0
      %1141 = vmatprep.mubr.bf16.mxu0 0
      %1142 = vmatmul.mubr.bf16.gmra.mxu0 %v1040
      %v1143 = vpop.f32.mrf.mxu0
      %v1144 = vadd.f32 0.0, %v1143
      %v1145 = vpop.f32.mrf.mxu0
      %v1146 = vpop.f32.mrf.mxu0
      %v1147 = vadd.f32 0.0, %v1146
      %v1148 = vpop.f32.mrf.mxu0
      %1149 = vmatprep.mubr.bf16.mxu0 0
      %1150 = vmatmul.mubr.bf16.gmra.mxu0 %v1041
      %v1151 = vpop.f32.mrf.mxu0
      %v1152 = vadd.f32 0.0, %v1151
      %v1153 = vpop.f32.mrf.mxu0
      %v1154 = vpop.f32.mrf.mxu0
      %v1155 = vadd.f32 0.0, %v1154
      %v1156 = vpop.f32.mrf.mxu0
      %1157 = vmatprep.mubr.bf16.mxu0 0
      %1158 = vmatmul.mubr.bf16.gmra.mxu0 %v1042
      %v1159 = vpop.f32.mrf.mxu0
      %v1160 = vadd.f32 0.0, %v1159
      %v1161 = vpop.f32.mrf.mxu0
      %v1162 = vpop.f32.mrf.mxu0
      %v1163 = vadd.f32 0.0, %v1162
      %v1164 = vpop.f32.mrf.mxu0
      %1165 = vmatprep.mubr.bf16.mxu0 0
      %1166 = vmatmul.mubr.bf16.gmra.mxu0 %v1043
      %v1167 = vpop.f32.mrf.mxu0
      %v1168 = vadd.f32 0.0, %v1167
      %v1169 = vpop.f32.mrf.mxu0
      %v1170 = vpop.f32.mrf.mxu0
      %v1171 = vadd.f32 0.0, %v1170
      %v1172 = vpop.f32.mrf.mxu0
      %1173 = vdwg.mxu0
      %v1174 = vld [vmem:[%s208] sm:$0xff]
      %v1175 = vld [vmem:[%s208 + $0x8] sm:$0xff]
      %v1176 = vld [vmem:[%s208 + $0x10] sm:$0xff]
      %v1177 = vld [vmem:[%s208 + $0x18] sm:$0xff]
      %v1178 = vld [vmem:[%s208 + $0x20] sm:$0xff]
      %v1179 = vld [vmem:[%s208 + $0x28] sm:$0xff]
      %v1180 = vld [vmem:[%s208 + $0x30] sm:$0xff]
      %v1181 = vld [vmem:[%s208 + $0x38] sm:$0xff]
      %v1182 = vadd.f32 %v1174, %v1144
      %v1183 = vadd.f32 %v1175, %v1147
      %v1184 = vadd.f32 %v1176, %v1152
      %v1185 = vadd.f32 %v1177, %v1155
      %v1186 = vadd.f32 %v1178, %v1160
      %v1187 = vadd.f32 %v1179, %v1163
      %v1188 = vadd.f32 %v1180, %v1168
      %v1189 = vadd.f32 %v1181, %v1171
      %1190 = vst [vmem:[%s208] sm:$0xff] %v1182
      %1191 = vst [vmem:[%s208 + $0x8] sm:$0xff] %v1183
      %1192 = vst [vmem:[%s208 + $0x10] sm:$0xff] %v1184
      %1193 = vst [vmem:[%s208 + $0x18] sm:$0xff] %v1185
      %1194 = vst [vmem:[%s208 + $0x20] sm:$0xff] %v1186
      %1195 = vst [vmem:[%s208 + $0x28] sm:$0xff] %v1187
      %1196 = vst [vmem:[%s208 + $0x30] sm:$0xff] %v1188
      %1197 = vst [vmem:[%s208 + $0x38] sm:$0xff] %v1189
      %s1198 = scalar_lea.vmem %s203, 16
      %v1199 = vld [vmem:[%s1198] sm:$0xff]
      %v1200 = vld [vmem:[%s1198 + $0x10] sm:$0xff]
      %v1201 = vld [vmem:[%s1198 + $0x20] sm:$0xff]
      %v1202 = vld [vmem:[%s1198 + $0x30] sm:$0xff]
      %v1203 = vld [vmem:[%s1198 + $0x40] sm:$0xff]
      %v1204 = vld [vmem:[%s1198 + $0x50] sm:$0xff]
      %v1205 = vld [vmem:[%s1198 + $0x60] sm:$0xff]
      %v1206 = vld [vmem:[%s1198 + $0x70] sm:$0xff]
      %v1207 = vpack.c.bf16 %v1200, %v1199
      %v1208 = vpack.c.bf16 %v1202, %v1201
      %v1209 = vpack.c.bf16 %v1204, %v1203
      %v1210 = vpack.c.bf16 %v1206, %v1205
      %s1211 = scalar_lea.vmem %s1, 384
      %v1212 = vld [vmem:[%s1211] sm:$0xf]
      %v1213 = vld [vmem:[%s1211 + $0x4] sm:$0xf]
      %v1214 = vld [vmem:[%s1211 + $0x8] sm:$0xf]
      %v1215 = vld [vmem:[%s1211 + $0xc] sm:$0xf]
      %v1216 = vld [vmem:[%s1211 + $0x10] sm:$0xf]
      %v1217 = vld [vmem:[%s1211 + $0x14] sm:$0xf]
      %v1218 = vld [vmem:[%s1211 + $0x18] sm:$0xf]
      %v1219 = vld [vmem:[%s1211 + $0x1c] sm:$0xf]
      %v1220 = vld [vmem:[%s1211 + $0x20] sm:$0xf]
      %v1221 = vld [vmem:[%s1211 + $0x24] sm:$0xf]
      %v1222 = vld [vmem:[%s1211 + $0x28] sm:$0xf]
      %v1223 = vld [vmem:[%s1211 + $0x2c] sm:$0xf]
      %v1224 = vld [vmem:[%s1211 + $0x30] sm:$0xf]
      %v1225 = vld [vmem:[%s1211 + $0x34] sm:$0xf]
      %v1226 = vld [vmem:[%s1211 + $0x38] sm:$0xf]
      %v1227 = vld [vmem:[%s1211 + $0x3c] sm:$0xf]
      %v1244 = vunpack.c.l.b16 %v1212
      %v1245 = vunpack.c.l.b16 %v1213
      %v1246 = vunpack.c.l.b16 %v1214
      %v1247 = vunpack.c.l.b16 %v1215
      %v1248 = vunpack.c.l.b16 %v1216
      %v1249 = vunpack.c.l.b16 %v1217
      %v1250 = vunpack.c.l.b16 %v1218
      %v1251 = vunpack.c.l.b16 %v1219
      %v1252 = vunpack.c.l.b16 %v1220
      %v1253 = vunpack.c.l.b16 %v1221
      %v1254 = vunpack.c.l.b16 %v1222
      %v1255 = vunpack.c.l.b16 %v1223
      %v1256 = vunpack.c.l.b16 %v1224
      %v1257 = vunpack.c.l.b16 %v1225
      %v1258 = vunpack.c.l.b16 %v1226
      %v1259 = vunpack.c.l.b16 %v1227
      %v1260 = vpack.c.b16 %v1245, %v1244
      %v1261 = vpack.c.b16 %v1247, %v1246
      %v1262 = vpack.c.b16 %v1249, %v1248
      %v1263 = vpack.c.b16 %v1251, %v1250
      %v1264 = vpack.c.b16 %v1253, %v1252
      %v1265 = vpack.c.b16 %v1255, %v1254
      %v1266 = vpack.c.b16 %v1257, %v1256
      %v1267 = vpack.c.b16 %v1259, %v1258
      %1276 = vmatprep.subr.bf16.mxu0 0
      %1277 = vmatpush1.bf16.msra.mxu0 %v1267
      %1278 = vmatprep.subr.bf16.mxu0 0
      %1279 = vmatpush1.bf16.msra.mxu0 %v1266
      %1280 = vmatprep.subr.bf16.mxu0 0
      %1281 = vmatpush1.bf16.msra.mxu0 %v1265
      %1282 = vmatprep.subr.bf16.mxu0 0
      %1283 = vmatpush1.bf16.msra.mxu0 %v1264
      %1284 = vmatprep.subr.bf16.mxu0 0
      %1285 = vmatpush1.bf16.msra.mxu0 %v1263
      %1286 = vmatprep.subr.bf16.mxu0 0
      %1287 = vmatpush1.bf16.msra.mxu0 %v1262
      %1288 = vmatprep.subr.bf16.mxu0 0
      %1289 = vmatpush1.bf16.msra.mxu0 %v1261
      %1290 = vmatprep.subr.bf16.mxu0 0
      %1291 = vmatpush1.bf16.msra.mxu0 %v1260
      %1292 = vmatprep.subr.bf16.mxu0 0
      %1293 = vmatpush2.bf16.msra.mxu0 0
      %1294 = vmatprep.subr.bf16.mxu0 0
      %1295 = vmatpush2.bf16.msra.mxu0 0
      %1296 = vmatprep.subr.bf16.mxu0 0
      %1297 = vmatpush2.bf16.msra.mxu0 0
      %1298 = vmatprep.subr.bf16.mxu0 0
      %1299 = vmatpush2.bf16.msra.mxu0 0
      %1300 = vmatprep.subr.bf16.mxu0 0
      %1301 = vmatpush2.bf16.msra.mxu0 0
      %1302 = vmatprep.subr.bf16.mxu0 0
      %1303 = vmatpush2.bf16.msra.mxu0 0
      %1304 = vmatprep.subr.bf16.mxu0 0
      %1305 = vmatpush2.bf16.msra.mxu0 0
      %1306 = vmatprep.subr.bf16.mxu0 0
      %1307 = vmatpush2.bf16.msra.mxu0 0
      %1308 = vmatprep.mubr.bf16.mxu0 0
      %1309 = vmatmul.mubr.bf16.gmra.mxu0 %v1207
      %v1310 = vpop.f32.mrf.mxu0
      %v1311 = vadd.f32 0.0, %v1310
      %v1312 = vpop.f32.mrf.mxu0
      %v1313 = vpop.f32.mrf.mxu0
      %v1314 = vadd.f32 0.0, %v1313
      %v1315 = vpop.f32.mrf.mxu0
      %1316 = vmatprep.mubr.bf16.mxu0 0
      %1317 = vmatmul.mubr.bf16.gmra.mxu0 %v1208
      %v1318 = vpop.f32.mrf.mxu0
      %v1319 = vadd.f32 0.0, %v1318
      %v1320 = vpop.f32.mrf.mxu0
      %v1321 = vpop.f32.mrf.mxu0
      %v1322 = vadd.f32 0.0, %v1321
      %v1323 = vpop.f32.mrf.mxu0
      %1324 = vmatprep.mubr.bf16.mxu0 0
      %1325 = vmatmul.mubr.bf16.gmra.mxu0 %v1209
      %v1326 = vpop.f32.mrf.mxu0
      %v1327 = vadd.f32 0.0, %v1326
      %v1328 = vpop.f32.mrf.mxu0
      %v1329 = vpop.f32.mrf.mxu0
      %v1330 = vadd.f32 0.0, %v1329
      %v1331 = vpop.f32.mrf.mxu0
      %1332 = vmatprep.mubr.bf16.mxu0 0
      %1333 = vmatmul.mubr.bf16.gmra.mxu0 %v1210
      %v1334 = vpop.f32.mrf.mxu0
      %v1335 = vadd.f32 0.0, %v1334
      %v1336 = vpop.f32.mrf.mxu0
      %v1337 = vpop.f32.mrf.mxu0
      %v1338 = vadd.f32 0.0, %v1337
      %v1339 = vpop.f32.mrf.mxu0
      %1340 = vdwg.mxu0
      %v1341 = vld [vmem:[%s208] sm:$0xff]
      %v1342 = vld [vmem:[%s208 + $0x8] sm:$0xff]
      %v1343 = vld [vmem:[%s208 + $0x10] sm:$0xff]
      %v1344 = vld [vmem:[%s208 + $0x18] sm:$0xff]
      %v1345 = vld [vmem:[%s208 + $0x20] sm:$0xff]
      %v1346 = vld [vmem:[%s208 + $0x28] sm:$0xff]
      %v1347 = vld [vmem:[%s208 + $0x30] sm:$0xff]
      %v1348 = vld [vmem:[%s208 + $0x38] sm:$0xff]
      %v1349 = vadd.f32 %v1341, %v1311
      %v1350 = vadd.f32 %v1342, %v1314
      %v1351 = vadd.f32 %v1343, %v1319
      %v1352 = vadd.f32 %v1344, %v1322
      %v1353 = vadd.f32 %v1345, %v1327
      %v1354 = vadd.f32 %v1346, %v1330
      %v1355 = vadd.f32 %v1347, %v1335
      %v1356 = vadd.f32 %v1348, %v1338
      %1357 = vst [vmem:[%s208] sm:$0xff] %v1349
      %1358 = vst [vmem:[%s208 + $0x8] sm:$0xff] %v1350
      %1359 = vst [vmem:[%s208 + $0x10] sm:$0xff] %v1351
      %1360 = vst [vmem:[%s208 + $0x18] sm:$0xff] %v1352
      %1361 = vst [vmem:[%s208 + $0x20] sm:$0xff] %v1353
      %1362 = vst [vmem:[%s208 + $0x28] sm:$0xff] %v1354
      %1363 = vst [vmem:[%s208 + $0x30] sm:$0xff] %v1355
      %1364 = vst [vmem:[%s208 + $0x38] sm:$0xff] %v1356
      %s1365 = scalar_lea.vmem %s203, 160
      %v1366 = vld [vmem:[%s1365] sm:$0xff]
      %v1367 = vld [vmem:[%s1365 + $0x10] sm:$0xff]
      %v1368 = vld [vmem:[%s1365 + $0x20] sm:$0xff]
      %v1369 = vld [vmem:[%s1365 + $0x30] sm:$0xff]
      %v1370 = vld [vmem:[%s1365 + $0x40] sm:$0xff]
      %v1371 = vld [vmem:[%s1365 + $0x50] sm:$0xff]
      %v1372 = vld [vmem:[%s1365 + $0x60] sm:$0xff]
      %v1373 = vld [vmem:[%s1365 + $0x70] sm:$0xff]
      %v1374 = vpack.c.bf16 %v1367, %v1366
      %v1375 = vpack.c.bf16 %v1369, %v1368
      %v1376 = vpack.c.bf16 %v1371, %v1370
      %v1377 = vpack.c.bf16 %v1373, %v1372
      %s1378 = scalar_lea.vmem %s1, 448
      %v1379 = vld [vmem:[%s1378] sm:$0xf]
      %v1380 = vld [vmem:[%s1378 + $0x4] sm:$0xf]
      %v1381 = vld [vmem:[%s1378 + $0x8] sm:$0xf]
      %v1382 = vld [vmem:[%s1378 + $0xc] sm:$0xf]
      %v1383 = vld [vmem:[%s1378 + $0x10] sm:$0xf]
      %v1384 = vld [vmem:[%s1378 + $0x14] sm:$0xf]
      %v1385 = vld [vmem:[%s1378 + $0x18] sm:$0xf]
      %v1386 = vld [vmem:[%s1378 + $0x1c] sm:$0xf]
      %v1387 = vld [vmem:[%s1378 + $0x20] sm:$0xf]
      %v1388 = vld [vmem:[%s1378 + $0x24] sm:$0xf]
      %v1389 = vld [vmem:[%s1378 + $0x28] sm:$0xf]
      %v1390 = vld [vmem:[%s1378 + $0x2c] sm:$0xf]
      %v1391 = vld [vmem:[%s1378 + $0x30] sm:$0xf]
      %v1392 = vld [vmem:[%s1378 + $0x34] sm:$0xf]
      %v1393 = vld [vmem:[%s1378 + $0x38] sm:$0xf]
      %v1394 = vld [vmem:[%s1378 + $0x3c] sm:$0xf]
      %v1411 = vunpack.c.l.b16 %v1379
      %v1412 = vunpack.c.l.b16 %v1380
      %v1413 = vunpack.c.l.b16 %v1381
      %v1414 = vunpack.c.l.b16 %v1382
      %v1415 = vunpack.c.l.b16 %v1383
      %v1416 = vunpack.c.l.b16 %v1384
      %v1417 = vunpack.c.l.b16 %v1385
      %v1418 = vunpack.c.l.b16 %v1386
      %v1419 = vunpack.c.l.b16 %v1387
      %v1420 = vunpack.c.l.b16 %v1388
      %v1421 = vunpack.c.l.b16 %v1389
      %v1422 = vunpack.c.l.b16 %v1390
      %v1423 = vunpack.c.l.b16 %v1391
      %v1424 = vunpack.c.l.b16 %v1392
      %v1425 = vunpack.c.l.b16 %v1393
      %v1426 = vunpack.c.l.b16 %v1394
      %v1427 = vpack.c.b16 %v1412, %v1411
      %v1428 = vpack.c.b16 %v1414, %v1413
      %v1429 = vpack.c.b16 %v1416, %v1415
      %v1430 = vpack.c.b16 %v1418, %v1417
      %v1431 = vpack.c.b16 %v1420, %v1419
      %v1432 = vpack.c.b16 %v1422, %v1421
      %v1433 = vpack.c.b16 %v1424, %v1423
      %v1434 = vpack.c.b16 %v1426, %v1425
      %1443 = vmatprep.subr.bf16.mxu0 0
      %1444 = vmatpush1.bf16.msra.mxu0 %v1434
      %1445 = vmatprep.subr.bf16.mxu0 0
      %1446 = vmatpush1.bf16.msra.mxu0 %v1433
      %1447 = vmatprep.subr.bf16.mxu0 0
      %1448 = vmatpush1.bf16.msra.mxu0 %v1432
      %1449 = vmatprep.subr.bf16.mxu0 0
      %1450 = vmatpush1.bf16.msra.mxu0 %v1431
      %1451 = vmatprep.subr.bf16.mxu0 0
      %1452 = vmatpush1.bf16.msra.mxu0 %v1430
      %1453 = vmatprep.subr.bf16.mxu0 0
      %1454 = vmatpush1.bf16.msra.mxu0 %v1429
      %1455 = vmatprep.subr.bf16.mxu0 0
      %1456 = vmatpush1.bf16.msra.mxu0 %v1428
      %1457 = vmatprep.subr.bf16.mxu0 0
      %1458 = vmatpush1.bf16.msra.mxu0 %v1427
      %1459 = vmatprep.subr.bf16.mxu0 0
      %1460 = vmatpush2.bf16.msra.mxu0 0
      %1461 = vmatprep.subr.bf16.mxu0 0
      %1462 = vmatpush2.bf16.msra.mxu0 0
      %1463 = vmatprep.subr.bf16.mxu0 0
      %1464 = vmatpush2.bf16.msra.mxu0 0
      %1465 = vmatprep.subr.bf16.mxu0 0
      %1466 = vmatpush2.bf16.msra.mxu0 0
      %1467 = vmatprep.subr.bf16.mxu0 0
      %1468 = vmatpush2.bf16.msra.mxu0 0
      %1469 = vmatprep.subr.bf16.mxu0 0
      %1470 = vmatpush2.bf16.msra.mxu0 0
      %1471 = vmatprep.subr.bf16.mxu0 0
      %1472 = vmatpush2.bf16.msra.mxu0 0
      %1473 = vmatprep.subr.bf16.mxu0 0
      %1474 = vmatpush2.bf16.msra.mxu0 0
      %1475 = vmatprep.mubr.bf16.mxu0 0
      %1476 = vmatmul.mubr.bf16.gmra.mxu0 %v1374
      %v1477 = vpop.f32.mrf.mxu0
      %v1478 = vadd.f32 0.0, %v1477
      %v1479 = vpop.f32.mrf.mxu0
      %v1480 = vpop.f32.mrf.mxu0
      %v1481 = vadd.f32 0.0, %v1480
      %v1482 = vpop.f32.mrf.mxu0
      %1483 = vmatprep.mubr.bf16.mxu0 0
      %1484 = vmatmul.mubr.bf16.gmra.mxu0 %v1375
      %v1485 = vpop.f32.mrf.mxu0
      %v1486 = vadd.f32 0.0, %v1485
      %v1487 = vpop.f32.mrf.mxu0
      %v1488 = vpop.f32.mrf.mxu0
      %v1489 = vadd.f32 0.0, %v1488
      %v1490 = vpop.f32.mrf.mxu0
      %1491 = vmatprep.mubr.bf16.mxu0 0
      %1492 = vmatmul.mubr.bf16.gmra.mxu0 %v1376
      %v1493 = vpop.f32.mrf.mxu0
      %v1494 = vadd.f32 0.0, %v1493
      %v1495 = vpop.f32.mrf.mxu0
      %v1496 = vpop.f32.mrf.mxu0
      %v1497 = vadd.f32 0.0, %v1496
      %v1498 = vpop.f32.mrf.mxu0
      %1499 = vmatprep.mubr.bf16.mxu0 0
      %1500 = vmatmul.mubr.bf16.gmra.mxu0 %v1377
      %v1501 = vpop.f32.mrf.mxu0
      %v1502 = vadd.f32 0.0, %v1501
      %v1503 = vpop.f32.mrf.mxu0
      %v1504 = vpop.f32.mrf.mxu0
      %v1505 = vadd.f32 0.0, %v1504
      %v1506 = vpop.f32.mrf.mxu0
      %1507 = vdwg.mxu0
      %v1508 = vld [vmem:[%s208] sm:$0xff]
      %v1509 = vld [vmem:[%s208 + $0x8] sm:$0xff]
      %v1510 = vld [vmem:[%s208 + $0x10] sm:$0xff]
      %v1511 = vld [vmem:[%s208 + $0x18] sm:$0xff]
      %v1512 = vld [vmem:[%s208 + $0x20] sm:$0xff]
      %v1513 = vld [vmem:[%s208 + $0x28] sm:$0xff]
      %v1514 = vld [vmem:[%s208 + $0x30] sm:$0xff]
      %v1515 = vld [vmem:[%s208 + $0x38] sm:$0xff]
      %v1516 = vadd.f32 %v1508, %v1478
      %v1517 = vadd.f32 %v1509, %v1481
      %v1518 = vadd.f32 %v1510, %v1486
      %v1519 = vadd.f32 %v1511, %v1489
      %v1520 = vadd.f32 %v1512, %v1494
      %v1521 = vadd.f32 %v1513, %v1497
      %v1522 = vadd.f32 %v1514, %v1502
      %v1523 = vadd.f32 %v1515, %v1505
      %1524 = vst [vmem:[%s208] sm:$0xff] %v1516
      %1525 = vst [vmem:[%s208 + $0x8] sm:$0xff] %v1517
      %1526 = vst [vmem:[%s208 + $0x10] sm:$0xff] %v1518
      %1527 = vst [vmem:[%s208 + $0x18] sm:$0xff] %v1519
      %1528 = vst [vmem:[%s208 + $0x20] sm:$0xff] %v1520
      %1529 = vst [vmem:[%s208 + $0x28] sm:$0xff] %v1521
      %1530 = vst [vmem:[%s208 + $0x30] sm:$0xff] %v1522
      %1531 = vst [vmem:[%s208 + $0x38] sm:$0xff] %v1523
      %v1532 = vld [vmem:[%s1198 + $0x1] sm:$0xff]
      %v1533 = vld [vmem:[%s1198 + $0x11] sm:$0xff]
      %v1534 = vld [vmem:[%s1198 + $0x21] sm:$0xff]
      %v1535 = vld [vmem:[%s1198 + $0x31] sm:$0xff]
      %v1536 = vld [vmem:[%s1198 + $0x41] sm:$0xff]
      %v1537 = vld [vmem:[%s1198 + $0x51] sm:$0xff]
      %v1538 = vld [vmem:[%s1198 + $0x61] sm:$0xff]
      %v1539 = vld [vmem:[%s1198 + $0x71] sm:$0xff]
      %v1540 = vpack.c.bf16 %v1533, %v1532
      %v1541 = vpack.c.bf16 %v1535, %v1534
      %v1542 = vpack.c.bf16 %v1537, %v1536
      %v1543 = vpack.c.bf16 %v1539, %v1538
      %s1544 = scalar_lea.vmem %s1, 512
      %v1545 = vld [vmem:[%s1544] sm:$0xf]
      %v1546 = vld [vmem:[%s1544 + $0x4] sm:$0xf]
      %v1547 = vld [vmem:[%s1544 + $0x8] sm:$0xf]
      %v1548 = vld [vmem:[%s1544 + $0xc] sm:$0xf]
      %v1549 = vld [vmem:[%s1544 + $0x10] sm:$0xf]
      %v1550 = vld [vmem:[%s1544 + $0x14] sm:$0xf]
      %v1551 = vld [vmem:[%s1544 + $0x18] sm:$0xf]
      %v1552 = vld [vmem:[%s1544 + $0x1c] sm:$0xf]
      %v1553 = vld [vmem:[%s1544 + $0x20] sm:$0xf]
      %v1554 = vld [vmem:[%s1544 + $0x24] sm:$0xf]
      %v1555 = vld [vmem:[%s1544 + $0x28] sm:$0xf]
      %v1556 = vld [vmem:[%s1544 + $0x2c] sm:$0xf]
      %v1557 = vld [vmem:[%s1544 + $0x30] sm:$0xf]
      %v1558 = vld [vmem:[%s1544 + $0x34] sm:$0xf]
      %v1559 = vld [vmem:[%s1544 + $0x38] sm:$0xf]
      %v1560 = vld [vmem:[%s1544 + $0x3c] sm:$0xf]
      %v1577 = vunpack.c.l.b16 %v1545
      %v1578 = vunpack.c.l.b16 %v1546
      %v1579 = vunpack.c.l.b16 %v1547
      %v1580 = vunpack.c.l.b16 %v1548
      %v1581 = vunpack.c.l.b16 %v1549
      %v1582 = vunpack.c.l.b16 %v1550
      %v1583 = vunpack.c.l.b16 %v1551
      %v1584 = vunpack.c.l.b16 %v1552
      %v1585 = vunpack.c.l.b16 %v1553
      %v1586 = vunpack.c.l.b16 %v1554
      %v1587 = vunpack.c.l.b16 %v1555
      %v1588 = vunpack.c.l.b16 %v1556
      %v1589 = vunpack.c.l.b16 %v1557
      %v1590 = vunpack.c.l.b16 %v1558
      %v1591 = vunpack.c.l.b16 %v1559
      %v1592 = vunpack.c.l.b16 %v1560
      %v1593 = vpack.c.b16 %v1578, %v1577
      %v1594 = vpack.c.b16 %v1580, %v1579
      %v1595 = vpack.c.b16 %v1582, %v1581
      %v1596 = vpack.c.b16 %v1584, %v1583
      %v1597 = vpack.c.b16 %v1586, %v1585
      %v1598 = vpack.c.b16 %v1588, %v1587
      %v1599 = vpack.c.b16 %v1590, %v1589
      %v1600 = vpack.c.b16 %v1592, %v1591
      %1609 = vmatprep.subr.bf16.mxu0 0
      %1610 = vmatpush1.bf16.msra.mxu0 %v1600
      %1611 = vmatprep.subr.bf16.mxu0 0
      %1612 = vmatpush1.bf16.msra.mxu0 %v1599
      %1613 = vmatprep.subr.bf16.mxu0 0
      %1614 = vmatpush1.bf16.msra.mxu0 %v1598
      %1615 = vmatprep.subr.bf16.mxu0 0
      %1616 = vmatpush1.bf16.msra.mxu0 %v1597
      %1617 = vmatprep.subr.bf16.mxu0 0
      %1618 = vmatpush1.bf16.msra.mxu0 %v1596
      %1619 = vmatprep.subr.bf16.mxu0 0
      %1620 = vmatpush1.bf16.msra.mxu0 %v1595
      %1621 = vmatprep.subr.bf16.mxu0 0
      %1622 = vmatpush1.bf16.msra.mxu0 %v1594
      %1623 = vmatprep.subr.bf16.mxu0 0
      %1624 = vmatpush1.bf16.msra.mxu0 %v1593
      %1625 = vmatprep.subr.bf16.mxu0 0
      %1626 = vmatpush2.bf16.msra.mxu0 0
      %1627 = vmatprep.subr.bf16.mxu0 0
      %1628 = vmatpush2.bf16.msra.mxu0 0
      %1629 = vmatprep.subr.bf16.mxu0 0
      %1630 = vmatpush2.bf16.msra.mxu0 0
      %1631 = vmatprep.subr.bf16.mxu0 0
      %1632 = vmatpush2.bf16.msra.mxu0 0
      %1633 = vmatprep.subr.bf16.mxu0 0
      %1634 = vmatpush2.bf16.msra.mxu0 0
      %1635 = vmatprep.subr.bf16.mxu0 0
      %1636 = vmatpush2.bf16.msra.mxu0 0
      %1637 = vmatprep.subr.bf16.mxu0 0
      %1638 = vmatpush2.bf16.msra.mxu0 0
      %1639 = vmatprep.subr.bf16.mxu0 0
      %1640 = vmatpush2.bf16.msra.mxu0 0
      %1641 = vmatprep.mubr.bf16.mxu0 0
      %1642 = vmatmul.mubr.bf16.gmra.mxu0 %v1540
      %v1643 = vpop.f32.mrf.mxu0
      %v1644 = vadd.f32 0.0, %v1643
      %v1645 = vpop.f32.mrf.mxu0
      %v1646 = vpop.f32.mrf.mxu0
      %v1647 = vadd.f32 0.0, %v1646
      %v1648 = vpop.f32.mrf.mxu0
      %1649 = vmatprep.mubr.bf16.mxu0 0
      %1650 = vmatmul.mubr.bf16.gmra.mxu0 %v1541
      %v1651 = vpop.f32.mrf.mxu0
      %v1652 = vadd.f32 0.0, %v1651
      %v1653 = vpop.f32.mrf.mxu0
      %v1654 = vpop.f32.mrf.mxu0
      %v1655 = vadd.f32 0.0, %v1654
      %v1656 = vpop.f32.mrf.mxu0
      %1657 = vmatprep.mubr.bf16.mxu0 0
      %1658 = vmatmul.mubr.bf16.gmra.mxu0 %v1542
      %v1659 = vpop.f32.mrf.mxu0
      %v1660 = vadd.f32 0.0, %v1659
      %v1661 = vpop.f32.mrf.mxu0
      %v1662 = vpop.f32.mrf.mxu0
      %v1663 = vadd.f32 0.0, %v1662
      %v1664 = vpop.f32.mrf.mxu0
      %1665 = vmatprep.mubr.bf16.mxu0 0
      %1666 = vmatmul.mubr.bf16.gmra.mxu0 %v1543
      %v1667 = vpop.f32.mrf.mxu0
      %v1668 = vadd.f32 0.0, %v1667
      %v1669 = vpop.f32.mrf.mxu0
      %v1670 = vpop.f32.mrf.mxu0
      %v1671 = vadd.f32 0.0, %v1670
      %v1672 = vpop.f32.mrf.mxu0
      %1673 = vdwg.mxu0
      %v1674 = vld [vmem:[%s208] sm:$0xff]
      %v1675 = vld [vmem:[%s208 + $0x8] sm:$0xff]
      %v1676 = vld [vmem:[%s208 + $0x10] sm:$0xff]
      %v1677 = vld [vmem:[%s208 + $0x18] sm:$0xff]
      %v1678 = vld [vmem:[%s208 + $0x20] sm:$0xff]
      %v1679 = vld [vmem:[%s208 + $0x28] sm:$0xff]
      %v1680 = vld [vmem:[%s208 + $0x30] sm:$0xff]
      %v1681 = vld [vmem:[%s208 + $0x38] sm:$0xff]
      %v1682 = vadd.f32 %v1674, %v1644
      %v1683 = vadd.f32 %v1675, %v1647
      %v1684 = vadd.f32 %v1676, %v1652
      %v1685 = vadd.f32 %v1677, %v1655
      %v1686 = vadd.f32 %v1678, %v1660
      %v1687 = vadd.f32 %v1679, %v1663
      %v1688 = vadd.f32 %v1680, %v1668
      %v1689 = vadd.f32 %v1681, %v1671
      %1690 = vst [vmem:[%s208] sm:$0xff] %v1682
      %1691 = vst [vmem:[%s208 + $0x8] sm:$0xff] %v1683
      %1692 = vst [vmem:[%s208 + $0x10] sm:$0xff] %v1684
      %1693 = vst [vmem:[%s208 + $0x18] sm:$0xff] %v1685
      %1694 = vst [vmem:[%s208 + $0x20] sm:$0xff] %v1686
      %1695 = vst [vmem:[%s208 + $0x28] sm:$0xff] %v1687
      %1696 = vst [vmem:[%s208 + $0x30] sm:$0xff] %v1688
      %1697 = vst [vmem:[%s208 + $0x38] sm:$0xff] %v1689
      %v1698 = vld [vmem:[%s208] sm:$0xff]
      %v1699 = vld [vmem:[%s208 + $0x8] sm:$0xff]
      %v1700 = vld [vmem:[%s208 + $0x10] sm:$0xff]
      %v1701 = vld [vmem:[%s208 + $0x18] sm:$0xff]
      %v1702 = vld [vmem:[%s208 + $0x20] sm:$0xff]
      %v1703 = vld [vmem:[%s208 + $0x28] sm:$0xff]
      %v1704 = vld [vmem:[%s208 + $0x30] sm:$0xff]
      %v1705 = vld [vmem:[%s208 + $0x38] sm:$0xff]
      %v1706 = vadd.f32 %v1698, %v1699
      %v1707 = vadd.f32 %v1706, %v1700
      %v1708 = vadd.f32 %v1707, %v1701
      %v1709 = vadd.f32 %v1708, %v1702
      %v1710 = vadd.f32 %v1709, %v1703
      %v1711 = vadd.f32 %v1710, %v1704
      %v1712 = vadd.f32 %v1711, %v1705
      %v1713 = vrot.slane %v1712, 4
      %v1714 = vadd.f32 %v1712, %v1713
      %v1715 = vrot.slane %v1714, 2
      %v1716 = vadd.f32 %v1714, %v1715
      %v1717 = vrot.slane %v1716, 1
      %v1718 = vadd.f32 %v1716, %v1717
      %1719 = vst [vmem:[%s211] sm:$0x1] %v1718
      %v1720 = vmul.f32 %v1698, %v1698
      %v1721 = vmul.f32 %v1699, %v1699
      %v1722 = vmul.f32 %v1700, %v1700
      %v1723 = vmul.f32 %v1701, %v1701
      %v1724 = vmul.f32 %v1702, %v1702
      %v1725 = vmul.f32 %v1703, %v1703
      %v1726 = vmul.f32 %v1704, %v1704
      %v1727 = vmul.f32 %v1705, %v1705
      %v1728 = vadd.f32 %v1720, %v1721
      %v1729 = vadd.f32 %v1728, %v1722
      %v1730 = vadd.f32 %v1729, %v1723
      %v1731 = vadd.f32 %v1730, %v1724
      %v1732 = vadd.f32 %v1731, %v1725
      %v1733 = vadd.f32 %v1732, %v1726
      %v1734 = vadd.f32 %v1733, %v1727
      %v1735 = vrot.slane %v1734, 4
      %v1736 = vadd.f32 %v1734, %v1735
      %v1737 = vrot.slane %v1736, 2
      %v1738 = vadd.f32 %v1736, %v1737
      %v1739 = vrot.slane %v1738, 1
      %v1740 = vadd.f32 %v1738, %v1739
      %1741 = vst [vmem:[%s214] sm:$0x1] %v1740
      %p1742 = scmp.lt.s32.totalorder %s16, 1
      %s1743 = scalar_select %p1742, %s16, 1
      %s1744 = smul.addr %s1743, 8
      %s1745 = smul.addr %s1744, 8
      %s1746 = scalar_lea.vmem %s2, %s1745
      %p1747 = scmp.lt.s32.totalorder %s16, 1
      %s1748 = scalar_select %p1747, %s16, 1
      %s1749 = scalar_lea.vmem %s3, %s1748
      %p1750 = scmp.lt.s32.totalorder %s16, 1
      %s1751 = scalar_select %p1750, %s16, 1
      %s1752 = scalar_lea.vmem %s4, %s1751
      // Predicated region
      $region29: #{basic_block_forward.4} parent=27 // pred_check
        %p1753 = pneg %p81
      $region30: #{basic_block_forward.4} parent=27 // pred_check_branch
        %1755 = sbr.rel (%p1753) target = $region32
      $region31: #{basic_block_forward.4} parent=27 // pred_region
        _
      $region32: #{basic_block_forward.4} parent=27 // pred_fallthru
        _
      // Predicated region
      $region33: #{basic_block_forward.4} parent=27 // pred_check
        %p1756 = pneg %p107
      $region34: #{basic_block_forward.4} parent=27 // pred_check_branch
        %1758 = sbr.rel (%p1756) target = $region36
      $region35: #{basic_block_forward.4} parent=27 // pred_region
        _
      $region36: #{basic_block_forward.4} parent=27 // pred_fallthru
        _
      // Predicated region
      $region37: #{basic_block_forward.4} parent=27 // pred_check
        %p1759 = pneg %p133
      $region38: #{basic_block_forward.4} parent=27 // pred_check_branch
        %1761 = sbr.rel (%p1759) target = $region40
      $region39: #{basic_block_forward.4} parent=27 // pred_region
        _
      $region40: #{basic_block_forward.4} parent=27 // pred_fallthru
        _
    $region28: #{basic_block_forward.4} parent=5 // pred_fallthru
      _
    %p1762 = scmp.le.s32.totalorder 2, %s11
    // Predicated region
    $region41: #{basic_block_forward.4} parent=5 // pred_check
      %p1763 = pneg %p1762
    $region42: #{basic_block_forward.4} parent=5 // pred_check_branch
      %1765 = sbr.rel (%p1763) target = $region44
    $region43: #{basic_block_forward.4} parent=5 // pred_region
      %s1766 = ssub.s32 %s11, 2
      // Predicated region
      $region45: #{basic_block_forward.4} parent=43 // pred_check
        %p1767 = pneg %p87
      $region46: #{basic_block_forward.4} parent=43 // pred_check_branch
        %1769 = sbr.rel (%p1767) target = $region48
      $region47: #{basic_block_forward.4} parent=43 // pred_region
        %p1770 = scmp.lt.s32.totalorder %s17, 1
        %s1771 = scalar_select %p1770, %s17, 1
        %s1772 = smul.addr %s1771, 8
        %s1773 = smul.addr %s1772, 8
        %s1774 = scalar_lea.vmem %s2, %s1773
      $region48: #{basic_block_forward.4} parent=43 // pred_fallthru
        _
      // Predicated region
      $region49: #{basic_block_forward.4} parent=43 // pred_check
        %p1775 = pneg %p113
      $region50: #{basic_block_forward.4} parent=43 // pred_check_branch
        %1777 = sbr.rel (%p1775) target = $region52
      $region51: #{basic_block_forward.4} parent=43 // pred_region
        %p1778 = scmp.lt.s32.totalorder %s17, 1
        %s1779 = scalar_select %p1778, %s17, 1
        %s1780 = scalar_lea.vmem %s3, %s1779
      $region52: #{basic_block_forward.4} parent=43 // pred_fallthru
        _
      // Predicated region
      $region53: #{basic_block_forward.4} parent=43 // pred_check
        %p1781 = pneg %p139
      $region54: #{basic_block_forward.4} parent=43 // pred_check_branch
        %1783 = sbr.rel (%p1781) target = $region56
      $region55: #{basic_block_forward.4} parent=43 // pred_region
        %p1784 = scmp.lt.s32.totalorder %s17, 1
        %s1785 = scalar_select %p1784, %s17, 1
        %s1786 = scalar_lea.vmem %s4, %s1785
      $region56: #{basic_block_forward.4} parent=43 // pred_fallthru
        _
    $region44: #{basic_block_forward.4} parent=5 // pred_fallthru
      _
  $region6: #{basic_block_forward.4} parent=0 // loop_footer
    %s15 = sadd.s32 1, %s11
  $region7: #{basic_block_forward.4} parent=0 // loop_footer_branch
    %10 = sbr.rel target = $region3
  $region8: #{basic_block_forward.4} parent=0 // loop_exit
    _

// kernel: basic_block_forward.5
$region0: #{basic_block_forward.5}
  #allocation0 [shape = 'u32[]', space=smem, size = 0x4, offset = 0x4, fixed_abs, tag = 'smem constant byte address 0x4 - core index']
  #allocation1 [shape = 'u32[144,128]{1,0:T(1,128)}', space=vmem, size = 0x12000, scoped, tag = 'internal scratch']
  #allocation2 [shape = 'f32[10,24,128]{2,1,0:T(8,128)}', space=vmem, size = 0x1e000, scoped, tag = 'scratch operand']
  %s0 = inlined_call_operand.vmem [shape: f32[2,8,8,128], index: 0, kind: input, shape index: {}]
  %s1 = inlined_call_operand.vmem [shape: f32[1,128], index: 1, kind: input, shape index: {}]
  %s2 = inlined_call_operand.vmem [shape: f32[1,128], index: 2, kind: input, shape index: {}]
  %s3 = inlined_call_operand.vmem [shape: bf16[9,128,128], index: 3, kind: input, shape index: {}]
  %s4 = inlined_call_operand.vmem [shape: f32[2,64,128], index: 4, kind: output, shape index: {0}]
  %s5 = inlined_call_operand.vmem [shape: f32[2,1,128], index: 5, kind: output, shape index: {1}]
  %s6 = inlined_call_operand.vmem [shape: f32[2,1,128], index: 6, kind: output, shape index: {2}]
  %7 = xla_tuple %s4, %s5, %s6
  %s8 = sld [smem:[#allocation0]]
  $region65: #{basic_block_forward.5} parent=0
    _
  %s10 = ssub.s32 1, %s8
  %s11 = scalar_select 0, %s10, %s8
  loop: start=0, step=1, limit=4
  $region2: #{basic_block_forward.5} parent=0 // loop_pre_header
    _
  $region3: #{basic_block_forward.5} parent=0 // loop_header
    %s13 = sphi 0, %s17
    %p14 = scmp.ge.s32.totalorder %s13, 4
    %s23 = sphi 0, %s25
    %s26 = sphi 0, %s23
    %s27 = sphi 0, %s26
    %s43 = sphi 0, %s27
    %s47 = sphi 0, %s47
    %s49 = sphi 0, %s47
    %s50 = sphi 0, %s49
    %s64 = sphi 0, %s50
    %s68 = sphi 0, %s68
    %s70 = sphi 0, %s68
    %s71 = sphi 0, %s70
    %s85 = sphi 0, %s71
    %s89 = sphi 0, %s89
    %s91 = sphi 0, %s89
    %s92 = sphi 0, %s91
    %s106 = sphi 0, %s92
    %s112 = sphi 0, %s114
    %s115 = sphi 0, %s112
    %s116 = sphi 0, %s115
    %s132 = sphi 0, %s116
    %s138 = sphi 0, %s140
    %s141 = sphi 0, %s138
    %s142 = sphi 0, %s141
    %s158 = sphi 0, %s142
    %s164 = sphi 0, %s166
    %s167 = sphi 0, %s164
    %s168 = sphi 0, %s167
    %s184 = sphi 0, %s168
  $region4: #{basic_block_forward.5} parent=0 // loop_header_branch
    %16 = sbr.rel (%p14) target = $region8
  $region5: #{basic_block_forward.5} parent=0 // loop_body
    %s18 = ssub.s32 %s13, 1
    %s19 = ssub.s32 %s13, 2
    %s20 = sadd.s32 %s13, 1
    %s21 = ssub.s32 %s13, %s20
    %p22 = scmp.eq.s32.totalorder %s21, 0
    %s24 = sadd.s32 %s23, 1
    %s25 = scalar_select %p22, %s23, %s24
    %p28 = pneg %p22
    %p29 = scmp.eq.s32.totalorder %s13, 1
    %p30 = por %p28, %p29
    %p31 = scmp.ne.s32.totalorder %s23, %s26
    %p32 = scmp.eq.s32.totalorder %s13, 0
    %p33 = por %p31, %p32
    %p34 = scmp.ne.s32.totalorder %s23, %s26
    %p35 = scmp.eq.s32.totalorder %s18, 1
    %p36 = por %p34, %p35
    %p37 = scmp.ne.s32.totalorder %s26, %s27
    %p38 = scmp.eq.s32.totalorder %s18, 0
    %p39 = por %p37, %p38
    %p40 = scmp.ne.s32.totalorder %s26, %s27
    %p41 = scmp.eq.s32.totalorder %s19, 1
    %p42 = por %p40, %p41
    %p44 = scmp.ne.s32.totalorder %s27, %s43
    %p45 = scmp.eq.s32.totalorder %s19, 0
    %p46 = por %p44, %p45
    %s48 = sadd.s32 %s47, 1
    %p51 = scmp.eq.s32.totalorder %s13, 1
    %p52 = scmp.ne.s32.totalorder %s47, %s49
    %p53 = scmp.eq.s32.totalorder %s13, 0
    %p54 = por %p52, %p53
    %p55 = scmp.ne.s32.totalorder %s47, %s49
    %p56 = scmp.eq.s32.totalorder %s18, 1
    %p57 = por %p55, %p56
    %p58 = scmp.ne.s32.totalorder %s49, %s50
    %p59 = scmp.eq.s32.totalorder %s18, 0
    %p60 = por %p58, %p59
    %p61 = scmp.ne.s32.totalorder %s49, %s50
    %p62 = scmp.eq.s32.totalorder %s19, 1
    %p63 = por %p61, %p62
    %p65 = scmp.ne.s32.totalorder %s50, %s64
    %p66 = scmp.eq.s32.totalorder %s19, 0
    %p67 = por %p65, %p66
    %s69 = sadd.s32 %s68, 1
    %p72 = scmp.eq.s32.totalorder %s13, 1
    %p73 = scmp.ne.s32.totalorder %s68, %s70
    %p74 = scmp.eq.s32.totalorder %s13, 0
    %p75 = por %p73, %p74
    %p76 = scmp.ne.s32.totalorder %s68, %s70
    %p77 = scmp.eq.s32.totalorder %s18, 1
    %p78 = por %p76, %p77
    %p79 = scmp.ne.s32.totalorder %s70, %s71
    %p80 = scmp.eq.s32.totalorder %s18, 0
    %p81 = por %p79, %p80
    %p82 = scmp.ne.s32.totalorder %s70, %s71
    %p83 = scmp.eq.s32.totalorder %s19, 1
    %p84 = por %p82, %p83
    %p86 = scmp.ne.s32.totalorder %s71, %s85
    %p87 = scmp.eq.s32.totalorder %s19, 0
    %p88 = por %p86, %p87
    %s90 = sadd.s32 %s89, 1
    %p93 = scmp.eq.s32.totalorder %s13, 1
    %p94 = scmp.ne.s32.totalorder %s89, %s91
    %p95 = scmp.eq.s32.totalorder %s13, 0
    %p96 = por %p94, %p95
    %p97 = scmp.ne.s32.totalorder %s89, %s91
    %p98 = scmp.eq.s32.totalorder %s18, 1
    %p99 = por %p97, %p98
    %p100 = scmp.ne.s32.totalorder %s91, %s92
    %p101 = scmp.eq.s32.totalorder %s18, 0
    %p102 = por %p100, %p101
    %p103 = scmp.ne.s32.totalorder %s91, %s92
    %p104 = scmp.eq.s32.totalorder %s19, 1
    %p105 = por %p103, %p104
    %p107 = scmp.ne.s32.totalorder %s92, %s106
    %p108 = scmp.eq.s32.totalorder %s19, 0
    %p109 = por %p107, %p108
    %s110 = ssub.s32 %s13, %s20
    %p111 = scmp.eq.s32.totalorder %s110, 0
    %s113 = sadd.s32 %s112, 1
    %s114 = scalar_select %p111, %s112, %s113
    %p117 = pneg %p111
    %p118 = scmp.eq.s32.totalorder %s13, 1
    %p119 = por %p117, %p118
    %p120 = scmp.ne.s32.totalorder %s112, %s115
    %p121 = scmp.eq.s32.totalorder %s13, 0
    %p122 = por %p120, %p121
    %p123 = scmp.ne.s32.totalorder %s112, %s115
    %p124 = scmp.eq.s32.totalorder %s18, 1
    %p125 = por %p123, %p124
    %p126 = scmp.ne.s32.totalorder %s115, %s116
    %p127 = scmp.eq.s32.totalorder %s18, 0
    %p128 = por %p126, %p127
    %p129 = scmp.ne.s32.totalorder %s115, %s116
    %p130 = scmp.eq.s32.totalorder %s19, 1
    %p131 = por %p129, %p130
    %p133 = scmp.ne.s32.totalorder %s116, %s132
    %p134 = scmp.eq.s32.totalorder %s19, 0
    %p135 = por %p133, %p134
    %s136 = ssub.s32 %s13, %s20
    %p137 = scmp.eq.s32.totalorder %s136, 0
    %s139 = sadd.s32 %s138, 1
    %s140 = scalar_select %p137, %s138, %s139
    %p143 = pneg %p137
    %p144 = scmp.eq.s32.totalorder %s13, 1
    %p145 = por %p143, %p144
    %p146 = scmp.ne.s32.totalorder %s138, %s141
    %p147 = scmp.eq.s32.totalorder %s13, 0
    %p148 = por %p146, %p147
    %p149 = scmp.ne.s32.totalorder %s138, %s141
    %p150 = scmp.eq.s32.totalorder %s18, 1
    %p151 = por %p149, %p150
    %p152 = scmp.ne.s32.totalorder %s141, %s142
    %p153 = scmp.eq.s32.totalorder %s18, 0
    %p154 = por %p152, %p153
    %p155 = scmp.ne.s32.totalorder %s141, %s142
    %p156 = scmp.eq.s32.totalorder %s19, 1
    %p157 = por %p155, %p156
    %p159 = scmp.ne.s32.totalorder %s142, %s158
    %p160 = scmp.eq.s32.totalorder %s19, 0
    %p161 = por %p159, %p160
    %s162 = ssub.s32 %s13, %s20
    %p163 = scmp.eq.s32.totalorder %s162, 0
    %s165 = sadd.s32 %s164, 1
    %s166 = scalar_select %p163, %s164, %s165
    %p169 = pneg %p163
    %p170 = scmp.eq.s32.totalorder %s13, 1
    %p171 = por %p169, %p170
    %p172 = scmp.ne.s32.totalorder %s164, %s167
    %p173 = scmp.eq.s32.totalorder %s13, 0
    %p174 = por %p172, %p173
    %p175 = scmp.ne.s32.totalorder %s164, %s167
    %p176 = scmp.eq.s32.totalorder %s18, 1
    %p177 = por %p175, %p176
    %p178 = scmp.ne.s32.totalorder %s167, %s168
    %p179 = scmp.eq.s32.totalorder %s18, 0
    %p180 = por %p178, %p179
    %p181 = scmp.ne.s32.totalorder %s167, %s168
    %p182 = scmp.eq.s32.totalorder %s19, 1
    %p183 = por %p181, %p182
    %p185 = scmp.ne.s32.totalorder %s168, %s184
    %p186 = scmp.eq.s32.totalorder %s19, 0
    %p187 = por %p185, %p186
    %p188 = scmp.le.s32.totalorder 1, %s13
    %p189 = scmp.lt.s32.totalorder %s13, 3
    %p190 = pnand %p188, %p189
    %p191 = pneg %p190
    // Predicated region
    $region9: #{basic_block_forward.5} parent=5 // pred_check
      _
    $region10: #{basic_block_forward.5} parent=5 // pred_check_branch
      %193 = sbr.rel (%p190) target = $region12
    $region11: #{basic_block_forward.5} parent=5 // pred_region
      %s194 = ssub.s32 %s13, 1
      // Predicated region
      $region13: #{basic_block_forward.5} parent=11 // pred_check
        %p195 = pneg %p60
      $region14: #{basic_block_forward.5} parent=11 // pred_check_branch
        %197 = sbr.rel (%p195) target = $region16
      $region15: #{basic_block_forward.5} parent=11 // pred_region
        _
      $region16: #{basic_block_forward.5} parent=11 // pred_fallthru
        _
      // Predicated region
      $region17: #{basic_block_forward.5} parent=11 // pred_check
        %p198 = pneg %p81
      $region18: #{basic_block_forward.5} parent=11 // pred_check_branch
        %200 = sbr.rel (%p198) target = $region20
      $region19: #{basic_block_forward.5} parent=11 // pred_region
        _
      $region20: #{basic_block_forward.5} parent=11 // pred_fallthru
        _
      // Predicated region
      $region21: #{basic_block_forward.5} parent=11 // pred_check
        %p201 = pneg %p102
      $region22: #{basic_block_forward.5} parent=11 // pred_check_branch
        %203 = sbr.rel (%p201) target = $region24
      $region23: #{basic_block_forward.5} parent=11 // pred_region
        _
      $region24: #{basic_block_forward.5} parent=11 // pred_fallthru
        _
    $region12: #{basic_block_forward.5} parent=5 // pred_fallthru
      _
    %p204 = scmp.lt.s32.totalorder %s13, 2
    // Predicated region
    $region25: #{basic_block_forward.5} parent=5 // pred_check
      %p205 = pneg %p204
    $region26: #{basic_block_forward.5} parent=5 // pred_check_branch
      %207 = sbr.rel (%p205) target = $region28
    $region27: #{basic_block_forward.5} parent=5 // pred_region
      // Predicated region
      $region29: #{basic_block_forward.5} parent=27 // pred_check
        %p208 = pneg %p33
      $region30: #{basic_block_forward.5} parent=27 // pred_check_branch
        %210 = sbr.rel (%p208) target = $region32
      $region31: #{basic_block_forward.5} parent=27 // pred_region
        %p211 = scmp.lt.s32.totalorder %s13, 1
        %s212 = scalar_select %p211, %s13, 1
        %s213 = smul.addr %s212, 8
        %s214 = smul.addr %s213, 8
        %s215 = scalar_lea.vmem %s0, %s214
      $region32: #{basic_block_forward.5} parent=27 // pred_fallthru
        _
    $region28: #{basic_block_forward.5} parent=5 // pred_fallthru
      _
    %p216 = scmp.le.s32.totalorder 1, %s13
    %p217 = scmp.lt.s32.totalorder %s13, 3
    %p218 = pnand %p216, %p217
    %p219 = pneg %p218
    // Predicated region
    $region33: #{basic_block_forward.5} parent=5 // pred_check
      _
    $region34: #{basic_block_forward.5} parent=5 // pred_check_branch
      %221 = sbr.rel (%p218) target = $region36
    $region35: #{basic_block_forward.5} parent=5 // pred_region
      %s222 = ssub.s32 %s13, 1
      %p223 = scmp.lt.s32.totalorder %s18, 1
      %s224 = scalar_select %p223, %s18, 1
      %s225 = smul.addr %s224, 8
      %s226 = smul.addr %s225, 8
      %s227 = scalar_lea.vmem %s0, %s226
      %p228 = pneg %p39
      %p229 = pneg %p36
      %p230 = pneg %p60
      %p231 = pneg %p57
      %p232 = pneg %p81
      %p233 = pneg %p78
      %p234 = pneg %p102
      %p235 = pneg %p99
      %p236 = pneg %p128
      %p237 = pneg %p125
      %p238 = scmp.lt.s32.totalorder %s18, 1
      %s239 = scalar_select %p238, %s18, 1
      %s240 = smul.addr %s239, 8
      %s241 = smul.addr %s240, 8
      %s242 = scalar_lea.vmem %s4, %s241
      %p243 = pneg %p154
      %p244 = pneg %p151
      %p245 = scmp.lt.s32.totalorder %s18, 1
      %s246 = scalar_select %p245, %s18, 1
      %s247 = scalar_lea.vmem %s5, %s246
      %p248 = pneg %p180
      %p249 = pneg %p177
      %p250 = scmp.lt.s32.totalorder %s18, 1
      %s251 = scalar_select %p250, %s18, 1
      %s252 = scalar_lea.vmem %s6, %s251
      %p253 = scmp.lt.s32.totalorder %s18, 1
      %s254 = scalar_select %p253, %s18, 1
      %s255 = smul.addr %s254, 8
      %s256 = smul.addr %s255, 8
      %s257 = scalar_lea.vmem %s0, %s256
      %p258 = scmp.lt.s32.totalorder %s18, 1
      %s259 = scalar_select %p258, %s18, 1
      %s260 = smul.addr %s259, 8
      %s261 = smul.addr %s260, 8
      %s262 = scalar_lea.vmem %s4, %s261
      %p263 = scmp.lt.s32.totalorder %s18, 1
      %s264 = scalar_select %p263, %s18, 1
      %s265 = scalar_lea.vmem %s5, %s264
      %p266 = scmp.lt.s32.totalorder %s18, 1
      %s267 = scalar_select %p266, %s18, 1
      %s268 = scalar_lea.vmem %s6, %s267
      %v270 = vld [vmem:[%s257] sm:$0xff]
      %v271 = vld [vmem:[%s257 + $0x8] sm:$0xff]
      %v272 = vld [vmem:[%s257 + $0x10] sm:$0xff]
      %v273 = vld [vmem:[%s257 + $0x18] sm:$0xff]
      %v274 = vld [vmem:[%s257 + $0x20] sm:$0xff]
      %v275 = vld [vmem:[%s257 + $0x28] sm:$0xff]
      %v276 = vld [vmem:[%s257 + $0x30] sm:$0xff]
      %v277 = vld [vmem:[%s257 + $0x38] sm:$0xff]
      %v278 = vld [vmem:[%s1] sm:$0x1]
      %v280 = vlaneseq
      %v281 = vshrl.u32 %v280, 7
      %v282 = vsub.s32 0, %v281
      %v283 = vrot.slane %v278, %v282
      %v285 = vmul.f32 %v270, %v283
      %v286 = vmul.f32 %v271, %v283
      %v287 = vmul.f32 %v272, %v283
      %v288 = vmul.f32 %v273, %v283
      %v289 = vmul.f32 %v274, %v283
      %v290 = vmul.f32 %v275, %v283
      %v291 = vmul.f32 %v276, %v283
      %v292 = vmul.f32 %v277, %v283
      %v293 = vld [vmem:[%s2] sm:$0x1]
      %v295 = vlaneseq
      %v296 = vshrl.u32 %v295, 7
      %v297 = vsub.s32 0, %v296
      %v298 = vrot.slane %v293, %v297
      %v300 = vadd.f32 %v285, %v298
      %v301 = vadd.f32 %v286, %v298
      %v302 = vadd.f32 %v287, %v298
      %v303 = vadd.f32 %v288, %v298
      %v304 = vadd.f32 %v289, %v298
      %v305 = vadd.f32 %v290, %v298
      %v306 = vadd.f32 %v291, %v298
      %v307 = vadd.f32 %v292, %v298
      %v308 = vmax.f32 %v300, 0.0
      %v309 = vmax.f32 %v301, 0.0
      %v310 = vmax.f32 %v302, 0.0
      %v311 = vmax.f32 %v303, 0.0
      %v312 = vmax.f32 %v304, 0.0
      %v313 = vmax.f32 %v305, 0.0
      %v314 = vmax.f32 %v306, 0.0
      %v315 = vmax.f32 %v307, 0.0
      %316 = vst [vmem:[#allocation2] sm:$0xff] 0.0
      %317 = vst [vmem:[#allocation2 + $0x8] sm:$0xff] 0.0
      %318 = vst [vmem:[#allocation2 + $0x10] sm:$0xff] 0.0
      %319 = vst [vmem:[#allocation2 + $0x18] sm:$0xff] 0.0
      %320 = vst [vmem:[#allocation2 + $0x20] sm:$0xff] 0.0
      %321 = vst [vmem:[#allocation2 + $0x28] sm:$0xff] 0.0
      %322 = vst [vmem:[#allocation2 + $0x30] sm:$0xff] 0.0
      %323 = vst [vmem:[#allocation2 + $0x38] sm:$0xff] 0.0
      %324 = vst [vmem:[#allocation2 + $0x40] sm:$0xff] 0.0
      %325 = vst [vmem:[#allocation2 + $0x48] sm:$0xff] 0.0
      %326 = vst [vmem:[#allocation2 + $0x50] sm:$0xff] 0.0
      %327 = vst [vmem:[#allocation2 + $0x58] sm:$0xff] 0.0
      %328 = vst [vmem:[#allocation2 + $0x60] sm:$0xff] 0.0
      %329 = vst [vmem:[#allocation2 + $0x68] sm:$0xff] 0.0
      %330 = vst [vmem:[#allocation2 + $0x70] sm:$0xff] 0.0
      %331 = vst [vmem:[#allocation2 + $0x78] sm:$0xff] 0.0
      %332 = vst [vmem:[#allocation2 + $0x80] sm:$0xff] 0.0
      %333 = vst [vmem:[#allocation2 + $0x88] sm:$0xff] 0.0
      %334 = vst [vmem:[#allocation2 + $0x90] sm:$0xff] 0.0
      %335 = vst [vmem:[#allocation2 + $0x98] sm:$0xff] 0.0
      %336 = vst [vmem:[#allocation2 + $0xa0] sm:$0xff] 0.0
      %337 = vst [vmem:[#allocation2 + $0xa8] sm:$0xff] 0.0
      %338 = vst [vmem:[#allocation2 + $0xb0] sm:$0xff] 0.0
      %339 = vst [vmem:[#allocation2 + $0xb8] sm:$0xff] 0.0
      %340 = vst [vmem:[#allocation2 + $0xc0] sm:$0xff] 0.0
      %341 = vst [vmem:[#allocation2 + $0xc8] sm:$0xff] 0.0
      %342 = vst [vmem:[#allocation2 + $0xd0] sm:$0xff] 0.0
      %343 = vst [vmem:[#allocation2 + $0xd8] sm:$0xff] 0.0
      %344 = vst [vmem:[#allocation2 + $0xe0] sm:$0xff] 0.0
      %345 = vst [vmem:[#allocation2 + $0xe8] sm:$0xff] 0.0
      %s346 = scalar_lea.vmem [#allocation2], 24
      %347 = vst [vmem:[%s346 + $0x8] sm:$0xff] %v308
      %348 = vst [vmem:[%s346 + $0x20] sm:$0xff] %v309
      %349 = vst [vmem:[%s346 + $0x38] sm:$0xff] %v310
      %350 = vst [vmem:[%s346 + $0x50] sm:$0xff] %v311
      %351 = vst [vmem:[%s346 + $0x68] sm:$0xff] %v312
      %352 = vst [vmem:[%s346 + $0x80] sm:$0xff] %v313
      %353 = vst [vmem:[%s346 + $0x98] sm:$0xff] %v314
      %354 = vst [vmem:[%s346 + $0xb0] sm:$0xff] %v315
      %v355 = vld [vmem:[#allocation2 + $0x7] sm:$0xff]
      %v356 = vld [vmem:[#allocation2 + $0x1f] sm:$0xff]
      %v357 = vld [vmem:[#allocation2 + $0x37] sm:$0xff]
      %v358 = vld [vmem:[#allocation2 + $0x4f] sm:$0xff]
      %v359 = vld [vmem:[#allocation2 + $0x67] sm:$0xff]
      %v360 = vld [vmem:[#allocation2 + $0x7f] sm:$0xff]
      %v361 = vld [vmem:[#allocation2 + $0x97] sm:$0xff]
      %v362 = vld [vmem:[#allocation2 + $0xaf] sm:$0xff]
      %v363 = vpack.c.bf16 %v356, %v355
      %v364 = vpack.c.bf16 %v358, %v357
      %v365 = vpack.c.bf16 %v360, %v359
      %v366 = vpack.c.bf16 %v362, %v361
      %v367 = vld [vmem:[%s3] sm:$0xf]
      %v368 = vld [vmem:[%s3 + $0x4] sm:$0xf]
      %v369 = vld [vmem:[%s3 + $0x8] sm:$0xf]
      %v370 = vld [vmem:[%s3 + $0xc] sm:$0xf]
      %v371 = vld [vmem:[%s3 + $0x10] sm:$0xf]
      %v372 = vld [vmem:[%s3 + $0x14] sm:$0xf]
      %v373 = vld [vmem:[%s3 + $0x18] sm:$0xf]
      %v374 = vld [vmem:[%s3 + $0x1c] sm:$0xf]
      %v375 = vld [vmem:[%s3 + $0x20] sm:$0xf]
      %v376 = vld [vmem:[%s3 + $0x24] sm:$0xf]
      %v377 = vld [vmem:[%s3 + $0x28] sm:$0xf]
      %v378 = vld [vmem:[%s3 + $0x2c] sm:$0xf]
      %v379 = vld [vmem:[%s3 + $0x30] sm:$0xf]
      %v380 = vld [vmem:[%s3 + $0x34] sm:$0xf]
      %v381 = vld [vmem:[%s3 + $0x38] sm:$0xf]
      %v382 = vld [vmem:[%s3 + $0x3c] sm:$0xf]
      %v399 = vunpack.c.l.b16 %v367
      %v400 = vunpack.c.l.b16 %v368
      %v401 = vunpack.c.l.b16 %v369
      %v402 = vunpack.c.l.b16 %v370
      %v403 = vunpack.c.l.b16 %v371
      %v404 = vunpack.c.l.b16 %v372
      %v405 = vunpack.c.l.b16 %v373
      %v406 = vunpack.c.l.b16 %v374
      %v407 = vunpack.c.l.b16 %v375
      %v408 = vunpack.c.l.b16 %v376
      %v409 = vunpack.c.l.b16 %v377
      %v410 = vunpack.c.l.b16 %v378
      %v411 = vunpack.c.l.b16 %v379
      %v412 = vunpack.c.l.b16 %v380
      %v413 = vunpack.c.l.b16 %v381
      %v414 = vunpack.c.l.b16 %v382
      %v415 = vpack.c.b16 %v400, %v399
      %v416 = vpack.c.b16 %v402, %v401
      %v417 = vpack.c.b16 %v404, %v403
      %v418 = vpack.c.b16 %v406, %v405
      %v419 = vpack.c.b16 %v408, %v407
      %v420 = vpack.c.b16 %v410, %v409
      %v421 = vpack.c.b16 %v412, %v411
      %v422 = vpack.c.b16 %v414, %v413
      %431 = vmatprep.subr.bf16.mxu0 0
      %432 = vmatpush1.bf16.msra.mxu0 %v422
      %433 = vmatprep.subr.bf16.mxu0 0
      %434 = vmatpush1.bf16.msra.mxu0 %v421
      %435 = vmatprep.subr.bf16.mxu0 0
      %436 = vmatpush1.bf16.msra.mxu0 %v420
      %437 = vmatprep.subr.bf16.mxu0 0
      %438 = vmatpush1.bf16.msra.mxu0 %v419
      %439 = vmatprep.subr.bf16.mxu0 0
      %440 = vmatpush1.bf16.msra.mxu0 %v418
      %441 = vmatprep.subr.bf16.mxu0 0
      %442 = vmatpush1.bf16.msra.mxu0 %v417
      %443 = vmatprep.subr.bf16.mxu0 0
      %444 = vmatpush1.bf16.msra.mxu0 %v416
      %445 = vmatprep.subr.bf16.mxu0 0
      %446 = vmatpush1.bf16.msra.mxu0 %v415
      %447 = vmatprep.subr.bf16.mxu0 0
      %448 = vmatpush2.bf16.msra.mxu0 0
      %449 = vmatprep.subr.bf16.mxu0 0
      %450 = vmatpush2.bf16.msra.mxu0 0
      %451 = vmatprep.subr.bf16.mxu0 0
      %452 = vmatpush2.bf16.msra.mxu0 0
      %453 = vmatprep.subr.bf16.mxu0 0
      %454 = vmatpush2.bf16.msra.mxu0 0
      %455 = vmatprep.subr.bf16.mxu0 0
      %456 = vmatpush2.bf16.msra.mxu0 0
      %457 = vmatprep.subr.bf16.mxu0 0
      %458 = vmatpush2.bf16.msra.mxu0 0
      %459 = vmatprep.subr.bf16.mxu0 0
      %460 = vmatpush2.bf16.msra.mxu0 0
      %461 = vmatprep.subr.bf16.mxu0 0
      %462 = vmatpush2.bf16.msra.mxu0 0
      %463 = vmatprep.mubr.bf16.mxu0 0
      %464 = vmatmul.mubr.bf16.gmra.mxu0 %v363
      %v465 = vpop.f32.mrf.mxu0
      %v466 = vadd.f32 0.0, %v465
      %v467 = vpop.f32.mrf.mxu0
      %v468 = vpop.f32.mrf.mxu0
      %v469 = vadd.f32 0.0, %v468
      %v470 = vpop.f32.mrf.mxu0
      %471 = vmatprep.mubr.bf16.mxu0 0
      %472 = vmatmul.mubr.bf16.gmra.mxu0 %v364
      %v473 = vpop.f32.mrf.mxu0
      %v474 = vadd.f32 0.0, %v473
      %v475 = vpop.f32.mrf.mxu0
      %v476 = vpop.f32.mrf.mxu0
      %v477 = vadd.f32 0.0, %v476
      %v478 = vpop.f32.mrf.mxu0
      %479 = vmatprep.mubr.bf16.mxu0 0
      %480 = vmatmul.mubr.bf16.gmra.mxu0 %v365
      %v481 = vpop.f32.mrf.mxu0
      %v482 = vadd.f32 0.0, %v481
      %v483 = vpop.f32.mrf.mxu0
      %v484 = vpop.f32.mrf.mxu0
      %v485 = vadd.f32 0.0, %v484
      %v486 = vpop.f32.mrf.mxu0
      %487 = vmatprep.mubr.bf16.mxu0 0
      %488 = vmatmul.mubr.bf16.gmra.mxu0 %v366
      %v489 = vpop.f32.mrf.mxu0
      %v490 = vadd.f32 0.0, %v489
      %v491 = vpop.f32.mrf.mxu0
      %v492 = vpop.f32.mrf.mxu0
      %v493 = vadd.f32 0.0, %v492
      %v494 = vpop.f32.mrf.mxu0
      %495 = vdwg.mxu0
      %496 = vst [vmem:[%s262] sm:$0xff] %v466
      %497 = vst [vmem:[%s262 + $0x8] sm:$0xff] %v469
      %498 = vst [vmem:[%s262 + $0x10] sm:$0xff] %v474
      %499 = vst [vmem:[%s262 + $0x18] sm:$0xff] %v477
      %500 = vst [vmem:[%s262 + $0x20] sm:$0xff] %v482
      %501 = vst [vmem:[%s262 + $0x28] sm:$0xff] %v485
      %502 = vst [vmem:[%s262 + $0x30] sm:$0xff] %v490
      %503 = vst [vmem:[%s262 + $0x38] sm:$0xff] %v493
      %v504 = vld [vmem:[#allocation2 + $0x8] sm:$0xff]
      %v505 = vld [vmem:[#allocation2 + $0x20] sm:$0xff]
      %v506 = vld [vmem:[#allocation2 + $0x38] sm:$0xff]
      %v507 = vld [vmem:[#allocation2 + $0x50] sm:$0xff]
      %v508 = vld [vmem:[#allocation2 + $0x68] sm:$0xff]
      %v509 = vld [vmem:[#allocation2 + $0x80] sm:$0xff]
      %v510 = vld [vmem:[#allocation2 + $0x98] sm:$0xff]
      %v511 = vld [vmem:[#allocation2 + $0xb0] sm:$0xff]
      %v512 = vpack.c.bf16 %v505, %v504
      %v513 = vpack.c.bf16 %v507, %v506
      %v514 = vpack.c.bf16 %v509, %v508
      %v515 = vpack.c.bf16 %v511, %v510
      %s516 = scalar_lea.vmem %s3, 64
      %v517 = vld [vmem:[%s516] sm:$0xf]
      %v518 = vld [vmem:[%s516 + $0x4] sm:$0xf]
      %v519 = vld [vmem:[%s516 + $0x8] sm:$0xf]
      %v520 = vld [vmem:[%s516 + $0xc] sm:$0xf]
      %v521 = vld [vmem:[%s516 + $0x10] sm:$0xf]
      %v522 = vld [vmem:[%s516 + $0x14] sm:$0xf]
      %v523 = vld [vmem:[%s516 + $0x18] sm:$0xf]
      %v524 = vld [vmem:[%s516 + $0x1c] sm:$0xf]
      %v525 = vld [vmem:[%s516 + $0x20] sm:$0xf]
      %v526 = vld [vmem:[%s516 + $0x24] sm:$0xf]
      %v527 = vld [vmem:[%s516 + $0x28] sm:$0xf]
      %v528 = vld [vmem:[%s516 + $0x2c] sm:$0xf]
      %v529 = vld [vmem:[%s516 + $0x30] sm:$0xf]
      %v530 = vld [vmem:[%s516 + $0x34] sm:$0xf]
      %v531 = vld [vmem:[%s516 + $0x38] sm:$0xf]
      %v532 = vld [vmem:[%s516 + $0x3c] sm:$0xf]
      %v549 = vunpack.c.l.b16 %v517
      %v550 = vunpack.c.l.b16 %v518
      %v551 = vunpack.c.l.b16 %v519
      %v552 = vunpack.c.l.b16 %v520
      %v553 = vunpack.c.l.b16 %v521
      %v554 = vunpack.c.l.b16 %v522
      %v555 = vunpack.c.l.b16 %v523
      %v556 = vunpack.c.l.b16 %v524
      %v557 = vunpack.c.l.b16 %v525
      %v558 = vunpack.c.l.b16 %v526
      %v559 = vunpack.c.l.b16 %v527
      %v560 = vunpack.c.l.b16 %v528
      %v561 = vunpack.c.l.b16 %v529
      %v562 = vunpack.c.l.b16 %v530
      %v563 = vunpack.c.l.b16 %v531
      %v564 = vunpack.c.l.b16 %v532
      %v565 = vpack.c.b16 %v550, %v549
      %v566 = vpack.c.b16 %v552, %v551
      %v567 = vpack.c.b16 %v554, %v553
      %v568 = vpack.c.b16 %v556, %v555
      %v569 = vpack.c.b16 %v558, %v557
      %v570 = vpack.c.b16 %v560, %v559
      %v571 = vpack.c.b16 %v562, %v561
      %v572 = vpack.c.b16 %v564, %v563
      %581 = vmatprep.subr.bf16.mxu0 0
      %582 = vmatpush1.bf16.msra.mxu0 %v572
      %583 = vmatprep.subr.bf16.mxu0 0
      %584 = vmatpush1.bf16.msra.mxu0 %v571
      %585 = vmatprep.subr.bf16.mxu0 0
      %586 = vmatpush1.bf16.msra.mxu0 %v570
      %587 = vmatprep.subr.bf16.mxu0 0
      %588 = vmatpush1.bf16.msra.mxu0 %v569
      %589 = vmatprep.subr.bf16.mxu0 0
      %590 = vmatpush1.bf16.msra.mxu0 %v568
      %591 = vmatprep.subr.bf16.mxu0 0
      %592 = vmatpush1.bf16.msra.mxu0 %v567
      %593 = vmatprep.subr.bf16.mxu0 0
      %594 = vmatpush1.bf16.msra.mxu0 %v566
      %595 = vmatprep.subr.bf16.mxu0 0
      %596 = vmatpush1.bf16.msra.mxu0 %v565
      %597 = vmatprep.subr.bf16.mxu0 0
      %598 = vmatpush2.bf16.msra.mxu0 0
      %599 = vmatprep.subr.bf16.mxu0 0
      %600 = vmatpush2.bf16.msra.mxu0 0
      %601 = vmatprep.subr.bf16.mxu0 0
      %602 = vmatpush2.bf16.msra.mxu0 0
      %603 = vmatprep.subr.bf16.mxu0 0
      %604 = vmatpush2.bf16.msra.mxu0 0
      %605 = vmatprep.subr.bf16.mxu0 0
      %606 = vmatpush2.bf16.msra.mxu0 0
      %607 = vmatprep.subr.bf16.mxu0 0
      %608 = vmatpush2.bf16.msra.mxu0 0
      %609 = vmatprep.subr.bf16.mxu0 0
      %610 = vmatpush2.bf16.msra.mxu0 0
      %611 = vmatprep.subr.bf16.mxu0 0
      %612 = vmatpush2.bf16.msra.mxu0 0
      %613 = vmatprep.mubr.bf16.mxu0 0
      %614 = vmatmul.mubr.bf16.gmra.mxu0 %v512
      %v615 = vpop.f32.mrf.mxu0
      %v616 = vadd.f32 0.0, %v615
      %v617 = vpop.f32.mrf.mxu0
      %v618 = vpop.f32.mrf.mxu0
      %v619 = vadd.f32 0.0, %v618
      %v620 = vpop.f32.mrf.mxu0
      %621 = vmatprep.mubr.bf16.mxu0 0
      %622 = vmatmul.mubr.bf16.gmra.mxu0 %v513
      %v623 = vpop.f32.mrf.mxu0
      %v624 = vadd.f32 0.0, %v623
      %v625 = vpop.f32.mrf.mxu0
      %v626 = vpop.f32.mrf.mxu0
      %v627 = vadd.f32 0.0, %v626
      %v628 = vpop.f32.mrf.mxu0
      %629 = vmatprep.mubr.bf16.mxu0 0
      %630 = vmatmul.mubr.bf16.gmra.mxu0 %v514
      %v631 = vpop.f32.mrf.mxu0
      %v632 = vadd.f32 0.0, %v631
      %v633 = vpop.f32.mrf.mxu0
      %v634 = vpop.f32.mrf.mxu0
      %v635 = vadd.f32 0.0, %v634
      %v636 = vpop.f32.mrf.mxu0
      %637 = vmatprep.mubr.bf16.mxu0 0
      %638 = vmatmul.mubr.bf16.gmra.mxu0 %v515
      %v639 = vpop.f32.mrf.mxu0
      %v640 = vadd.f32 0.0, %v639
      %v641 = vpop.f32.mrf.mxu0
      %v642 = vpop.f32.mrf.mxu0
      %v643 = vadd.f32 0.0, %v642
      %v644 = vpop.f32.mrf.mxu0
      %645 = vdwg.mxu0
      %v646 = vld [vmem:[%s262] sm:$0xff]
      %v647 = vld [vmem:[%s262 + $0x8] sm:$0xff]
      %v648 = vld [vmem:[%s262 + $0x10] sm:$0xff]
      %v649 = vld [vmem:[%s262 + $0x18] sm:$0xff]
      %v650 = vld [vmem:[%s262 + $0x20] sm:$0xff]
      %v651 = vld [vmem:[%s262 + $0x28] sm:$0xff]
      %v652 = vld [vmem:[%s262 + $0x30] sm:$0xff]
      %v653 = vld [vmem:[%s262 + $0x38] sm:$0xff]
      %v654 = vadd.f32 %v646, %v616
      %v655 = vadd.f32 %v647, %v619
      %v656 = vadd.f32 %v648, %v624
      %v657 = vadd.f32 %v649, %v627
      %v658 = vadd.f32 %v650, %v632
      %v659 = vadd.f32 %v651, %v635
      %v660 = vadd.f32 %v652, %v640
      %v661 = vadd.f32 %v653, %v643
      %662 = vst [vmem:[%s262] sm:$0xff] %v654
      %663 = vst [vmem:[%s262 + $0x8] sm:$0xff] %v655
      %664 = vst [vmem:[%s262 + $0x10] sm:$0xff] %v656
      %665 = vst [vmem:[%s262 + $0x18] sm:$0xff] %v657
      %666 = vst [vmem:[%s262 + $0x20] sm:$0xff] %v658
      %667 = vst [vmem:[%s262 + $0x28] sm:$0xff] %v659
      %668 = vst [vmem:[%s262 + $0x30] sm:$0xff] %v660
      %669 = vst [vmem:[%s262 + $0x38] sm:$0xff] %v661
      %v670 = vld [vmem:[#allocation2 + $0x9] sm:$0xff]
      %v671 = vld [vmem:[#allocation2 + $0x21] sm:$0xff]
      %v672 = vld [vmem:[#allocation2 + $0x39] sm:$0xff]
      %v673 = vld [vmem:[#allocation2 + $0x51] sm:$0xff]
      %v674 = vld [vmem:[#allocation2 + $0x69] sm:$0xff]
      %v675 = vld [vmem:[#allocation2 + $0x81] sm:$0xff]
      %v676 = vld [vmem:[#allocation2 + $0x99] sm:$0xff]
      %v677 = vld [vmem:[#allocation2 + $0xb1] sm:$0xff]
      %v678 = vpack.c.bf16 %v671, %v670
      %v679 = vpack.c.bf16 %v673, %v672
      %v680 = vpack.c.bf16 %v675, %v674
      %v681 = vpack.c.bf16 %v677, %v676
      %s682 = scalar_lea.vmem %s3, 128
      %v683 = vld [vmem:[%s682] sm:$0xf]
      %v684 = vld [vmem:[%s682 + $0x4] sm:$0xf]
      %v685 = vld [vmem:[%s682 + $0x8] sm:$0xf]
      %v686 = vld [vmem:[%s682 + $0xc] sm:$0xf]
      %v687 = vld [vmem:[%s682 + $0x10] sm:$0xf]
      %v688 = vld [vmem:[%s682 + $0x14] sm:$0xf]
      %v689 = vld [vmem:[%s682 + $0x18] sm:$0xf]
      %v690 = vld [vmem:[%s682 + $0x1c] sm:$0xf]
      %v691 = vld [vmem:[%s682 + $0x20] sm:$0xf]
      %v692 = vld [vmem:[%s682 + $0x24] sm:$0xf]
      %v693 = vld [vmem:[%s682 + $0x28] sm:$0xf]
      %v694 = vld [vmem:[%s682 + $0x2c] sm:$0xf]
      %v695 = vld [vmem:[%s682 + $0x30] sm:$0xf]
      %v696 = vld [vmem:[%s682 + $0x34] sm:$0xf]
      %v697 = vld [vmem:[%s682 + $0x38] sm:$0xf]
      %v698 = vld [vmem:[%s682 + $0x3c] sm:$0xf]
      %v715 = vunpack.c.l.b16 %v683
      %v716 = vunpack.c.l.b16 %v684
      %v717 = vunpack.c.l.b16 %v685
      %v718 = vunpack.c.l.b16 %v686
      %v719 = vunpack.c.l.b16 %v687
      %v720 = vunpack.c.l.b16 %v688
      %v721 = vunpack.c.l.b16 %v689
      %v722 = vunpack.c.l.b16 %v690
      %v723 = vunpack.c.l.b16 %v691
      %v724 = vunpack.c.l.b16 %v692
      %v725 = vunpack.c.l.b16 %v693
      %v726 = vunpack.c.l.b16 %v694
      %v727 = vunpack.c.l.b16 %v695
      %v728 = vunpack.c.l.b16 %v696
      %v729 = vunpack.c.l.b16 %v697
      %v730 = vunpack.c.l.b16 %v698
      %v731 = vpack.c.b16 %v716, %v715
      %v732 = vpack.c.b16 %v718, %v717
      %v733 = vpack.c.b16 %v720, %v719
      %v734 = vpack.c.b16 %v722, %v721
      %v735 = vpack.c.b16 %v724, %v723
      %v736 = vpack.c.b16 %v726, %v725
      %v737 = vpack.c.b16 %v728, %v727
      %v738 = vpack.c.b16 %v730, %v729
      %747 = vmatprep.subr.bf16.mxu0 0
      %748 = vmatpush1.bf16.msra.mxu0 %v738
      %749 = vmatprep.subr.bf16.mxu0 0
      %750 = vmatpush1.bf16.msra.mxu0 %v737
      %751 = vmatprep.subr.bf16.mxu0 0
      %752 = vmatpush1.bf16.msra.mxu0 %v736
      %753 = vmatprep.subr.bf16.mxu0 0
      %754 = vmatpush1.bf16.msra.mxu0 %v735
      %755 = vmatprep.subr.bf16.mxu0 0
      %756 = vmatpush1.bf16.msra.mxu0 %v734
      %757 = vmatprep.subr.bf16.mxu0 0
      %758 = vmatpush1.bf16.msra.mxu0 %v733
      %759 = vmatprep.subr.bf16.mxu0 0
      %760 = vmatpush1.bf16.msra.mxu0 %v732
      %761 = vmatprep.subr.bf16.mxu0 0
      %762 = vmatpush1.bf16.msra.mxu0 %v731
      %763 = vmatprep.subr.bf16.mxu0 0
      %764 = vmatpush2.bf16.msra.mxu0 0
      %765 = vmatprep.subr.bf16.mxu0 0
      %766 = vmatpush2.bf16.msra.mxu0 0
      %767 = vmatprep.subr.bf16.mxu0 0
      %768 = vmatpush2.bf16.msra.mxu0 0
      %769 = vmatprep.subr.bf16.mxu0 0
      %770 = vmatpush2.bf16.msra.mxu0 0
      %771 = vmatprep.subr.bf16.mxu0 0
      %772 = vmatpush2.bf16.msra.mxu0 0
      %773 = vmatprep.subr.bf16.mxu0 0
      %774 = vmatpush2.bf16.msra.mxu0 0
      %775 = vmatprep.subr.bf16.mxu0 0
      %776 = vmatpush2.bf16.msra.mxu0 0
      %777 = vmatprep.subr.bf16.mxu0 0
      %778 = vmatpush2.bf16.msra.mxu0 0
      %779 = vmatprep.mubr.bf16.mxu0 0
      %780 = vmatmul.mubr.bf16.gmra.mxu0 %v678
      %v781 = vpop.f32.mrf.mxu0
      %v782 = vadd.f32 0.0, %v781
      %v783 = vpop.f32.mrf.mxu0
      %v784 = vpop.f32.mrf.mxu0
      %v785 = vadd.f32 0.0, %v784
      %v786 = vpop.f32.mrf.mxu0
      %787 = vmatprep.mubr.bf16.mxu0 0
      %788 = vmatmul.mubr.bf16.gmra.mxu0 %v679
      %v789 = vpop.f32.mrf.mxu0
      %v790 = vadd.f32 0.0, %v789
      %v791 = vpop.f32.mrf.mxu0
      %v792 = vpop.f32.mrf.mxu0
      %v793 = vadd.f32 0.0, %v792
      %v794 = vpop.f32.mrf.mxu0
      %795 = vmatprep.mubr.bf16.mxu0 0
      %796 = vmatmul.mubr.bf16.gmra.mxu0 %v680
      %v797 = vpop.f32.mrf.mxu0
      %v798 = vadd.f32 0.0, %v797
      %v799 = vpop.f32.mrf.mxu0
      %v800 = vpop.f32.mrf.mxu0
      %v801 = vadd.f32 0.0, %v800
      %v802 = vpop.f32.mrf.mxu0
      %803 = vmatprep.mubr.bf16.mxu0 0
      %804 = vmatmul.mubr.bf16.gmra.mxu0 %v681
      %v805 = vpop.f32.mrf.mxu0
      %v806 = vadd.f32 0.0, %v805
      %v807 = vpop.f32.mrf.mxu0
      %v808 = vpop.f32.mrf.mxu0
      %v809 = vadd.f32 0.0, %v808
      %v810 = vpop.f32.mrf.mxu0
      %811 = vdwg.mxu0
      %v812 = vld [vmem:[%s262] sm:$0xff]
      %v813 = vld [vmem:[%s262 + $0x8] sm:$0xff]
      %v814 = vld [vmem:[%s262 + $0x10] sm:$0xff]
      %v815 = vld [vmem:[%s262 + $0x18] sm:$0xff]
      %v816 = vld [vmem:[%s262 + $0x20] sm:$0xff]
      %v817 = vld [vmem:[%s262 + $0x28] sm:$0xff]
      %v818 = vld [vmem:[%s262 + $0x30] sm:$0xff]
      %v819 = vld [vmem:[%s262 + $0x38] sm:$0xff]
      %v820 = vadd.f32 %v812, %v782
      %v821 = vadd.f32 %v813, %v785
      %v822 = vadd.f32 %v814, %v790
      %v823 = vadd.f32 %v815, %v793
      %v824 = vadd.f32 %v816, %v798
      %v825 = vadd.f32 %v817, %v801
      %v826 = vadd.f32 %v818, %v806
      %v827 = vadd.f32 %v819, %v809
      %828 = vst [vmem:[%s262] sm:$0xff] %v820
      %829 = vst [vmem:[%s262 + $0x8] sm:$0xff] %v821
      %830 = vst [vmem:[%s262 + $0x10] sm:$0xff] %v822
      %831 = vst [vmem:[%s262 + $0x18] sm:$0xff] %v823
      %832 = vst [vmem:[%s262 + $0x20] sm:$0xff] %v824
      %833 = vst [vmem:[%s262 + $0x28] sm:$0xff] %v825
      %834 = vst [vmem:[%s262 + $0x30] sm:$0xff] %v826
      %835 = vst [vmem:[%s262 + $0x38] sm:$0xff] %v827
      %v836 = vld [vmem:[%s346 + $0x7] sm:$0xff]
      %v837 = vld [vmem:[%s346 + $0x1f] sm:$0xff]
      %v838 = vld [vmem:[%s346 + $0x37] sm:$0xff]
      %v839 = vld [vmem:[%s346 + $0x4f] sm:$0xff]
      %v840 = vld [vmem:[%s346 + $0x67] sm:$0xff]
      %v841 = vld [vmem:[%s346 + $0x7f] sm:$0xff]
      %v842 = vld [vmem:[%s346 + $0x97] sm:$0xff]
      %v843 = vld [vmem:[%s346 + $0xaf] sm:$0xff]
      %v844 = vpack.c.bf16 %v837, %v836
      %v845 = vpack.c.bf16 %v839, %v838
      %v846 = vpack.c.bf16 %v841, %v840
      %v847 = vpack.c.bf16 %v843, %v842
      %s848 = scalar_lea.vmem %s3, 192
      %v849 = vld [vmem:[%s848] sm:$0xf]
      %v850 = vld [vmem:[%s848 + $0x4] sm:$0xf]
      %v851 = vld [vmem:[%s848 + $0x8] sm:$0xf]
      %v852 = vld [vmem:[%s848 + $0xc] sm:$0xf]
      %v853 = vld [vmem:[%s848 + $0x10] sm:$0xf]
      %v854 = vld [vmem:[%s848 + $0x14] sm:$0xf]
      %v855 = vld [vmem:[%s848 + $0x18] sm:$0xf]
      %v856 = vld [vmem:[%s848 + $0x1c] sm:$0xf]
      %v857 = vld [vmem:[%s848 + $0x20] sm:$0xf]
      %v858 = vld [vmem:[%s848 + $0x24] sm:$0xf]
      %v859 = vld [vmem:[%s848 + $0x28] sm:$0xf]
      %v860 = vld [vmem:[%s848 + $0x2c] sm:$0xf]
      %v861 = vld [vmem:[%s848 + $0x30] sm:$0xf]
      %v862 = vld [vmem:[%s848 + $0x34] sm:$0xf]
      %v863 = vld [vmem:[%s848 + $0x38] sm:$0xf]
      %v864 = vld [vmem:[%s848 + $0x3c] sm:$0xf]
      %v881 = vunpack.c.l.b16 %v849
      %v882 = vunpack.c.l.b16 %v850
      %v883 = vunpack.c.l.b16 %v851
      %v884 = vunpack.c.l.b16 %v852
      %v885 = vunpack.c.l.b16 %v853
      %v886 = vunpack.c.l.b16 %v854
      %v887 = vunpack.c.l.b16 %v855
      %v888 = vunpack.c.l.b16 %v856
      %v889 = vunpack.c.l.b16 %v857
      %v890 = vunpack.c.l.b16 %v858
      %v891 = vunpack.c.l.b16 %v859
      %v892 = vunpack.c.l.b16 %v860
      %v893 = vunpack.c.l.b16 %v861
      %v894 = vunpack.c.l.b16 %v862
      %v895 = vunpack.c.l.b16 %v863
      %v896 = vunpack.c.l.b16 %v864
      %v897 = vpack.c.b16 %v882, %v881
      %v898 = vpack.c.b16 %v884, %v883
      %v899 = vpack.c.b16 %v886, %v885
      %v900 = vpack.c.b16 %v888, %v887
      %v901 = vpack.c.b16 %v890, %v889
      %v902 = vpack.c.b16 %v892, %v891
      %v903 = vpack.c.b16 %v894, %v893
      %v904 = vpack.c.b16 %v896, %v895
      %913 = vmatprep.subr.bf16.mxu0 0
      %914 = vmatpush1.bf16.msra.mxu0 %v904
      %915 = vmatprep.subr.bf16.mxu0 0
      %916 = vmatpush1.bf16.msra.mxu0 %v903
      %917 = vmatprep.subr.bf16.mxu0 0
      %918 = vmatpush1.bf16.msra.mxu0 %v902
      %919 = vmatprep.subr.bf16.mxu0 0
      %920 = vmatpush1.bf16.msra.mxu0 %v901
      %921 = vmatprep.subr.bf16.mxu0 0
      %922 = vmatpush1.bf16.msra.mxu0 %v900
      %923 = vmatprep.subr.bf16.mxu0 0
      %924 = vmatpush1.bf16.msra.mxu0 %v899
      %925 = vmatprep.subr.bf16.mxu0 0
      %926 = vmatpush1.bf16.msra.mxu0 %v898
      %927 = vmatprep.subr.bf16.mxu0 0
      %928 = vmatpush1.bf16.msra.mxu0 %v897
      %929 = vmatprep.subr.bf16.mxu0 0
      %930 = vmatpush2.bf16.msra.mxu0 0
      %931 = vmatprep.subr.bf16.mxu0 0
      %932 = vmatpush2.bf16.msra.mxu0 0
      %933 = vmatprep.subr.bf16.mxu0 0
      %934 = vmatpush2.bf16.msra.mxu0 0
      %935 = vmatprep.subr.bf16.mxu0 0
      %936 = vmatpush2.bf16.msra.mxu0 0
      %937 = vmatprep.subr.bf16.mxu0 0
      %938 = vmatpush2.bf16.msra.mxu0 0
      %939 = vmatprep.subr.bf16.mxu0 0
      %940 = vmatpush2.bf16.msra.mxu0 0
      %941 = vmatprep.subr.bf16.mxu0 0
      %942 = vmatpush2.bf16.msra.mxu0 0
      %943 = vmatprep.subr.bf16.mxu0 0
      %944 = vmatpush2.bf16.msra.mxu0 0
      %945 = vmatprep.mubr.bf16.mxu0 0
      %946 = vmatmul.mubr.bf16.gmra.mxu0 %v844
      %v947 = vpop.f32.mrf.mxu0
      %v948 = vadd.f32 0.0, %v947
      %v949 = vpop.f32.mrf.mxu0
      %v950 = vpop.f32.mrf.mxu0
      %v951 = vadd.f32 0.0, %v950
      %v952 = vpop.f32.mrf.mxu0
      %953 = vmatprep.mubr.bf16.mxu0 0
      %954 = vmatmul.mubr.bf16.gmra.mxu0 %v845
      %v955 = vpop.f32.mrf.mxu0
      %v956 = vadd.f32 0.0, %v955
      %v957 = vpop.f32.mrf.mxu0
      %v958 = vpop.f32.mrf.mxu0
      %v959 = vadd.f32 0.0, %v958
      %v960 = vpop.f32.mrf.mxu0
      %961 = vmatprep.mubr.bf16.mxu0 0
      %962 = vmatmul.mubr.bf16.gmra.mxu0 %v846
      %v963 = vpop.f32.mrf.mxu0
      %v964 = vadd.f32 0.0, %v963
      %v965 = vpop.f32.mrf.mxu0
      %v966 = vpop.f32.mrf.mxu0
      %v967 = vadd.f32 0.0, %v966
      %v968 = vpop.f32.mrf.mxu0
      %969 = vmatprep.mubr.bf16.mxu0 0
      %970 = vmatmul.mubr.bf16.gmra.mxu0 %v847
      %v971 = vpop.f32.mrf.mxu0
      %v972 = vadd.f32 0.0, %v971
      %v973 = vpop.f32.mrf.mxu0
      %v974 = vpop.f32.mrf.mxu0
      %v975 = vadd.f32 0.0, %v974
      %v976 = vpop.f32.mrf.mxu0
      %977 = vdwg.mxu0
      %v978 = vld [vmem:[%s262] sm:$0xff]
      %v979 = vld [vmem:[%s262 + $0x8] sm:$0xff]
      %v980 = vld [vmem:[%s262 + $0x10] sm:$0xff]
      %v981 = vld [vmem:[%s262 + $0x18] sm:$0xff]
      %v982 = vld [vmem:[%s262 + $0x20] sm:$0xff]
      %v983 = vld [vmem:[%s262 + $0x28] sm:$0xff]
      %v984 = vld [vmem:[%s262 + $0x30] sm:$0xff]
      %v985 = vld [vmem:[%s262 + $0x38] sm:$0xff]
      %v986 = vadd.f32 %v978, %v948
      %v987 = vadd.f32 %v979, %v951
      %v988 = vadd.f32 %v980, %v956
      %v989 = vadd.f32 %v981, %v959
      %v990 = vadd.f32 %v982, %v964
      %v991 = vadd.f32 %v983, %v967
      %v992 = vadd.f32 %v984, %v972
      %v993 = vadd.f32 %v985, %v975
      %994 = vst [vmem:[%s262] sm:$0xff] %v986
      %995 = vst [vmem:[%s262 + $0x8] sm:$0xff] %v987
      %996 = vst [vmem:[%s262 + $0x10] sm:$0xff] %v988
      %997 = vst [vmem:[%s262 + $0x18] sm:$0xff] %v989
      %998 = vst [vmem:[%s262 + $0x20] sm:$0xff] %v990
      %999 = vst [vmem:[%s262 + $0x28] sm:$0xff] %v991
      %1000 = vst [vmem:[%s262 + $0x30] sm:$0xff] %v992
      %1001 = vst [vmem:[%s262 + $0x38] sm:$0xff] %v993
      %v1002 = vld [vmem:[%s346 + $0x8] sm:$0xff]
      %v1003 = vld [vmem:[%s346 + $0x20] sm:$0xff]
      %v1004 = vld [vmem:[%s346 + $0x38] sm:$0xff]
      %v1005 = vld [vmem:[%s346 + $0x50] sm:$0xff]
      %v1006 = vld [vmem:[%s346 + $0x68] sm:$0xff]
      %v1007 = vld [vmem:[%s346 + $0x80] sm:$0xff]
      %v1008 = vld [vmem:[%s346 + $0x98] sm:$0xff]
      %v1009 = vld [vmem:[%s346 + $0xb0] sm:$0xff]
      %v1010 = vpack.c.bf16 %v1003, %v1002
      %v1011 = vpack.c.bf16 %v1005, %v1004
      %v1012 = vpack.c.bf16 %v1007, %v1006
      %v1013 = vpack.c.bf16 %v1009, %v1008
      %s1014 = scalar_lea.vmem %s3, 256
      %v1015 = vld [vmem:[%s1014] sm:$0xf]
      %v1016 = vld [vmem:[%s1014 + $0x4] sm:$0xf]
      %v1017 = vld [vmem:[%s1014 + $0x8] sm:$0xf]
      %v1018 = vld [vmem:[%s1014 + $0xc] sm:$0xf]
      %v1019 = vld [vmem:[%s1014 + $0x10] sm:$0xf]
      %v1020 = vld [vmem:[%s1014 + $0x14] sm:$0xf]
      %v1021 = vld [vmem:[%s1014 + $0x18] sm:$0xf]
      %v1022 = vld [vmem:[%s1014 + $0x1c] sm:$0xf]
      %v1023 = vld [vmem:[%s1014 + $0x20] sm:$0xf]
      %v1024 = vld [vmem:[%s1014 + $0x24] sm:$0xf]
      %v1025 = vld [vmem:[%s1014 + $0x28] sm:$0xf]
      %v1026 = vld [vmem:[%s1014 + $0x2c] sm:$0xf]
      %v1027 = vld [vmem:[%s1014 + $0x30] sm:$0xf]
      %v1028 = vld [vmem:[%s1014 + $0x34] sm:$0xf]
      %v1029 = vld [vmem:[%s1014 + $0x38] sm:$0xf]
      %v1030 = vld [vmem:[%s1014 + $0x3c] sm:$0xf]
      %v1047 = vunpack.c.l.b16 %v1015
      %v1048 = vunpack.c.l.b16 %v1016
      %v1049 = vunpack.c.l.b16 %v1017
      %v1050 = vunpack.c.l.b16 %v1018
      %v1051 = vunpack.c.l.b16 %v1019
      %v1052 = vunpack.c.l.b16 %v1020
      %v1053 = vunpack.c.l.b16 %v1021
      %v1054 = vunpack.c.l.b16 %v1022
      %v1055 = vunpack.c.l.b16 %v1023
      %v1056 = vunpack.c.l.b16 %v1024
      %v1057 = vunpack.c.l.b16 %v1025
      %v1058 = vunpack.c.l.b16 %v1026
      %v1059 = vunpack.c.l.b16 %v1027
      %v1060 = vunpack.c.l.b16 %v1028
      %v1061 = vunpack.c.l.b16 %v1029
      %v1062 = vunpack.c.l.b16 %v1030
      %v1063 = vpack.c.b16 %v1048, %v1047
      %v1064 = vpack.c.b16 %v1050, %v1049
      %v1065 = vpack.c.b16 %v1052, %v1051
      %v1066 = vpack.c.b16 %v1054, %v1053
      %v1067 = vpack.c.b16 %v1056, %v1055
      %v1068 = vpack.c.b16 %v1058, %v1057
      %v1069 = vpack.c.b16 %v1060, %v1059
      %v1070 = vpack.c.b16 %v1062, %v1061
      %1079 = vmatprep.subr.bf16.mxu0 0
      %1080 = vmatpush1.bf16.msra.mxu0 %v1070
      %1081 = vmatprep.subr.bf16.mxu0 0
      %1082 = vmatpush1.bf16.msra.mxu0 %v1069
      %1083 = vmatprep.subr.bf16.mxu0 0
      %1084 = vmatpush1.bf16.msra.mxu0 %v1068
      %1085 = vmatprep.subr.bf16.mxu0 0
      %1086 = vmatpush1.bf16.msra.mxu0 %v1067
      %1087 = vmatprep.subr.bf16.mxu0 0
      %1088 = vmatpush1.bf16.msra.mxu0 %v1066
      %1089 = vmatprep.subr.bf16.mxu0 0
      %1090 = vmatpush1.bf16.msra.mxu0 %v1065
      %1091 = vmatprep.subr.bf16.mxu0 0
      %1092 = vmatpush1.bf16.msra.mxu0 %v1064
      %1093 = vmatprep.subr.bf16.mxu0 0
      %1094 = vmatpush1.bf16.msra.mxu0 %v1063
      %1095 = vmatprep.subr.bf16.mxu0 0
      %1096 = vmatpush2.bf16.msra.mxu0 0
      %1097 = vmatprep.subr.bf16.mxu0 0
      %1098 = vmatpush2.bf16.msra.mxu0 0
      %1099 = vmatprep.subr.bf16.mxu0 0
      %1100 = vmatpush2.bf16.msra.mxu0 0
      %1101 = vmatprep.subr.bf16.mxu0 0
      %1102 = vmatpush2.bf16.msra.mxu0 0
      %1103 = vmatprep.subr.bf16.mxu0 0
      %1104 = vmatpush2.bf16.msra.mxu0 0
      %1105 = vmatprep.subr.bf16.mxu0 0
      %1106 = vmatpush2.bf16.msra.mxu0 0
      %1107 = vmatprep.subr.bf16.mxu0 0
      %1108 = vmatpush2.bf16.msra.mxu0 0
      %1109 = vmatprep.subr.bf16.mxu0 0
      %1110 = vmatpush2.bf16.msra.mxu0 0
      %1111 = vmatprep.mubr.bf16.mxu0 0
      %1112 = vmatmul.mubr.bf16.gmra.mxu0 %v1010
      %v1113 = vpop.f32.mrf.mxu0
      %v1114 = vadd.f32 0.0, %v1113
      %v1115 = vpop.f32.mrf.mxu0
      %v1116 = vpop.f32.mrf.mxu0
      %v1117 = vadd.f32 0.0, %v1116
      %v1118 = vpop.f32.mrf.mxu0
      %1119 = vmatprep.mubr.bf16.mxu0 0
      %1120 = vmatmul.mubr.bf16.gmra.mxu0 %v1011
      %v1121 = vpop.f32.mrf.mxu0
      %v1122 = vadd.f32 0.0, %v1121
      %v1123 = vpop.f32.mrf.mxu0
      %v1124 = vpop.f32.mrf.mxu0
      %v1125 = vadd.f32 0.0, %v1124
      %v1126 = vpop.f32.mrf.mxu0
      %1127 = vmatprep.mubr.bf16.mxu0 0
      %1128 = vmatmul.mubr.bf16.gmra.mxu0 %v1012
      %v1129 = vpop.f32.mrf.mxu0
      %v1130 = vadd.f32 0.0, %v1129
      %v1131 = vpop.f32.mrf.mxu0
      %v1132 = vpop.f32.mrf.mxu0
      %v1133 = vadd.f32 0.0, %v1132
      %v1134 = vpop.f32.mrf.mxu0
      %1135 = vmatprep.mubr.bf16.mxu0 0
      %1136 = vmatmul.mubr.bf16.gmra.mxu0 %v1013
      %v1137 = vpop.f32.mrf.mxu0
      %v1138 = vadd.f32 0.0, %v1137
      %v1139 = vpop.f32.mrf.mxu0
      %v1140 = vpop.f32.mrf.mxu0
      %v1141 = vadd.f32 0.0, %v1140
      %v1142 = vpop.f32.mrf.mxu0
      %1143 = vdwg.mxu0
      %v1144 = vld [vmem:[%s262] sm:$0xff]
      %v1145 = vld [vmem:[%s262 + $0x8] sm:$0xff]
      %v1146 = vld [vmem:[%s262 + $0x10] sm:$0xff]
      %v1147 = vld [vmem:[%s262 + $0x18] sm:$0xff]
      %v1148 = vld [vmem:[%s262 + $0x20] sm:$0xff]
      %v1149 = vld [vmem:[%s262 + $0x28] sm:$0xff]
      %v1150 = vld [vmem:[%s262 + $0x30] sm:$0xff]
      %v1151 = vld [vmem:[%s262 + $0x38] sm:$0xff]
      %v1152 = vadd.f32 %v1144, %v1114
      %v1153 = vadd.f32 %v1145, %v1117
      %v1154 = vadd.f32 %v1146, %v1122
      %v1155 = vadd.f32 %v1147, %v1125
      %v1156 = vadd.f32 %v1148, %v1130
      %v1157 = vadd.f32 %v1149, %v1133
      %v1158 = vadd.f32 %v1150, %v1138
      %v1159 = vadd.f32 %v1151, %v1141
      %1160 = vst [vmem:[%s262] sm:$0xff] %v1152
      %1161 = vst [vmem:[%s262 + $0x8] sm:$0xff] %v1153
      %1162 = vst [vmem:[%s262 + $0x10] sm:$0xff] %v1154
      %1163 = vst [vmem:[%s262 + $0x18] sm:$0xff] %v1155
      %1164 = vst [vmem:[%s262 + $0x20] sm:$0xff] %v1156
      %1165 = vst [vmem:[%s262 + $0x28] sm:$0xff] %v1157
      %1166 = vst [vmem:[%s262 + $0x30] sm:$0xff] %v1158
      %1167 = vst [vmem:[%s262 + $0x38] sm:$0xff] %v1159
      %v1168 = vld [vmem:[%s346 + $0x9] sm:$0xff]
      %v1169 = vld [vmem:[%s346 + $0x21] sm:$0xff]
      %v1170 = vld [vmem:[%s346 + $0x39] sm:$0xff]
      %v1171 = vld [vmem:[%s346 + $0x51] sm:$0xff]
      %v1172 = vld [vmem:[%s346 + $0x69] sm:$0xff]
      %v1173 = vld [vmem:[%s346 + $0x81] sm:$0xff]
      %v1174 = vld [vmem:[%s346 + $0x99] sm:$0xff]
      %v1175 = vld [vmem:[%s346 + $0xb1] sm:$0xff]
      %v1176 = vpack.c.bf16 %v1169, %v1168
      %v1177 = vpack.c.bf16 %v1171, %v1170
      %v1178 = vpack.c.bf16 %v1173, %v1172
      %v1179 = vpack.c.bf16 %v1175, %v1174
      %s1180 = scalar_lea.vmem %s3, 320
      %v1181 = vld [vmem:[%s1180] sm:$0xf]
      %v1182 = vld [vmem:[%s1180 + $0x4] sm:$0xf]
      %v1183 = vld [vmem:[%s1180 + $0x8] sm:$0xf]
      %v1184 = vld [vmem:[%s1180 + $0xc] sm:$0xf]
      %v1185 = vld [vmem:[%s1180 + $0x10] sm:$0xf]
      %v1186 = vld [vmem:[%s1180 + $0x14] sm:$0xf]
      %v1187 = vld [vmem:[%s1180 + $0x18] sm:$0xf]
      %v1188 = vld [vmem:[%s1180 + $0x1c] sm:$0xf]
      %v1189 = vld [vmem:[%s1180 + $0x20] sm:$0xf]
      %v1190 = vld [vmem:[%s1180 + $0x24] sm:$0xf]
      %v1191 = vld [vmem:[%s1180 + $0x28] sm:$0xf]
      %v1192 = vld [vmem:[%s1180 + $0x2c] sm:$0xf]
      %v1193 = vld [vmem:[%s1180 + $0x30] sm:$0xf]
      %v1194 = vld [vmem:[%s1180 + $0x34] sm:$0xf]
      %v1195 = vld [vmem:[%s1180 + $0x38] sm:$0xf]
      %v1196 = vld [vmem:[%s1180 + $0x3c] sm:$0xf]
      %v1213 = vunpack.c.l.b16 %v1181
      %v1214 = vunpack.c.l.b16 %v1182
      %v1215 = vunpack.c.l.b16 %v1183
      %v1216 = vunpack.c.l.b16 %v1184
      %v1217 = vunpack.c.l.b16 %v1185
      %v1218 = vunpack.c.l.b16 %v1186
      %v1219 = vunpack.c.l.b16 %v1187
      %v1220 = vunpack.c.l.b16 %v1188
      %v1221 = vunpack.c.l.b16 %v1189
      %v1222 = vunpack.c.l.b16 %v1190
      %v1223 = vunpack.c.l.b16 %v1191
      %v1224 = vunpack.c.l.b16 %v1192
      %v1225 = vunpack.c.l.b16 %v1193
      %v1226 = vunpack.c.l.b16 %v1194
      %v1227 = vunpack.c.l.b16 %v1195
      %v1228 = vunpack.c.l.b16 %v1196
      %v1229 = vpack.c.b16 %v1214, %v1213
      %v1230 = vpack.c.b16 %v1216, %v1215
      %v1231 = vpack.c.b16 %v1218, %v1217
      %v1232 = vpack.c.b16 %v1220, %v1219
      %v1233 = vpack.c.b16 %v1222, %v1221
      %v1234 = vpack.c.b16 %v1224, %v1223
      %v1235 = vpack.c.b16 %v1226, %v1225
      %v1236 = vpack.c.b16 %v1228, %v1227
      %1245 = vmatprep.subr.bf16.mxu0 0
      %1246 = vmatpush1.bf16.msra.mxu0 %v1236
      %1247 = vmatprep.subr.bf16.mxu0 0
      %1248 = vmatpush1.bf16.msra.mxu0 %v1235
      %1249 = vmatprep.subr.bf16.mxu0 0
      %1250 = vmatpush1.bf16.msra.mxu0 %v1234
      %1251 = vmatprep.subr.bf16.mxu0 0
      %1252 = vmatpush1.bf16.msra.mxu0 %v1233
      %1253 = vmatprep.subr.bf16.mxu0 0
      %1254 = vmatpush1.bf16.msra.mxu0 %v1232
      %1255 = vmatprep.subr.bf16.mxu0 0
      %1256 = vmatpush1.bf16.msra.mxu0 %v1231
      %1257 = vmatprep.subr.bf16.mxu0 0
      %1258 = vmatpush1.bf16.msra.mxu0 %v1230
      %1259 = vmatprep.subr.bf16.mxu0 0
      %1260 = vmatpush1.bf16.msra.mxu0 %v1229
      %1261 = vmatprep.subr.bf16.mxu0 0
      %1262 = vmatpush2.bf16.msra.mxu0 0
      %1263 = vmatprep.subr.bf16.mxu0 0
      %1264 = vmatpush2.bf16.msra.mxu0 0
      %1265 = vmatprep.subr.bf16.mxu0 0
      %1266 = vmatpush2.bf16.msra.mxu0 0
      %1267 = vmatprep.subr.bf16.mxu0 0
      %1268 = vmatpush2.bf16.msra.mxu0 0
      %1269 = vmatprep.subr.bf16.mxu0 0
      %1270 = vmatpush2.bf16.msra.mxu0 0
      %1271 = vmatprep.subr.bf16.mxu0 0
      %1272 = vmatpush2.bf16.msra.mxu0 0
      %1273 = vmatprep.subr.bf16.mxu0 0
      %1274 = vmatpush2.bf16.msra.mxu0 0
      %1275 = vmatprep.subr.bf16.mxu0 0
      %1276 = vmatpush2.bf16.msra.mxu0 0
      %1277 = vmatprep.mubr.bf16.mxu0 0
      %1278 = vmatmul.mubr.bf16.gmra.mxu0 %v1176
      %v1279 = vpop.f32.mrf.mxu0
      %v1280 = vadd.f32 0.0, %v1279
      %v1281 = vpop.f32.mrf.mxu0
      %v1282 = vpop.f32.mrf.mxu0
      %v1283 = vadd.f32 0.0, %v1282
      %v1284 = vpop.f32.mrf.mxu0
      %1285 = vmatprep.mubr.bf16.mxu0 0
      %1286 = vmatmul.mubr.bf16.gmra.mxu0 %v1177
      %v1287 = vpop.f32.mrf.mxu0
      %v1288 = vadd.f32 0.0, %v1287
      %v1289 = vpop.f32.mrf.mxu0
      %v1290 = vpop.f32.mrf.mxu0
      %v1291 = vadd.f32 0.0, %v1290
      %v1292 = vpop.f32.mrf.mxu0
      %1293 = vmatprep.mubr.bf16.mxu0 0
      %1294 = vmatmul.mubr.bf16.gmra.mxu0 %v1178
      %v1295 = vpop.f32.mrf.mxu0
      %v1296 = vadd.f32 0.0, %v1295
      %v1297 = vpop.f32.mrf.mxu0
      %v1298 = vpop.f32.mrf.mxu0
      %v1299 = vadd.f32 0.0, %v1298
      %v1300 = vpop.f32.mrf.mxu0
      %1301 = vmatprep.mubr.bf16.mxu0 0
      %1302 = vmatmul.mubr.bf16.gmra.mxu0 %v1179
      %v1303 = vpop.f32.mrf.mxu0
      %v1304 = vadd.f32 0.0, %v1303
      %v1305 = vpop.f32.mrf.mxu0
      %v1306 = vpop.f32.mrf.mxu0
      %v1307 = vadd.f32 0.0, %v1306
      %v1308 = vpop.f32.mrf.mxu0
      %1309 = vdwg.mxu0
      %v1310 = vld [vmem:[%s262] sm:$0xff]
      %v1311 = vld [vmem:[%s262 + $0x8] sm:$0xff]
      %v1312 = vld [vmem:[%s262 + $0x10] sm:$0xff]
      %v1313 = vld [vmem:[%s262 + $0x18] sm:$0xff]
      %v1314 = vld [vmem:[%s262 + $0x20] sm:$0xff]
      %v1315 = vld [vmem:[%s262 + $0x28] sm:$0xff]
      %v1316 = vld [vmem:[%s262 + $0x30] sm:$0xff]
      %v1317 = vld [vmem:[%s262 + $0x38] sm:$0xff]
      %v1318 = vadd.f32 %v1310, %v1280
      %v1319 = vadd.f32 %v1311, %v1283
      %v1320 = vadd.f32 %v1312, %v1288
      %v1321 = vadd.f32 %v1313, %v1291
      %v1322 = vadd.f32 %v1314, %v1296
      %v1323 = vadd.f32 %v1315, %v1299
      %v1324 = vadd.f32 %v1316, %v1304
      %v1325 = vadd.f32 %v1317, %v1307
      %1326 = vst [vmem:[%s262] sm:$0xff] %v1318
      %1327 = vst [vmem:[%s262 + $0x8] sm:$0xff] %v1319
      %1328 = vst [vmem:[%s262 + $0x10] sm:$0xff] %v1320
      %1329 = vst [vmem:[%s262 + $0x18] sm:$0xff] %v1321
      %1330 = vst [vmem:[%s262 + $0x20] sm:$0xff] %v1322
      %1331 = vst [vmem:[%s262 + $0x28] sm:$0xff] %v1323
      %1332 = vst [vmem:[%s262 + $0x30] sm:$0xff] %v1324
      %1333 = vst [vmem:[%s262 + $0x38] sm:$0xff] %v1325
      %s1334 = scalar_lea.vmem [#allocation2], 48
      %v1335 = vld [vmem:[%s1334 + $0x7] sm:$0xff]
      %v1336 = vld [vmem:[%s1334 + $0x1f] sm:$0xff]
      %v1337 = vld [vmem:[%s1334 + $0x37] sm:$0xff]
      %v1338 = vld [vmem:[%s1334 + $0x4f] sm:$0xff]
      %v1339 = vld [vmem:[%s1334 + $0x67] sm:$0xff]
      %v1340 = vld [vmem:[%s1334 + $0x7f] sm:$0xff]
      %v1341 = vld [vmem:[%s1334 + $0x97] sm:$0xff]
      %v1342 = vld [vmem:[%s1334 + $0xaf] sm:$0xff]
      %v1343 = vpack.c.bf16 %v1336, %v1335
      %v1344 = vpack.c.bf16 %v1338, %v1337
      %v1345 = vpack.c.bf16 %v1340, %v1339
      %v1346 = vpack.c.bf16 %v1342, %v1341
      %s1347 = scalar_lea.vmem %s3, 384
      %v1348 = vld [vmem:[%s1347] sm:$0xf]
      %v1349 = vld [vmem:[%s1347 + $0x4] sm:$0xf]
      %v1350 = vld [vmem:[%s1347 + $0x8] sm:$0xf]
      %v1351 = vld [vmem:[%s1347 + $0xc] sm:$0xf]
      %v1352 = vld [vmem:[%s1347 + $0x10] sm:$0xf]
      %v1353 = vld [vmem:[%s1347 + $0x14] sm:$0xf]
      %v1354 = vld [vmem:[%s1347 + $0x18] sm:$0xf]
      %v1355 = vld [vmem:[%s1347 + $0x1c] sm:$0xf]
      %v1356 = vld [vmem:[%s1347 + $0x20] sm:$0xf]
      %v1357 = vld [vmem:[%s1347 + $0x24] sm:$0xf]
      %v1358 = vld [vmem:[%s1347 + $0x28] sm:$0xf]
      %v1359 = vld [vmem:[%s1347 + $0x2c] sm:$0xf]
      %v1360 = vld [vmem:[%s1347 + $0x30] sm:$0xf]
      %v1361 = vld [vmem:[%s1347 + $0x34] sm:$0xf]
      %v1362 = vld [vmem:[%s1347 + $0x38] sm:$0xf]
      %v1363 = vld [vmem:[%s1347 + $0x3c] sm:$0xf]
      %v1380 = vunpack.c.l.b16 %v1348
      %v1381 = vunpack.c.l.b16 %v1349
      %v1382 = vunpack.c.l.b16 %v1350
      %v1383 = vunpack.c.l.b16 %v1351
      %v1384 = vunpack.c.l.b16 %v1352
      %v1385 = vunpack.c.l.b16 %v1353
      %v1386 = vunpack.c.l.b16 %v1354
      %v1387 = vunpack.c.l.b16 %v1355
      %v1388 = vunpack.c.l.b16 %v1356
      %v1389 = vunpack.c.l.b16 %v1357
      %v1390 = vunpack.c.l.b16 %v1358
      %v1391 = vunpack.c.l.b16 %v1359
      %v1392 = vunpack.c.l.b16 %v1360
      %v1393 = vunpack.c.l.b16 %v1361
      %v1394 = vunpack.c.l.b16 %v1362
      %v1395 = vunpack.c.l.b16 %v1363
      %v1396 = vpack.c.b16 %v1381, %v1380
      %v1397 = vpack.c.b16 %v1383, %v1382
      %v1398 = vpack.c.b16 %v1385, %v1384
      %v1399 = vpack.c.b16 %v1387, %v1386
      %v1400 = vpack.c.b16 %v1389, %v1388
      %v1401 = vpack.c.b16 %v1391, %v1390
      %v1402 = vpack.c.b16 %v1393, %v1392
      %v1403 = vpack.c.b16 %v1395, %v1394
      %1412 = vmatprep.subr.bf16.mxu0 0
      %1413 = vmatpush1.bf16.msra.mxu0 %v1403
      %1414 = vmatprep.subr.bf16.mxu0 0
      %1415 = vmatpush1.bf16.msra.mxu0 %v1402
      %1416 = vmatprep.subr.bf16.mxu0 0
      %1417 = vmatpush1.bf16.msra.mxu0 %v1401
      %1418 = vmatprep.subr.bf16.mxu0 0
      %1419 = vmatpush1.bf16.msra.mxu0 %v1400
      %1420 = vmatprep.subr.bf16.mxu0 0
      %1421 = vmatpush1.bf16.msra.mxu0 %v1399
      %1422 = vmatprep.subr.bf16.mxu0 0
      %1423 = vmatpush1.bf16.msra.mxu0 %v1398
      %1424 = vmatprep.subr.bf16.mxu0 0
      %1425 = vmatpush1.bf16.msra.mxu0 %v1397
      %1426 = vmatprep.subr.bf16.mxu0 0
      %1427 = vmatpush1.bf16.msra.mxu0 %v1396
      %1428 = vmatprep.subr.bf16.mxu0 0
      %1429 = vmatpush2.bf16.msra.mxu0 0
      %1430 = vmatprep.subr.bf16.mxu0 0
      %1431 = vmatpush2.bf16.msra.mxu0 0
      %1432 = vmatprep.subr.bf16.mxu0 0
      %1433 = vmatpush2.bf16.msra.mxu0 0
      %1434 = vmatprep.subr.bf16.mxu0 0
      %1435 = vmatpush2.bf16.msra.mxu0 0
      %1436 = vmatprep.subr.bf16.mxu0 0
      %1437 = vmatpush2.bf16.msra.mxu0 0
      %1438 = vmatprep.subr.bf16.mxu0 0
      %1439 = vmatpush2.bf16.msra.mxu0 0
      %1440 = vmatprep.subr.bf16.mxu0 0
      %1441 = vmatpush2.bf16.msra.mxu0 0
      %1442 = vmatprep.subr.bf16.mxu0 0
      %1443 = vmatpush2.bf16.msra.mxu0 0
      %1444 = vmatprep.mubr.bf16.mxu0 0
      %1445 = vmatmul.mubr.bf16.gmra.mxu0 %v1343
      %v1446 = vpop.f32.mrf.mxu0
      %v1447 = vadd.f32 0.0, %v1446
      %v1448 = vpop.f32.mrf.mxu0
      %v1449 = vpop.f32.mrf.mxu0
      %v1450 = vadd.f32 0.0, %v1449
      %v1451 = vpop.f32.mrf.mxu0
      %1452 = vmatprep.mubr.bf16.mxu0 0
      %1453 = vmatmul.mubr.bf16.gmra.mxu0 %v1344
      %v1454 = vpop.f32.mrf.mxu0
      %v1455 = vadd.f32 0.0, %v1454
      %v1456 = vpop.f32.mrf.mxu0
      %v1457 = vpop.f32.mrf.mxu0
      %v1458 = vadd.f32 0.0, %v1457
      %v1459 = vpop.f32.mrf.mxu0
      %1460 = vmatprep.mubr.bf16.mxu0 0
      %1461 = vmatmul.mubr.bf16.gmra.mxu0 %v1345
      %v1462 = vpop.f32.mrf.mxu0
      %v1463 = vadd.f32 0.0, %v1462
      %v1464 = vpop.f32.mrf.mxu0
      %v1465 = vpop.f32.mrf.mxu0
      %v1466 = vadd.f32 0.0, %v1465
      %v1467 = vpop.f32.mrf.mxu0
      %1468 = vmatprep.mubr.bf16.mxu0 0
      %1469 = vmatmul.mubr.bf16.gmra.mxu0 %v1346
      %v1470 = vpop.f32.mrf.mxu0
      %v1471 = vadd.f32 0.0, %v1470
      %v1472 = vpop.f32.mrf.mxu0
      %v1473 = vpop.f32.mrf.mxu0
      %v1474 = vadd.f32 0.0, %v1473
      %v1475 = vpop.f32.mrf.mxu0
      %1476 = vdwg.mxu0
      %v1477 = vld [vmem:[%s262] sm:$0xff]
      %v1478 = vld [vmem:[%s262 + $0x8] sm:$0xff]
      %v1479 = vld [vmem:[%s262 + $0x10] sm:$0xff]
      %v1480 = vld [vmem:[%s262 + $0x18] sm:$0xff]
      %v1481 = vld [vmem:[%s262 + $0x20] sm:$0xff]
      %v1482 = vld [vmem:[%s262 + $0x28] sm:$0xff]
      %v1483 = vld [vmem:[%s262 + $0x30] sm:$0xff]
      %v1484 = vld [vmem:[%s262 + $0x38] sm:$0xff]
      %v1485 = vadd.f32 %v1477, %v1447
      %v1486 = vadd.f32 %v1478, %v1450
      %v1487 = vadd.f32 %v1479, %v1455
      %v1488 = vadd.f32 %v1480, %v1458
      %v1489 = vadd.f32 %v1481, %v1463
      %v1490 = vadd.f32 %v1482, %v1466
      %v1491 = vadd.f32 %v1483, %v1471
      %v1492 = vadd.f32 %v1484, %v1474
      %1493 = vst [vmem:[%s262] sm:$0xff] %v1485
      %1494 = vst [vmem:[%s262 + $0x8] sm:$0xff] %v1486
      %1495 = vst [vmem:[%s262 + $0x10] sm:$0xff] %v1487
      %1496 = vst [vmem:[%s262 + $0x18] sm:$0xff] %v1488
      %1497 = vst [vmem:[%s262 + $0x20] sm:$0xff] %v1489
      %1498 = vst [vmem:[%s262 + $0x28] sm:$0xff] %v1490
      %1499 = vst [vmem:[%s262 + $0x30] sm:$0xff] %v1491
      %1500 = vst [vmem:[%s262 + $0x38] sm:$0xff] %v1492
      %v1501 = vld [vmem:[%s1334 + $0x8] sm:$0xff]
      %v1502 = vld [vmem:[%s1334 + $0x20] sm:$0xff]
      %v1503 = vld [vmem:[%s1334 + $0x38] sm:$0xff]
      %v1504 = vld [vmem:[%s1334 + $0x50] sm:$0xff]
      %v1505 = vld [vmem:[%s1334 + $0x68] sm:$0xff]
      %v1506 = vld [vmem:[%s1334 + $0x80] sm:$0xff]
      %v1507 = vld [vmem:[%s1334 + $0x98] sm:$0xff]
      %v1508 = vld [vmem:[%s1334 + $0xb0] sm:$0xff]
      %v1509 = vpack.c.bf16 %v1502, %v1501
      %v1510 = vpack.c.bf16 %v1504, %v1503
      %v1511 = vpack.c.bf16 %v1506, %v1505
      %v1512 = vpack.c.bf16 %v1508, %v1507
      %s1513 = scalar_lea.vmem %s3, 448
      %v1514 = vld [vmem:[%s1513] sm:$0xf]
      %v1515 = vld [vmem:[%s1513 + $0x4] sm:$0xf]
      %v1516 = vld [vmem:[%s1513 + $0x8] sm:$0xf]
      %v1517 = vld [vmem:[%s1513 + $0xc] sm:$0xf]
      %v1518 = vld [vmem:[%s1513 + $0x10] sm:$0xf]
      %v1519 = vld [vmem:[%s1513 + $0x14] sm:$0xf]
      %v1520 = vld [vmem:[%s1513 + $0x18] sm:$0xf]
      %v1521 = vld [vmem:[%s1513 + $0x1c] sm:$0xf]
      %v1522 = vld [vmem:[%s1513 + $0x20] sm:$0xf]
      %v1523 = vld [vmem:[%s1513 + $0x24] sm:$0xf]
      %v1524 = vld [vmem:[%s1513 + $0x28] sm:$0xf]
      %v1525 = vld [vmem:[%s1513 + $0x2c] sm:$0xf]
      %v1526 = vld [vmem:[%s1513 + $0x30] sm:$0xf]
      %v1527 = vld [vmem:[%s1513 + $0x34] sm:$0xf]
      %v1528 = vld [vmem:[%s1513 + $0x38] sm:$0xf]
      %v1529 = vld [vmem:[%s1513 + $0x3c] sm:$0xf]
      %v1546 = vunpack.c.l.b16 %v1514
      %v1547 = vunpack.c.l.b16 %v1515
      %v1548 = vunpack.c.l.b16 %v1516
      %v1549 = vunpack.c.l.b16 %v1517
      %v1550 = vunpack.c.l.b16 %v1518
      %v1551 = vunpack.c.l.b16 %v1519
      %v1552 = vunpack.c.l.b16 %v1520
      %v1553 = vunpack.c.l.b16 %v1521
      %v1554 = vunpack.c.l.b16 %v1522
      %v1555 = vunpack.c.l.b16 %v1523
      %v1556 = vunpack.c.l.b16 %v1524
      %v1557 = vunpack.c.l.b16 %v1525
      %v1558 = vunpack.c.l.b16 %v1526
      %v1559 = vunpack.c.l.b16 %v1527
      %v1560 = vunpack.c.l.b16 %v1528
      %v1561 = vunpack.c.l.b16 %v1529
      %v1562 = vpack.c.b16 %v1547, %v1546
      %v1563 = vpack.c.b16 %v1549, %v1548
      %v1564 = vpack.c.b16 %v1551, %v1550
      %v1565 = vpack.c.b16 %v1553, %v1552
      %v1566 = vpack.c.b16 %v1555, %v1554
      %v1567 = vpack.c.b16 %v1557, %v1556
      %v1568 = vpack.c.b16 %v1559, %v1558
      %v1569 = vpack.c.b16 %v1561, %v1560
      %1578 = vmatprep.subr.bf16.mxu0 0
      %1579 = vmatpush1.bf16.msra.mxu0 %v1569
      %1580 = vmatprep.subr.bf16.mxu0 0
      %1581 = vmatpush1.bf16.msra.mxu0 %v1568
      %1582 = vmatprep.subr.bf16.mxu0 0
      %1583 = vmatpush1.bf16.msra.mxu0 %v1567
      %1584 = vmatprep.subr.bf16.mxu0 0
      %1585 = vmatpush1.bf16.msra.mxu0 %v1566
      %1586 = vmatprep.subr.bf16.mxu0 0
      %1587 = vmatpush1.bf16.msra.mxu0 %v1565
      %1588 = vmatprep.subr.bf16.mxu0 0
      %1589 = vmatpush1.bf16.msra.mxu0 %v1564
      %1590 = vmatprep.subr.bf16.mxu0 0
      %1591 = vmatpush1.bf16.msra.mxu0 %v1563
      %1592 = vmatprep.subr.bf16.mxu0 0
      %1593 = vmatpush1.bf16.msra.mxu0 %v1562
      %1594 = vmatprep.subr.bf16.mxu0 0
      %1595 = vmatpush2.bf16.msra.mxu0 0
      %1596 = vmatprep.subr.bf16.mxu0 0
      %1597 = vmatpush2.bf16.msra.mxu0 0
      %1598 = vmatprep.subr.bf16.mxu0 0
      %1599 = vmatpush2.bf16.msra.mxu0 0
      %1600 = vmatprep.subr.bf16.mxu0 0
      %1601 = vmatpush2.bf16.msra.mxu0 0
      %1602 = vmatprep.subr.bf16.mxu0 0
      %1603 = vmatpush2.bf16.msra.mxu0 0
      %1604 = vmatprep.subr.bf16.mxu0 0
      %1605 = vmatpush2.bf16.msra.mxu0 0
      %1606 = vmatprep.subr.bf16.mxu0 0
      %1607 = vmatpush2.bf16.msra.mxu0 0
      %1608 = vmatprep.subr.bf16.mxu0 0
      %1609 = vmatpush2.bf16.msra.mxu0 0
      %1610 = vmatprep.mubr.bf16.mxu0 0
      %1611 = vmatmul.mubr.bf16.gmra.mxu0 %v1509
      %v1612 = vpop.f32.mrf.mxu0
      %v1613 = vadd.f32 0.0, %v1612
      %v1614 = vpop.f32.mrf.mxu0
      %v1615 = vpop.f32.mrf.mxu0
      %v1616 = vadd.f32 0.0, %v1615
      %v1617 = vpop.f32.mrf.mxu0
      %1618 = vmatprep.mubr.bf16.mxu0 0
      %1619 = vmatmul.mubr.bf16.gmra.mxu0 %v1510
      %v1620 = vpop.f32.mrf.mxu0
      %v1621 = vadd.f32 0.0, %v1620
      %v1622 = vpop.f32.mrf.mxu0
      %v1623 = vpop.f32.mrf.mxu0
      %v1624 = vadd.f32 0.0, %v1623
      %v1625 = vpop.f32.mrf.mxu0
      %1626 = vmatprep.mubr.bf16.mxu0 0
      %1627 = vmatmul.mubr.bf16.gmra.mxu0 %v1511
      %v1628 = vpop.f32.mrf.mxu0
      %v1629 = vadd.f32 0.0, %v1628
      %v1630 = vpop.f32.mrf.mxu0
      %v1631 = vpop.f32.mrf.mxu0
      %v1632 = vadd.f32 0.0, %v1631
      %v1633 = vpop.f32.mrf.mxu0
      %1634 = vmatprep.mubr.bf16.mxu0 0
      %1635 = vmatmul.mubr.bf16.gmra.mxu0 %v1512
      %v1636 = vpop.f32.mrf.mxu0
      %v1637 = vadd.f32 0.0, %v1636
      %v1638 = vpop.f32.mrf.mxu0
      %v1639 = vpop.f32.mrf.mxu0
      %v1640 = vadd.f32 0.0, %v1639
      %v1641 = vpop.f32.mrf.mxu0
      %1642 = vdwg.mxu0
      %v1643 = vld [vmem:[%s262] sm:$0xff]
      %v1644 = vld [vmem:[%s262 + $0x8] sm:$0xff]
      %v1645 = vld [vmem:[%s262 + $0x10] sm:$0xff]
      %v1646 = vld [vmem:[%s262 + $0x18] sm:$0xff]
      %v1647 = vld [vmem:[%s262 + $0x20] sm:$0xff]
      %v1648 = vld [vmem:[%s262 + $0x28] sm:$0xff]
      %v1649 = vld [vmem:[%s262 + $0x30] sm:$0xff]
      %v1650 = vld [vmem:[%s262 + $0x38] sm:$0xff]
      %v1651 = vadd.f32 %v1643, %v1613
      %v1652 = vadd.f32 %v1644, %v1616
      %v1653 = vadd.f32 %v1645, %v1621
      %v1654 = vadd.f32 %v1646, %v1624
      %v1655 = vadd.f32 %v1647, %v1629
      %v1656 = vadd.f32 %v1648, %v1632
      %v1657 = vadd.f32 %v1649, %v1637
      %v1658 = vadd.f32 %v1650, %v1640
      %1659 = vst [vmem:[%s262] sm:$0xff] %v1651
      %1660 = vst [vmem:[%s262 + $0x8] sm:$0xff] %v1652
      %1661 = vst [vmem:[%s262 + $0x10] sm:$0xff] %v1653
      %1662 = vst [vmem:[%s262 + $0x18] sm:$0xff] %v1654
      %1663 = vst [vmem:[%s262 + $0x20] sm:$0xff] %v1655
      %1664 = vst [vmem:[%s262 + $0x28] sm:$0xff] %v1656
      %1665 = vst [vmem:[%s262 + $0x30] sm:$0xff] %v1657
      %1666 = vst [vmem:[%s262 + $0x38] sm:$0xff] %v1658
      %v1667 = vld [vmem:[%s1334 + $0x9] sm:$0xff]
      %v1668 = vld [vmem:[%s1334 + $0x21] sm:$0xff]
      %v1669 = vld [vmem:[%s1334 + $0x39] sm:$0xff]
      %v1670 = vld [vmem:[%s1334 + $0x51] sm:$0xff]
      %v1671 = vld [vmem:[%s1334 + $0x69] sm:$0xff]
      %v1672 = vld [vmem:[%s1334 + $0x81] sm:$0xff]
      %v1673 = vld [vmem:[%s1334 + $0x99] sm:$0xff]
      %v1674 = vld [vmem:[%s1334 + $0xb1] sm:$0xff]
      %v1675 = vpack.c.bf16 %v1668, %v1667
      %v1676 = vpack.c.bf16 %v1670, %v1669
      %v1677 = vpack.c.bf16 %v1672, %v1671
      %v1678 = vpack.c.bf16 %v1674, %v1673
      %s1679 = scalar_lea.vmem %s3, 512
      %v1680 = vld [vmem:[%s1679] sm:$0xf]
      %v1681 = vld [vmem:[%s1679 + $0x4] sm:$0xf]
      %v1682 = vld [vmem:[%s1679 + $0x8] sm:$0xf]
      %v1683 = vld [vmem:[%s1679 + $0xc] sm:$0xf]
      %v1684 = vld [vmem:[%s1679 + $0x10] sm:$0xf]
      %v1685 = vld [vmem:[%s1679 + $0x14] sm:$0xf]
      %v1686 = vld [vmem:[%s1679 + $0x18] sm:$0xf]
      %v1687 = vld [vmem:[%s1679 + $0x1c] sm:$0xf]
      %v1688 = vld [vmem:[%s1679 + $0x20] sm:$0xf]
      %v1689 = vld [vmem:[%s1679 + $0x24] sm:$0xf]
      %v1690 = vld [vmem:[%s1679 + $0x28] sm:$0xf]
      %v1691 = vld [vmem:[%s1679 + $0x2c] sm:$0xf]
      %v1692 = vld [vmem:[%s1679 + $0x30] sm:$0xf]
      %v1693 = vld [vmem:[%s1679 + $0x34] sm:$0xf]
      %v1694 = vld [vmem:[%s1679 + $0x38] sm:$0xf]
      %v1695 = vld [vmem:[%s1679 + $0x3c] sm:$0xf]
      %v1712 = vunpack.c.l.b16 %v1680
      %v1713 = vunpack.c.l.b16 %v1681
      %v1714 = vunpack.c.l.b16 %v1682
      %v1715 = vunpack.c.l.b16 %v1683
      %v1716 = vunpack.c.l.b16 %v1684
      %v1717 = vunpack.c.l.b16 %v1685
      %v1718 = vunpack.c.l.b16 %v1686
      %v1719 = vunpack.c.l.b16 %v1687
      %v1720 = vunpack.c.l.b16 %v1688
      %v1721 = vunpack.c.l.b16 %v1689
      %v1722 = vunpack.c.l.b16 %v1690
      %v1723 = vunpack.c.l.b16 %v1691
      %v1724 = vunpack.c.l.b16 %v1692
      %v1725 = vunpack.c.l.b16 %v1693
      %v1726 = vunpack.c.l.b16 %v1694
      %v1727 = vunpack.c.l.b16 %v1695
      %v1728 = vpack.c.b16 %v1713, %v1712
      %v1729 = vpack.c.b16 %v1715, %v1714
      %v1730 = vpack.c.b16 %v1717, %v1716
      %v1731 = vpack.c.b16 %v1719, %v1718
      %v1732 = vpack.c.b16 %v1721, %v1720
      %v1733 = vpack.c.b16 %v1723, %v1722
      %v1734 = vpack.c.b16 %v1725, %v1724
      %v1735 = vpack.c.b16 %v1727, %v1726
      %1744 = vmatprep.subr.bf16.mxu0 0
      %1745 = vmatpush1.bf16.msra.mxu0 %v1735
      %1746 = vmatprep.subr.bf16.mxu0 0
      %1747 = vmatpush1.bf16.msra.mxu0 %v1734
      %1748 = vmatprep.subr.bf16.mxu0 0
      %1749 = vmatpush1.bf16.msra.mxu0 %v1733
      %1750 = vmatprep.subr.bf16.mxu0 0
      %1751 = vmatpush1.bf16.msra.mxu0 %v1732
      %1752 = vmatprep.subr.bf16.mxu0 0
      %1753 = vmatpush1.bf16.msra.mxu0 %v1731
      %1754 = vmatprep.subr.bf16.mxu0 0
      %1755 = vmatpush1.bf16.msra.mxu0 %v1730
      %1756 = vmatprep.subr.bf16.mxu0 0
      %1757 = vmatpush1.bf16.msra.mxu0 %v1729
      %1758 = vmatprep.subr.bf16.mxu0 0
      %1759 = vmatpush1.bf16.msra.mxu0 %v1728
      %1760 = vmatprep.subr.bf16.mxu0 0
      %1761 = vmatpush2.bf16.msra.mxu0 0
      %1762 = vmatprep.subr.bf16.mxu0 0
      %1763 = vmatpush2.bf16.msra.mxu0 0
      %1764 = vmatprep.subr.bf16.mxu0 0
      %1765 = vmatpush2.bf16.msra.mxu0 0
      %1766 = vmatprep.subr.bf16.mxu0 0
      %1767 = vmatpush2.bf16.msra.mxu0 0
      %1768 = vmatprep.subr.bf16.mxu0 0
      %1769 = vmatpush2.bf16.msra.mxu0 0
      %1770 = vmatprep.subr.bf16.mxu0 0
      %1771 = vmatpush2.bf16.msra.mxu0 0
      %1772 = vmatprep.subr.bf16.mxu0 0
      %1773 = vmatpush2.bf16.msra.mxu0 0
      %1774 = vmatprep.subr.bf16.mxu0 0
      %1775 = vmatpush2.bf16.msra.mxu0 0
      %1776 = vmatprep.mubr.bf16.mxu0 0
      %1777 = vmatmul.mubr.bf16.gmra.mxu0 %v1675
      %v1778 = vpop.f32.mrf.mxu0
      %v1779 = vadd.f32 0.0, %v1778
      %v1780 = vpop.f32.mrf.mxu0
      %v1781 = vpop.f32.mrf.mxu0
      %v1782 = vadd.f32 0.0, %v1781
      %v1783 = vpop.f32.mrf.mxu0
      %1784 = vmatprep.mubr.bf16.mxu0 0
      %1785 = vmatmul.mubr.bf16.gmra.mxu0 %v1676
      %v1786 = vpop.f32.mrf.mxu0
      %v1787 = vadd.f32 0.0, %v1786
      %v1788 = vpop.f32.mrf.mxu0
      %v1789 = vpop.f32.mrf.mxu0
      %v1790 = vadd.f32 0.0, %v1789
      %v1791 = vpop.f32.mrf.mxu0
      %1792 = vmatprep.mubr.bf16.mxu0 0
      %1793 = vmatmul.mubr.bf16.gmra.mxu0 %v1677
      %v1794 = vpop.f32.mrf.mxu0
      %v1795 = vadd.f32 0.0, %v1794
      %v1796 = vpop.f32.mrf.mxu0
      %v1797 = vpop.f32.mrf.mxu0
      %v1798 = vadd.f32 0.0, %v1797
      %v1799 = vpop.f32.mrf.mxu0
      %1800 = vmatprep.mubr.bf16.mxu0 0
      %1801 = vmatmul.mubr.bf16.gmra.mxu0 %v1678
      %v1802 = vpop.f32.mrf.mxu0
      %v1803 = vadd.f32 0.0, %v1802
      %v1804 = vpop.f32.mrf.mxu0
      %v1805 = vpop.f32.mrf.mxu0
      %v1806 = vadd.f32 0.0, %v1805
      %v1807 = vpop.f32.mrf.mxu0
      %1808 = vdwg.mxu0
      %v1809 = vld [vmem:[%s262] sm:$0xff]
      %v1810 = vld [vmem:[%s262 + $0x8] sm:$0xff]
      %v1811 = vld [vmem:[%s262 + $0x10] sm:$0xff]
      %v1812 = vld [vmem:[%s262 + $0x18] sm:$0xff]
      %v1813 = vld [vmem:[%s262 + $0x20] sm:$0xff]
      %v1814 = vld [vmem:[%s262 + $0x28] sm:$0xff]
      %v1815 = vld [vmem:[%s262 + $0x30] sm:$0xff]
      %v1816 = vld [vmem:[%s262 + $0x38] sm:$0xff]
      %v1817 = vadd.f32 %v1809, %v1779
      %v1818 = vadd.f32 %v1810, %v1782
      %v1819 = vadd.f32 %v1811, %v1787
      %v1820 = vadd.f32 %v1812, %v1790
      %v1821 = vadd.f32 %v1813, %v1795
      %v1822 = vadd.f32 %v1814, %v1798
      %v1823 = vadd.f32 %v1815, %v1803
      %v1824 = vadd.f32 %v1816, %v1806
      %1825 = vst [vmem:[%s262] sm:$0xff] %v1817
      %1826 = vst [vmem:[%s262 + $0x8] sm:$0xff] %v1818
      %1827 = vst [vmem:[%s262 + $0x10] sm:$0xff] %v1819
      %1828 = vst [vmem:[%s262 + $0x18] sm:$0xff] %v1820
      %1829 = vst [vmem:[%s262 + $0x20] sm:$0xff] %v1821
      %1830 = vst [vmem:[%s262 + $0x28] sm:$0xff] %v1822
      %1831 = vst [vmem:[%s262 + $0x30] sm:$0xff] %v1823
      %1832 = vst [vmem:[%s262 + $0x38] sm:$0xff] %v1824
      %v1833 = vld [vmem:[%s262] sm:$0xff]
      %v1834 = vld [vmem:[%s262 + $0x8] sm:$0xff]
      %v1835 = vld [vmem:[%s262 + $0x10] sm:$0xff]
      %v1836 = vld [vmem:[%s262 + $0x18] sm:$0xff]
      %v1837 = vld [vmem:[%s262 + $0x20] sm:$0xff]
      %v1838 = vld [vmem:[%s262 + $0x28] sm:$0xff]
      %v1839 = vld [vmem:[%s262 + $0x30] sm:$0xff]
      %v1840 = vld [vmem:[%s262 + $0x38] sm:$0xff]
      %v1841 = vadd.f32 %v1833, %v1834
      %v1842 = vadd.f32 %v1841, %v1835
      %v1843 = vadd.f32 %v1842, %v1836
      %v1844 = vadd.f32 %v1843, %v1837
      %v1845 = vadd.f32 %v1844, %v1838
      %v1846 = vadd.f32 %v1845, %v1839
      %v1847 = vadd.f32 %v1846, %v1840
      %v1848 = vrot.slane %v1847, 4
      %v1849 = vadd.f32 %v1847, %v1848
      %v1850 = vrot.slane %v1849, 2
      %v1851 = vadd.f32 %v1849, %v1850
      %v1852 = vrot.slane %v1851, 1
      %v1853 = vadd.f32 %v1851, %v1852
      %1854 = vst [vmem:[%s265] sm:$0x1] %v1853
      %v1855 = vmul.f32 %v1833, %v1833
      %v1856 = vmul.f32 %v1834, %v1834
      %v1857 = vmul.f32 %v1835, %v1835
      %v1858 = vmul.f32 %v1836, %v1836
      %v1859 = vmul.f32 %v1837, %v1837
      %v1860 = vmul.f32 %v1838, %v1838
      %v1861 = vmul.f32 %v1839, %v1839
      %v1862 = vmul.f32 %v1840, %v1840
      %v1863 = vadd.f32 %v1855, %v1856
      %v1864 = vadd.f32 %v1863, %v1857
      %v1865 = vadd.f32 %v1864, %v1858
      %v1866 = vadd.f32 %v1865, %v1859
      %v1867 = vadd.f32 %v1866, %v1860
      %v1868 = vadd.f32 %v1867, %v1861
      %v1869 = vadd.f32 %v1868, %v1862
      %v1870 = vrot.slane %v1869, 4
      %v1871 = vadd.f32 %v1869, %v1870
      %v1872 = vrot.slane %v1871, 2
      %v1873 = vadd.f32 %v1871, %v1872
      %v1874 = vrot.slane %v1873, 1
      %v1875 = vadd.f32 %v1873, %v1874
      %1876 = vst [vmem:[%s268] sm:$0x1] %v1875
      %p1877 = scmp.lt.s32.totalorder %s18, 1
      %s1878 = scalar_select %p1877, %s18, 1
      %s1879 = smul.addr %s1878, 8
      %s1880 = smul.addr %s1879, 8
      %s1881 = scalar_lea.vmem %s4, %s1880
      %p1882 = scmp.lt.s32.totalorder %s18, 1
      %s1883 = scalar_select %p1882, %s18, 1
      %s1884 = scalar_lea.vmem %s5, %s1883
      %p1885 = scmp.lt.s32.totalorder %s18, 1
      %s1886 = scalar_select %p1885, %s18, 1
      %s1887 = scalar_lea.vmem %s6, %s1886
      // Predicated region
      $region37: #{basic_block_forward.5} parent=35 // pred_check
        %p1888 = pneg %p125
      $region38: #{basic_block_forward.5} parent=35 // pred_check_branch
        %1890 = sbr.rel (%p1888) target = $region40
      $region39: #{basic_block_forward.5} parent=35 // pred_region
        _
      $region40: #{basic_block_forward.5} parent=35 // pred_fallthru
        _
      // Predicated region
      $region41: #{basic_block_forward.5} parent=35 // pred_check
        %p1891 = pneg %p151
      $region42: #{basic_block_forward.5} parent=35 // pred_check_branch
        %1893 = sbr.rel (%p1891) target = $region44
      $region43: #{basic_block_forward.5} parent=35 // pred_region
        _
      $region44: #{basic_block_forward.5} parent=35 // pred_fallthru
        _
      // Predicated region
      $region45: #{basic_block_forward.5} parent=35 // pred_check
        %p1894 = pneg %p177
      $region46: #{basic_block_forward.5} parent=35 // pred_check_branch
        %1896 = sbr.rel (%p1894) target = $region48
      $region47: #{basic_block_forward.5} parent=35 // pred_region
        _
      $region48: #{basic_block_forward.5} parent=35 // pred_fallthru
        _
    $region36: #{basic_block_forward.5} parent=5 // pred_fallthru
      _
    %p1897 = scmp.le.s32.totalorder 2, %s13
    // Predicated region
    $region49: #{basic_block_forward.5} parent=5 // pred_check
      %p1898 = pneg %p1897
    $region50: #{basic_block_forward.5} parent=5 // pred_check_branch
      %1900 = sbr.rel (%p1898) target = $region52
    $region51: #{basic_block_forward.5} parent=5 // pred_region
      %s1901 = ssub.s32 %s13, 2
      // Predicated region
      $region53: #{basic_block_forward.5} parent=51 // pred_check
        %p1902 = pneg %p131
      $region54: #{basic_block_forward.5} parent=51 // pred_check_branch
        %1904 = sbr.rel (%p1902) target = $region56
      $region55: #{basic_block_forward.5} parent=51 // pred_region
        %p1905 = scmp.lt.s32.totalorder %s19, 1
        %s1906 = scalar_select %p1905, %s19, 1
        %s1907 = smul.addr %s1906, 8
        %s1908 = smul.addr %s1907, 8
        %s1909 = scalar_lea.vmem %s4, %s1908
      $region56: #{basic_block_forward.5} parent=51 // pred_fallthru
        _
      // Predicated region
      $region57: #{basic_block_forward.5} parent=51 // pred_check
        %p1910 = pneg %p157
      $region58: #{basic_block_forward.5} parent=51 // pred_check_branch
        %1912 = sbr.rel (%p1910) target = $region60
      $region59: #{basic_block_forward.5} parent=51 // pred_region
        %p1913 = scmp.lt.s32.totalorder %s19, 1
        %s1914 = scalar_select %p1913, %s19, 1
        %s1915 = scalar_lea.vmem %s5, %s1914
      $region60: #{basic_block_forward.5} parent=51 // pred_fallthru
        _
      // Predicated region
      $region61: #{basic_block_forward.5} parent=51 // pred_check
        %p1916 = pneg %p183
      $region62: #{basic_block_forward.5} parent=51 // pred_check_branch
        %1918 = sbr.rel (%p1916) target = $region64
      $region63: #{basic_block_forward.5} parent=51 // pred_region
        %p1919 = scmp.lt.s32.totalorder %s19, 1
        %s1920 = scalar_select %p1919, %s19, 1
        %s1921 = scalar_lea.vmem %s6, %s1920
      $region64: #{basic_block_forward.5} parent=51 // pred_fallthru
        _
    $region52: #{basic_block_forward.5} parent=5 // pred_fallthru
      _
  $region6: #{basic_block_forward.5} parent=0 // loop_footer
    %s17 = sadd.s32 1, %s13
  $region7: #{basic_block_forward.5} parent=0 // loop_footer_branch
    %12 = sbr.rel target = $region3
  $region8: #{basic_block_forward.5} parent=0 // loop_exit
    _

// kernel: basic_block_forward.7
$region0: #{basic_block_forward.7}
  #allocation0 [shape = 'u32[]', space=smem, size = 0x4, offset = 0x4, fixed_abs, tag = 'smem constant byte address 0x4 - core index']
  #allocation1 [shape = 'u32[144,128]{1,0:T(1,128)}', space=vmem, size = 0x12000, scoped, tag = 'internal scratch']
  %s0 = inlined_call_operand.vmem [shape: f32[128,128], index: 0, kind: input, shape index: {}]
  %s1 = inlined_call_operand.vmem [shape: f32[128,128], index: 1, kind: input, shape index: {}]
  %s2 = inlined_call_operand.vmem [shape: f32[1,128], index: 2, kind: input, shape index: {}]
  %s3 = inlined_call_operand.vmem [shape: f32[1,128], index: 3, kind: input, shape index: {}]
  %s4 = inlined_call_operand.vmem [shape: f32[1,128], index: 4, kind: input, shape index: {}]
  %s5 = inlined_call_operand.vmem [shape: f32[128,128], index: 5, kind: output, shape index: {}]
  %s6 = sld [smem:[#allocation0]]
  $region30: #{basic_block_forward.7} parent=0
    _
  %s8 = ssub.s32 1, %s6
  %s9 = scalar_select 0, %s8, %s6
  // Predicated region
  $region2: #{basic_block_forward.7} parent=0 // pred_check
    _
  $region3: #{basic_block_forward.7} parent=0 // pred_check_branch
    %11 = sbr.rel (0) target = $region5
  $region4: #{basic_block_forward.7} parent=0 // pred_region
    _
  $region5: #{basic_block_forward.7} parent=0 // pred_fallthru
    _
  // Predicated region
  $region6: #{basic_block_forward.7} parent=0 // pred_check
    _
  $region7: #{basic_block_forward.7} parent=0 // pred_check_branch
    %13 = sbr.rel (0) target = $region9
  $region8: #{basic_block_forward.7} parent=0 // pred_region
    _
  $region9: #{basic_block_forward.7} parent=0 // pred_fallthru
    _
  // Predicated region
  $region10: #{basic_block_forward.7} parent=0 // pred_check
    _
  $region11: #{basic_block_forward.7} parent=0 // pred_check_branch
    %15 = sbr.rel (0) target = $region13
  $region12: #{basic_block_forward.7} parent=0 // pred_region
    _
  $region13: #{basic_block_forward.7} parent=0 // pred_fallthru
    _
  // Predicated region
  $region14: #{basic_block_forward.7} parent=0 // pred_check
    _
  $region15: #{basic_block_forward.7} parent=0 // pred_check_branch
    %17 = sbr.rel (0) target = $region17
  $region16: #{basic_block_forward.7} parent=0 // pred_region
    _
  $region17: #{basic_block_forward.7} parent=0 // pred_fallthru
    _
  // Predicated region
  $region18: #{basic_block_forward.7} parent=0 // pred_check
    _
  $region19: #{basic_block_forward.7} parent=0 // pred_check_branch
    %19 = sbr.rel (0) target = $region21
  $region20: #{basic_block_forward.7} parent=0 // pred_region
    _
  $region21: #{basic_block_forward.7} parent=0 // pred_fallthru
    _
  %v20 = vld [vmem:[%s0] sm:$0xff]
  %v21 = vld [vmem:[%s0 + $0x8] sm:$0xff]
  %v22 = vld [vmem:[%s0 + $0x10] sm:$0xff]
  %v23 = vld [vmem:[%s0 + $0x18] sm:$0xff]
  %v24 = vld [vmem:[%s0 + $0x20] sm:$0xff]
  %v25 = vld [vmem:[%s0 + $0x28] sm:$0xff]
  %v26 = vld [vmem:[%s0 + $0x30] sm:$0xff]
  %v27 = vld [vmem:[%s0 + $0x38] sm:$0xff]
  %v28 = vld [vmem:[%s0 + $0x40] sm:$0xff]
  %v29 = vld [vmem:[%s0 + $0x48] sm:$0xff]
  %v30 = vld [vmem:[%s0 + $0x50] sm:$0xff]
  %v31 = vld [vmem:[%s0 + $0x58] sm:$0xff]
  %v32 = vld [vmem:[%s0 + $0x60] sm:$0xff]
  %v33 = vld [vmem:[%s0 + $0x68] sm:$0xff]
  %v34 = vld [vmem:[%s0 + $0x70] sm:$0xff]
  %v35 = vld [vmem:[%s0 + $0x78] sm:$0xff]
  %v36 = vld [vmem:[%s2] sm:$0x1]
  %v38 = vlaneseq
  %v39 = vshrl.u32 %v38, 7
  %v40 = vsub.s32 0, %v39
  %v41 = vrot.slane %v36, %v40
  %v43 = vmul.f32 %v20, %v41
  %v44 = vmul.f32 %v21, %v41
  %v45 = vmul.f32 %v22, %v41
  %v46 = vmul.f32 %v23, %v41
  %v47 = vmul.f32 %v24, %v41
  %v48 = vmul.f32 %v25, %v41
  %v49 = vmul.f32 %v26, %v41
  %v50 = vmul.f32 %v27, %v41
  %v51 = vmul.f32 %v28, %v41
  %v52 = vmul.f32 %v29, %v41
  %v53 = vmul.f32 %v30, %v41
  %v54 = vmul.f32 %v31, %v41
  %v55 = vmul.f32 %v32, %v41
  %v56 = vmul.f32 %v33, %v41
  %v57 = vmul.f32 %v34, %v41
  %v58 = vmul.f32 %v35, %v41
  %v59 = vld [vmem:[%s1] sm:$0xff]
  %v60 = vld [vmem:[%s1 + $0x8] sm:$0xff]
  %v61 = vld [vmem:[%s1 + $0x10] sm:$0xff]
  %v62 = vld [vmem:[%s1 + $0x18] sm:$0xff]
  %v63 = vld [vmem:[%s1 + $0x20] sm:$0xff]
  %v64 = vld [vmem:[%s1 + $0x28] sm:$0xff]
  %v65 = vld [vmem:[%s1 + $0x30] sm:$0xff]
  %v66 = vld [vmem:[%s1 + $0x38] sm:$0xff]
  %v67 = vld [vmem:[%s1 + $0x40] sm:$0xff]
  %v68 = vld [vmem:[%s1 + $0x48] sm:$0xff]
  %v69 = vld [vmem:[%s1 + $0x50] sm:$0xff]
  %v70 = vld [vmem:[%s1 + $0x58] sm:$0xff]
  %v71 = vld [vmem:[%s1 + $0x60] sm:$0xff]
  %v72 = vld [vmem:[%s1 + $0x68] sm:$0xff]
  %v73 = vld [vmem:[%s1 + $0x70] sm:$0xff]
  %v74 = vld [vmem:[%s1 + $0x78] sm:$0xff]
  %v75 = vld [vmem:[%s3] sm:$0x1]
  %v77 = vlaneseq
  %v78 = vshrl.u32 %v77, 7
  %v79 = vsub.s32 0, %v78
  %v80 = vrot.slane %v75, %v79
  %v82 = vmul.f32 %v59, %v80
  %v83 = vmul.f32 %v60, %v80
  %v84 = vmul.f32 %v61, %v80
  %v85 = vmul.f32 %v62, %v80
  %v86 = vmul.f32 %v63, %v80
  %v87 = vmul.f32 %v64, %v80
  %v88 = vmul.f32 %v65, %v80
  %v89 = vmul.f32 %v66, %v80
  %v90 = vmul.f32 %v67, %v80
  %v91 = vmul.f32 %v68, %v80
  %v92 = vmul.f32 %v69, %v80
  %v93 = vmul.f32 %v70, %v80
  %v94 = vmul.f32 %v71, %v80
  %v95 = vmul.f32 %v72, %v80
  %v96 = vmul.f32 %v73, %v80
  %v97 = vmul.f32 %v74, %v80
  %v98 = vadd.f32 %v43, %v82
  %v99 = vadd.f32 %v44, %v83
  %v100 = vadd.f32 %v45, %v84
  %v101 = vadd.f32 %v46, %v85
  %v102 = vadd.f32 %v47, %v86
  %v103 = vadd.f32 %v48, %v87
  %v104 = vadd.f32 %v49, %v88
  %v105 = vadd.f32 %v50, %v89
  %v106 = vadd.f32 %v51, %v90
  %v107 = vadd.f32 %v52, %v91
  %v108 = vadd.f32 %v53, %v92
  %v109 = vadd.f32 %v54, %v93
  %v110 = vadd.f32 %v55, %v94
  %v111 = vadd.f32 %v56, %v95
  %v112 = vadd.f32 %v57, %v96
  %v113 = vadd.f32 %v58, %v97
  %v114 = vld [vmem:[%s4] sm:$0x1]
  %v116 = vlaneseq
  %v117 = vshrl.u32 %v116, 7
  %v118 = vsub.s32 0, %v117
  %v119 = vrot.slane %v114, %v118
  %v121 = vadd.f32 %v98, %v119
  %v122 = vadd.f32 %v99, %v119
  %v123 = vadd.f32 %v100, %v119
  %v124 = vadd.f32 %v101, %v119
  %v125 = vadd.f32 %v102, %v119
  %v126 = vadd.f32 %v103, %v119
  %v127 = vadd.f32 %v104, %v119
  %v128 = vadd.f32 %v105, %v119
  %v129 = vadd.f32 %v106, %v119
  %v130 = vadd.f32 %v107, %v119
  %v131 = vadd.f32 %v108, %v119
  %v132 = vadd.f32 %v109, %v119
  %v133 = vadd.f32 %v110, %v119
  %v134 = vadd.f32 %v111, %v119
  %v135 = vadd.f32 %v112, %v119
  %v136 = vadd.f32 %v113, %v119
  %v137 = vmax.f32 %v121, 0.0
  %v138 = vmax.f32 %v122, 0.0
  %v139 = vmax.f32 %v123, 0.0
  %v140 = vmax.f32 %v124, 0.0
  %v141 = vmax.f32 %v125, 0.0
  %v142 = vmax.f32 %v126, 0.0
  %v143 = vmax.f32 %v127, 0.0
  %v144 = vmax.f32 %v128, 0.0
  %v145 = vmax.f32 %v129, 0.0
  %v146 = vmax.f32 %v130, 0.0
  %v147 = vmax.f32 %v131, 0.0
  %v148 = vmax.f32 %v132, 0.0
  %v149 = vmax.f32 %v133, 0.0
  %v150 = vmax.f32 %v134, 0.0
  %v151 = vmax.f32 %v135, 0.0
  %v152 = vmax.f32 %v136, 0.0
  %153 = vst [vmem:[%s5] sm:$0xff] %v137
  %154 = vst [vmem:[%s5 + $0x8] sm:$0xff] %v138
  %155 = vst [vmem:[%s5 + $0x10] sm:$0xff] %v139
  %156 = vst [vmem:[%s5 + $0x18] sm:$0xff] %v140
  %157 = vst [vmem:[%s5 + $0x20] sm:$0xff] %v141
  %158 = vst [vmem:[%s5 + $0x28] sm:$0xff] %v142
  %159 = vst [vmem:[%s5 + $0x30] sm:$0xff] %v143
  %160 = vst [vmem:[%s5 + $0x38] sm:$0xff] %v144
  %161 = vst [vmem:[%s5 + $0x40] sm:$0xff] %v145
  %162 = vst [vmem:[%s5 + $0x48] sm:$0xff] %v146
  %163 = vst [vmem:[%s5 + $0x50] sm:$0xff] %v147
  %164 = vst [vmem:[%s5 + $0x58] sm:$0xff] %v148
  %165 = vst [vmem:[%s5 + $0x60] sm:$0xff] %v149
  %166 = vst [vmem:[%s5 + $0x68] sm:$0xff] %v150
  %167 = vst [vmem:[%s5 + $0x70] sm:$0xff] %v151
  %168 = vst [vmem:[%s5 + $0x78] sm:$0xff] %v152
  // Predicated region
  $region22: #{basic_block_forward.7} parent=0 // pred_check
    _
  $region23: #{basic_block_forward.7} parent=0 // pred_check_branch
    %170 = sbr.rel (0) target = $region25
  $region24: #{basic_block_forward.7} parent=0 // pred_region
    _
  $region25: #{basic_block_forward.7} parent=0 // pred_fallthru
    _
  // Predicated region
  $region26: #{basic_block_forward.7} parent=0 // pred_check
    _
  $region27: #{basic_block_forward.7} parent=0 // pred_check_branch
    %172 = sbr.rel (0) target = $region29
  $region28: #{basic_block_forward.7} parent=0 // pred_region
    _
  $region29: #{basic_block_forward.7} parent=0 // pred_fallthru
    _

</llo_original>
